<compile_context>
chip_gen: v5e
topology: v5e:2x2
jax: 0.10.0
libtpu: 0.0.40
codegen_flags: <defaults>
</compile_context>

<pallas_src>
import jax
import jax.numpy as jnp
from jax.experimental import pallas as pl
from jax.experimental.pallas import tpu as pltpu

GROUPS = 32
GN_EPS = 1e-5   # torch.nn.GroupNorm default (the module's eps arg is never forwarded)


def _group_pool_matrix(C, S):
    """(C, C) matrix P with P[c, c'] = 1/(Cg*S) if c, c' in the same group else 0.
    row_sums(x) @ P gives the per-group mean broadcast back to every channel."""
    Cg = C // GROUPS
    grp = jnp.arange(C) // Cg
    same = (grp[:, None] == grp[None, :]).astype(jnp.float32)
    return same / float(Cg * S)


# ----------------------------------------------------------------------------
# Fused (optional temb add) + GroupNorm + affine + SiLU, channels-last
#   input  : (B, S, C) float32   (S = F*H*W)
#   output : (B, S, C) bfloat16  (feeds the conv as a bf16 MXU operand)
# ----------------------------------------------------------------------------
def _gn_silu(x_bsc, gamma, beta, pool, emb=None):
    B, S, C = x_bsc.shape
    has_emb = emb is not None

    def kernel(*refs):
        if has_emb:
            x_ref, e_ref, g_ref, b_ref, p_ref, o_ref = refs
            x = x_ref[0] + e_ref[0]                       # (S, C) + (1, C) broadcast
        else:
            x_ref, g_ref, b_ref, p_ref, o_ref = refs
            x = x_ref[0]                                  # (S, C) f32

        # group statistics: per-channel column sums pooled per-group via matmul.
        col_sum = jnp.sum(x, axis=0, keepdims=True)       # (1, C)
        mean_c = jnp.dot(jnp.broadcast_to(col_sum, (8, C)), p_ref[...],
                         preferred_element_type=jnp.float32)[0:1]   # (1, C)
        xc = x - mean_c
        sq_sum = jnp.sum(xc * xc, axis=0, keepdims=True)  # (1, C)
        var_c = jnp.dot(jnp.broadcast_to(sq_sum, (8, C)), p_ref[...],
                        preferred_element_type=jnp.float32)[0:1]    # (1, C)

        y = xc * jax.lax.rsqrt(var_c + GN_EPS)
        y = y * g_ref[...] + b_ref[...]                   # per-channel affine
        o_ref[0] = (y * jax.nn.sigmoid(y)).astype(o_ref.dtype)      # SiLU -> bf16

    in_specs = [pl.BlockSpec((1, S, C), lambda b: (b, 0, 0))]
    args = [x_bsc]
    if has_emb:
        in_specs.append(pl.BlockSpec((1, 1, C), lambda b: (b, 0, 0)))
        args.append(emb)
    in_specs += [pl.BlockSpec((1, C), lambda b: (0, 0)),
                 pl.BlockSpec((1, C), lambda b: (0, 0)),
                 pl.BlockSpec((C, C), lambda b: (0, 0))]
    args += [gamma.reshape(1, C), beta.reshape(1, C), pool]

    return pl.pallas_call(
        kernel,
        out_shape=jax.ShapeDtypeStruct((B, S, C), jnp.bfloat16),
        grid=(B,),
        in_specs=in_specs,
        out_specs=pl.BlockSpec((1, S, C), lambda b: (b, 0, 0)),
        compiler_params=pltpu.CompilerParams(dimension_semantics=("parallel",)),
    )(*args)


# ----------------------------------------------------------------------------
# InflatedConv3d 3x3 (per-frame 2D conv, stride 1, padding 1) as im2col matmul,
# optionally fused with the 1x1 skip conv + residual add in the epilogue.
#   h_frames : (N, H, W, Cin) bf16    (N = B*F)
#   x_frames : (N, H, W, Cs)  f32     (original input, only for the fused skip path)
# ----------------------------------------------------------------------------
def _conv3x3(h_frames, w_hwio, bias, x_frames=None, skip_w=None):
    N, H, W, Cin = h_frames.shape
    Cout = w_hwio.shape[-1]
    fuse_skip = x_frames is not None
    Cs = x_frames.shape[-1] if fuse_skip else 0

    w9 = w_hwio.reshape(9 * Cin, Cout).astype(jnp.bfloat16)   # (dy,dx,ci) row ordering
    b2 = bias.reshape(1, Cout).astype(jnp.float32)

    def kernel(*refs):
        if fuse_skip:
            h_ref, x_ref, w_ref, sw_ref, b_ref, o_ref, pad_ref = refs
        else:
            h_ref, w_ref, b_ref, o_ref, pad_ref = refs

        # zero-pad the frame inside VMEM (no HBM padding round trip)
        pad_ref[...] = jnp.zeros_like(pad_ref)
        pad_ref[1:H + 1, 1:W + 1, :] = h_ref[0].astype(jnp.float32)

        # im2col: 9 shifted views -> (H*W, 9*Cin) patch matrix, single MXU matmul
        cols = [pad_ref[dy:dy + H, dx:dx + W, :].reshape(H * W, Cin)
                for dy in range(3) for dx in range(3)]
        patches = jnp.concatenate(cols, axis=1).astype(jnp.bfloat16)
        acc = jnp.dot(patches, w_ref[...], preferred_element_type=jnp.float32)

        if fuse_skip:   # fused 1x1 skip conv + residual add
            xf = x_ref[0].reshape(H * W, Cs).astype(jnp.bfloat16)
            acc = acc + jnp.dot(xf, sw_ref[...], preferred_element_type=jnp.float32)

        acc = acc + b_ref[...]
        o_ref[0] = acc.reshape(H, W, Cout).astype(o_ref.dtype)

    in_specs = [pl.BlockSpec((1, H, W, Cin), lambda i: (i, 0, 0, 0))]
    args = [h_frames]
    if fuse_skip:
        in_specs.append(pl.BlockSpec((1, H, W, Cs), lambda i: (i, 0, 0, 0)))
        args.append(x_frames)
    in_specs.append(pl.BlockSpec((9 * Cin, Cout), lambda i: (0, 0)))
    args.append(w9)
    if fuse_skip:
        in_specs.append(pl.BlockSpec((Cs, Cout), lambda i: (0, 0)))
        args.append(skip_w.astype(jnp.bfloat16))
    in_specs.append(pl.BlockSpec((1, Cout), lambda i: (0, 0)))
    args.append(b2)

    return pl.pallas_call(
        kernel,
        out_shape=jax.ShapeDtypeStruct((N, H, W, Cout), jnp.float32),
        grid=(N,),
        in_specs=in_specs,
        out_specs=pl.BlockSpec((1, H, W, Cout), lambda i: (i, 0, 0, 0)),
        scratch_shapes=[pltpu.VMEM((H + 2, W + 2, Cin), jnp.float32)],
        compiler_params=pltpu.CompilerParams(dimension_semantics=("parallel",)),
    )(*args)


# ----------------------------------------------------------------------------
# emb_layers: SiLU + Linear(E -> Cout), bf16 MXU operands, f32 accumulation
# ----------------------------------------------------------------------------
def _silu_linear(temb, w, b):
    B, E = temb.shape
    Cout = w.shape[-1]

    def kernel(t_ref, w_ref, b_ref, o_ref):
        t = t_ref[...]
        t = (t * jax.nn.sigmoid(t)).astype(jnp.bfloat16)
        o_ref[...] = jnp.dot(t, w_ref[...],
                             preferred_element_type=jnp.float32) + b_ref[...]

    return pl.pallas_call(
        kernel,
        out_shape=jax.ShapeDtypeStruct((B, Cout), jnp.float32),
        grid=(1,),
        in_specs=[pl.BlockSpec((B, E), lambda i: (0, 0)),
                  pl.BlockSpec((E, Cout), lambda i: (0, 0)),
                  pl.BlockSpec((1, Cout), lambda i: (0, 0))],
        out_specs=pl.BlockSpec((B, Cout), lambda i: (0, 0)),
    )(temb, w.astype(jnp.bfloat16), b.reshape(1, Cout))


# ----------------------------------------------------------------------------
# ResnetBlock3D.forward (eval mode)
# ----------------------------------------------------------------------------
def resnet_block3d_forward(x, temb, params):
    """x: (B, C, F, H, W) float32, temb: (B, emb_channels) float32.
    Returns (B, out_channels, F, H, W) float32."""
    B, C, F, H, W = x.shape
    Cout = params["conv1_w"].shape[-1]
    S = F * H * W

    # single entry transpose to channels-last; every later reshape is free
    x_cl = jnp.transpose(x, (0, 2, 3, 4, 1))                 # (B, F, H, W, C)
    x_bsc = x_cl.reshape(B, S, C)

    pool_in = _group_pool_matrix(C, S)
    pool_out = _group_pool_matrix(Cout, S)

    # ---- in_layers: GroupNorm(32, C) -> SiLU -> InflatedConv3d(C -> Cout, 3x3) ----
    h = _gn_silu(x_bsc, params["gn1_g"], params["gn1_b"], pool_in)          # (B,S,C) bf16
    h = _conv3x3(h.reshape(B * F, H, W, C),
                 params["conv1_w"], params["conv1_b"])                      # (B*F,H,W,Cout) f32

    # ---- emb_layers: SiLU -> Linear; broadcast over (F, H, W) ----
    emb_out = _silu_linear(temb, params["emb_w"], params["emb_b"])          # (B, Cout) f32

    # ---- out_layers: (h + emb) -> GroupNorm(32, Cout) -> SiLU -> Dropout -> Conv3x3 ----
    # TODO(synk): nn.Dropout is identity in eval mode; training-mode RNG dropout not implemented.
    h = _gn_silu(h.reshape(B, S, Cout), params["gn2_g"], params["gn2_b"],
                 pool_out, emb=emb_out.reshape(B, 1, Cout))                 # (B,S,Cout) bf16

    # ---- conv2 fused with skip_connection (1x1 conv, Cout != C) + residual add ----
    out = _conv3x3(h.reshape(B * F, H, W, Cout),
                   params["conv2_w"],
                   params["conv2_b"] + params["skip_b"],
                   x_frames=x_cl.reshape(B * F, H, W, C),
                   skip_w=params["skip_w"])                                 # (B*F,H,W,Cout) f32

    # single exit transpose back to NCFHW
    return jnp.transpose(out.reshape(B, F, H, W, Cout), (0, 4, 1, 2, 3))


# ----------------------------------------------------------------------------
# Pure-JAX reference (mirrors the kernels' bf16 operand quantization so the
# comparison isolates structural correctness; accumulation stays in f32).
# ----------------------------------------------------------------------------
def _reference(x, temb, params):
    def q(t):  # mirror the bf16 MXU-operand cast used by the kernels
        return t.astype(jnp.bfloat16).astype(jnp.float32)

    def gn_silu(x5, g, b):
        B, C = x5.shape[:2]
        xr = x5.reshape(B, GROUPS, -1)
        m = xr.mean(axis=2, keepdims=True)
        v = ((xr - m) ** 2).mean(axis=2, keepdims=True)
        xn = ((xr - m) / jnp.sqrt(v + GN_EPS)).reshape(x5.shape)
        y = xn * g.reshape(1, C, 1, 1, 1) + b.reshape(1, C, 1, 1, 1)
        return y * jax.nn.sigmoid(y)

    def conv3x3(x5, w, b):
        B, C, F, H, W = x5.shape
        Cout = w.shape[-1]
        xf = x5.transpose(0, 2, 3, 4, 1).reshape(B * F, H, W, C)
        y = jax.lax.conv_general_dilated(
            q(xf), q(w), (1, 1), "SAME",
            dimension_numbers=("NHWC", "HWIO", "NHWC"),
            preferred_element_type=jnp.float32) + b.reshape(1, 1, 1, -1)
        return y.reshape(B, F, H, W, Cout).transpose(0, 4, 1, 2, 3)

    h = conv3x3(gn_silu(x, params["gn1_g"], params["gn1_b"]),
                params["conv1_w"], params["conv1_b"])
    silu_t = temb * jax.nn.sigmoid(temb)
    emb = q(silu_t) @ q(params["emb_w"]) + params["emb_b"]
    h = h + emb[:, :, None, None, None]
    h = conv3x3(gn_silu(h, params["gn2_g"], params["gn2_b"]),
                params["conv2_w"], params["conv2_b"])
    skip = (jnp.einsum("bcfhw,cd->bdfhw", q(x), q(params["skip_w"]))
            + params["skip_b"][None, :, None, None, None])
    return skip + h


if __name__ == "__main__":
    # channels must be a multiple of 32 (GroupNorm(32, ...)); out_channels != channels
    # so the 1x1-conv skip branch is exercised.
    B, C, Cout, F, H, W, E = 2, 32, 64, 4, 8, 8, 32

    ks = jax.random.split(jax.random.PRNGKey(0), 14)
    params = {
        "gn1_g": 1.0 + 0.05 * jax.random.normal(ks[0], (C,), jnp.float32),
        "gn1_b": 0.05 * jax.random.normal(ks[1], (C,), jnp.float32),
        "conv1_w": jax.random.normal(ks[2], (3, 3, C, Cout), jnp.float32)
                   / (3.0 * jnp.sqrt(float(C))),
        "conv1_b": 0.05 * jax.random.normal(ks[3], (Cout,), jnp.float32),
        "emb_w": jax.random.normal(ks[4], (E, Cout), jnp.float32) / jnp.sqrt(float(E)),
        "emb_b": 0.05 * jax.random.normal(ks[5], (Cout,), jnp.float32),
        "gn2_g": 1.0 + 0.05 * jax.random.normal(ks[6], (Cout,), jnp.float32),
        "gn2_b": 0.05 * jax.random.normal(ks[7], (Cout,), jnp.float32),
        "conv2_w": jax.random.normal(ks[8], (3, 3, Cout, Cout), jnp.float32)
                   / (3.0 * jnp.sqrt(float(Cout))),
        "conv2_b": 0.05 * jax.random.normal(ks[9], (Cout,), jnp.float32),
        "skip_w": jax.random.normal(ks[10], (C, Cout), jnp.float32) / jnp.sqrt(float(C)),
        "skip_b": 0.05 * jax.random.normal(ks[11], (Cout,), jnp.float32),
    }
    x = jax.random.normal(ks[12], (B, C, F, H, W), jnp.float32)
    temb = jax.random.normal(ks[13], (B, E), jnp.float32)

    out = jax.jit(resnet_block3d_forward)(x, temb, params)
    out = jax.block_until_ready(out)

    ref = _reference(x, temb, params)
    assert out.shape == (B, Cout, F, H, W), out.shape
    max_err = float(jnp.max(jnp.abs(out - ref)))
    assert bool(jnp.allclose(out, ref, rtol=5e-2, atol=5e-2)), max_err

    print("KERNEL_OK")
</pallas_src>

<mosaic_0001>
module attributes {stable_mosaic.version = 11 : i64} {
  func.func @kernel(%arg0: i32, %arg1: memref<2x32xf32, #tpu.memory_space<vmem>>, %arg2: memref<32x64xbf16, #tpu.memory_space<vmem>>, %arg3: memref<1x64xf32, #tpu.memory_space<vmem>>, %arg4: memref<2x64xf32, #tpu.memory_space<vmem>>) attributes {dimension_semantics = [#tpu.dimension_semantics<arbitrary>], iteration_bounds = array<i64: 1>, scalar_prefetch = 0 : i64, scratch_operands = 0 : i64, tpu.core_type = #tpu.core_type<tc>, window_params = [{pipeline_mode = #tpu.pipeline_mode<synchronous>, transform_indices = @transform_0, window_bounds = array<i64: 2, 32>}, {pipeline_mode = #tpu.pipeline_mode<synchronous>, transform_indices = @transform_1, window_bounds = array<i64: 32, 64>}, {pipeline_mode = #tpu.pipeline_mode<synchronous>, transform_indices = @transform_2, window_bounds = array<i64: 1, 64>}, {pipeline_mode = #tpu.pipeline_mode<synchronous>, transform_indices = @transform_3, window_bounds = array<i64: 2, 64>}]} {
    %c0 = arith.constant 0 : index
    %c0_0 = arith.constant 0 : index
    %0 = vector.load %arg1[%c0, %c0_0] : memref<2x32xf32, #tpu.memory_space<vmem>>, vector<2x32xf32>
    %1 = arith.negf %0 : vector<2x32xf32>
    %2 = math.exp %1 : vector<2x32xf32>
    %cst = arith.constant 1.000000e+00 : f32
    %3 = vector.broadcast %cst : f32 to vector<2x32xf32>
    %4 = arith.addf %3, %2 : vector<2x32xf32>
    %5 = arith.divf %3, %4 : vector<2x32xf32>
    %6 = arith.mulf %0, %5 : vector<2x32xf32>
    %7 = arith.truncf %6 : vector<2x32xf32> to vector<2x32xbf16>
    %c0_1 = arith.constant 0 : index
    %c0_2 = arith.constant 0 : index
    %8 = vector.load %arg2[%c0_1, %c0_2] : memref<32x64xbf16, #tpu.memory_space<vmem>>, vector<32x64xbf16>
    %cst_3 = arith.constant dense<0.000000e+00> : vector<2x64xf32>
    %9 = tpu.matmul %7, %8, %cst_3 {dimension_numbers = #tpu.dot_dimension_numbers<[1], [0], [0], [1], [0, 0, 1, 1], [], []>} : vector<2x32xbf16>, vector<32x64xbf16>, vector<2x64xf32> -> vector<2x64xf32>
    %c0_4 = arith.constant 0 : index
    %c0_5 = arith.constant 0 : index
    %10 = vector.load %arg3[%c0_4, %c0_5] : memref<1x64xf32, #tpu.memory_space<vmem>>, vector<1x64xf32>
    %11 = vector.broadcast %10 : vector<1x64xf32> to vector<2x64xf32>
    %12 = arith.addf %9, %11 : vector<2x64xf32>
    %c0_6 = arith.constant 0 : index
    %c0_7 = arith.constant 0 : index
    %13 = vector.load %arg4[%c0_6, %c0_7] : memref<2x64xf32, #tpu.memory_space<vmem>>, vector<2x64xf32>
    tpu.vector_store %arg4[%c0_6, %c0_7], %12 {strides = array<i32>} : memref<2x64xf32, #tpu.memory_space<vmem>>, vector<2x64xf32>,
    return
  }
  func.func @transform_0(%arg0: i32) -> (i32, i32) {
    %c0_i32 = arith.constant 0 : i32
    %c0_i32_0 = arith.constant 0 : i32
    %c0_i32_1 = arith.constant 0 : i32
    return %c0_i32, %c0_i32_0 : i32, i32
  }
  func.func @transform_1(%arg0: i32) -> (i32, i32) {
    %c0_i32 = arith.constant 0 : i32
    %c0_i32_0 = arith.constant 0 : i32
    %c0_i32_1 = arith.constant 0 : i32
    return %c0_i32, %c0_i32_0 : i32, i32
  }
  func.func @transform_2(%arg0: i32) -> (i32, i32) {
    %c0_i32 = arith.constant 0 : i32
    %c0_i32_0 = arith.constant 0 : i32
    %c0_i32_1 = arith.constant 0 : i32
    return %c0_i32, %c0_i32_0 : i32, i32
  }
  func.func @transform_3(%arg0: i32) -> (i32, i32) {
    %c0_i32 = arith.constant 0 : i32
    %c0_i32_0 = arith.constant 0 : i32
    %c0_i32_1 = arith.constant 0 : i32
    return %c0_i32, %c0_i32_0 : i32, i32
  }
}

module attributes {stable_mosaic.version = 11 : i64} {
  func.func @kernel(%arg0: i32, %arg1: memref<1x8x8x32xbf16, #tpu.memory_space<vmem>>, %arg2: memref<288x64xbf16, #tpu.memory_space<vmem>>, %arg3: memref<1x64xf32, #tpu.memory_space<vmem>>, %arg4: memref<1x8x8x64xf32, #tpu.memory_space<vmem>>, %arg5: memref<10x10x32xf32, #tpu.memory_space<vmem>>) attributes {dimension_semantics = [#tpu.dimension_semantics<parallel>], iteration_bounds = array<i64: 8>, scalar_prefetch = 0 : i64, scratch_operands = 1 : i64, tpu.core_type = #tpu.core_type<tc>, window_params = [{transform_indices = @transform_0, window_bounds = array<i64: 1, 8, 8, 32>}, {pipeline_mode = #tpu.pipeline_mode<synchronous>, transform_indices = @transform_1, window_bounds = array<i64: 288, 64>}, {pipeline_mode = #tpu.pipeline_mode<synchronous>, transform_indices = @transform_2, window_bounds = array<i64: 1, 64>}, {transform_indices = @transform_3, window_bounds = array<i64: 1, 8, 8, 64>}]} {
    %cst = arith.constant 0.000000e+00 : f32
    %0 = vector.broadcast %cst : f32 to vector<10x10x32xf32>
    %c0 = arith.constant 0 : index
    %c0_0 = arith.constant 0 : index
    %c0_1 = arith.constant 0 : index
    %1 = vector.load %arg5[%c0, %c0_0, %c0_1] : memref<10x10x32xf32, #tpu.memory_space<vmem>>, vector<10x10x32xf32>
    tpu.vector_store %arg5[%c0, %c0_0, %c0_1], %0 {strides = array<i32>} : memref<10x10x32xf32, #tpu.memory_space<vmem>>, vector<10x10x32xf32>,
    %c0_2 = arith.constant 0 : index
    %c0_3 = arith.constant 0 : index
    %c0_4 = arith.constant 0 : index
    %c0_5 = arith.constant 0 : index
    %2 = vector.load %arg1[%c0_2, %c0_3, %c0_4, %c0_5] : memref<1x8x8x32xbf16, #tpu.memory_space<vmem>>, vector<1x8x8x32xbf16>
    %3 = vector.shape_cast %2 : vector<1x8x8x32xbf16> to vector<8x8x32xbf16>
    %4 = arith.extf %3 : vector<8x8x32xbf16> to vector<8x8x32xf32>
    %c1 = arith.constant 1 : index
    %c1_6 = arith.constant 1 : index
    %c0_7 = arith.constant 0 : index
    %5 = vector.load %arg5[%c1, %c1_6, %c0_7] : memref<10x10x32xf32, #tpu.memory_space<vmem>>, vector<8x8x32xf32>
    tpu.vector_store %arg5[%c1, %c1_6, %c0_7], %4 {strides = array<i32>} : memref<10x10x32xf32, #tpu.memory_space<vmem>>, vector<8x8x32xf32>,
    %c0_8 = arith.constant 0 : index
    %c0_9 = arith.constant 0 : index
    %c0_10 = arith.constant 0 : index
    %6 = vector.load %arg5[%c0_8, %c0_9, %c0_10] : memref<10x10x32xf32, #tpu.memory_space<vmem>>, vector<8x8x32xf32>
    %7 = vector.shape_cast %6 : vector<8x8x32xf32> to vector<64x32xf32>
    %c0_11 = arith.constant 0 : index
    %c1_12 = arith.constant 1 : index
    %c0_13 = arith.constant 0 : index
    %8 = vector.load %arg5[%c0_11, %c1_12, %c0_13] : memref<10x10x32xf32, #tpu.memory_space<vmem>>, vector<8x8x32xf32>
    %9 = vector.shape_cast %8 : vector<8x8x32xf32> to vector<64x32xf32>
    %c0_14 = arith.constant 0 : index
    %c2 = arith.constant 2 : index
    %c0_15 = arith.constant 0 : index
    %10 = vector.load %arg5[%c0_14, %c2, %c0_15] : memref<10x10x32xf32, #tpu.memory_space<vmem>>, vector<8x8x32xf32>
    %11 = vector.shape_cast %10 : vector<8x8x32xf32> to vector<64x32xf32>
    %c1_16 = arith.constant 1 : index
    %c0_17 = arith.constant 0 : index
    %c0_18 = arith.constant 0 : index
    %12 = vector.load %arg5[%c1_16, %c0_17, %c0_18] : memref<10x10x32xf32, #tpu.memory_space<vmem>>, vector<8x8x32xf32>
    %13 = vector.shape_cast %12 : vector<8x8x32xf32> to vector<64x32xf32>
    %c1_19 = arith.constant 1 : index
    %c1_20 = arith.constant 1 : index
    %c0_21 = arith.constant 0 : index
    %14 = vector.load %arg5[%c1_19, %c1_20, %c0_21] : memref<10x10x32xf32, #tpu.memory_space<vmem>>, vector<8x8x32xf32>
    %15 = vector.shape_cast %14 : vector<8x8x32xf32> to vector<64x32xf32>
    %c1_22 = arith.constant 1 : index
    %c2_23 = arith.constant 2 : index
    %c0_24 = arith.constant 0 : index
    %16 = vector.load %arg5[%c1_22, %c2_23, %c0_24] : memref<10x10x32xf32, #tpu.memory_space<vmem>>, vector<8x8x32xf32>
    %17 = vector.shape_cast %16 : vector<8x8x32xf32> to vector<64x32xf32>
    %c2_25 = arith.constant 2 : index
    %c0_26 = arith.constant 0 : index
    %c0_27 = arith.constant 0 : index
    %18 = vector.load %arg5[%c2_25, %c0_26, %c0_27] : memref<10x10x32xf32, #tpu.memory_space<vmem>>, vector<8x8x32xf32>
    %19 = vector.shape_cast %18 : vector<8x8x32xf32> to vector<64x32xf32>
    %c2_28 = arith.constant 2 : index
    %c1_29 = arith.constant 1 : index
    %c0_30 = arith.constant 0 : index
    %20 = vector.load %arg5[%c2_28, %c1_29, %c0_30] : memref<10x10x32xf32, #tpu.memory_space<vmem>>, vector<8x8x32xf32>
    %21 = vector.shape_cast %20 : vector<8x8x32xf32> to vector<64x32xf32>
    %c2_31 = arith.constant 2 : index
    %c2_32 = arith.constant 2 : index
    %c0_33 = arith.constant 0 : index
    %22 = vector.load %arg5[%c2_31, %c2_32, %c0_33] : memref<10x10x32xf32, #tpu.memory_space<vmem>>, vector<8x8x32xf32>
    %23 = vector.shape_cast %22 : vector<8x8x32xf32> to vector<64x32xf32>
    %24 = tpu.concatenate %7, %9, %11, %13, %15, %17, %19, %21, %23 in 1 : vector<64x32xf32>, vector<64x32xf32>, vector<64x32xf32>, vector<64x32xf32>, vector<64x32xf32>, vector<64x32xf32>, vector<64x32xf32>, vector<64x32xf32>, vector<64x32xf32> -> vector<64x288xf32>
    %25 = arith.truncf %24 : vector<64x288xf32> to vector<64x288xbf16>
    %c0_34 = arith.constant 0 : index
    %c0_35 = arith.constant 0 : index
    %26 = vector.load %arg2[%c0_34, %c0_35] : memref<288x64xbf16, #tpu.memory_space<vmem>>, vector<288x64xbf16>
    %cst_36 = arith.constant dense<0.000000e+00> : vector<64x64xf32>
    %27 = tpu.matmul %25, %26, %cst_36 {dimension_numbers = #tpu.dot_dimension_numbers<[1], [0], [0], [1], [0, 0, 1, 1], [], []>} : vector<64x288xbf16>, vector<288x64xbf16>, vector<64x64xf32> -> vector<64x64xf32>
    %c0_37 = arith.constant 0 : index
    %c0_38 = arith.constant 0 : index
    %28 = vector.load %arg3[%c0_37, %c0_38] : memref<1x64xf32, #tpu.memory_space<vmem>>, vector<1x64xf32>
    %29 = vector.broadcast %28 : vector<1x64xf32> to vector<64x64xf32>
    %30 = arith.addf %27, %29 : vector<64x64xf32>
    %31 = vector.shape_cast %30 : vector<64x64xf32> to vector<8x8x64xf32>
    %c0_39 = arith.constant 0 : index
    %c0_40 = arith.constant 0 : index
    %c0_41 = arith.constant 0 : index
    %c0_42 = arith.constant 0 : index
    %32 = vector.load %arg4[%c0_39, %c0_40, %c0_41, %c0_42] : memref<1x8x8x64xf32, #tpu.memory_space<vmem>>, vector<1x8x8x64xf32>
    %33 = vector.shape_cast %32 : vector<1x8x8x64xf32> to vector<8x8x64xf32>
    %34 = vector.shape_cast %31 : vector<8x8x64xf32> to vector<1x8x8x64xf32>
    tpu.vector_store %arg4[%c0_39, %c0_40, %c0_41, %c0_42], %34 {strides = array<i32>} : memref<1x8x8x64xf32, #tpu.memory_space<vmem>>, vector<1x8x8x64xf32>,
    return
  }
  func.func @transform_0(%arg0: i32) -> (i32, i32, i32, i32) {
    %c0_i32 = arith.constant 0 : i32
    %c0_i32_0 = arith.constant 0 : i32
    %c0_i32_1 = arith.constant 0 : i32
    %c0_i32_2 = arith.constant 0 : i32
    return %arg0, %c0_i32, %c0_i32_0, %c0_i32_1 : i32, i32, i32, i32
  }
  func.func @transform_1(%arg0: i32) -> (i32, i32) {
    %c0_i32 = arith.constant 0 : i32
    %c0_i32_0 = arith.constant 0 : i32
    %c0_i32_1 = arith.constant 0 : i32
    return %c0_i32, %c0_i32_0 : i32, i32
  }
  func.func @transform_2(%arg0: i32) -> (i32, i32) {
    %c0_i32 = arith.constant 0 : i32
    %c0_i32_0 = arith.constant 0 : i32
    %c0_i32_1 = arith.constant 0 : i32
    return %c0_i32, %c0_i32_0 : i32, i32
  }
  func.func @transform_3(%arg0: i32) -> (i32, i32, i32, i32) {
    %c0_i32 = arith.constant 0 : i32
    %c0_i32_0 = arith.constant 0 : i32
    %c0_i32_1 = arith.constant 0 : i32
    %c0_i32_2 = arith.constant 0 : i32
    return %arg0, %c0_i32, %c0_i32_0, %c0_i32_1 : i32, i32, i32, i32
  }
}

module attributes {stable_mosaic.version = 11 : i64} {
  func.func @kernel(%arg0: i32, %arg1: memref<1x256x32xf32, #tpu.memory_space<vmem>>, %arg2: memref<1x32xf32, #tpu.memory_space<vmem>>, %arg3: memref<1x32xf32, #tpu.memory_space<vmem>>, %arg4: memref<32x32xf32, #tpu.memory_space<vmem>>, %arg5: memref<1x256x32xbf16, #tpu.memory_space<vmem>>) attributes {dimension_semantics = [#tpu.dimension_semantics<parallel>], iteration_bounds = array<i64: 2>, scalar_prefetch = 0 : i64, scratch_operands = 0 : i64, tpu.core_type = #tpu.core_type<tc>, window_params = [{transform_indices = @transform_0, window_bounds = array<i64: 1, 256, 32>}, {pipeline_mode = #tpu.pipeline_mode<synchronous>, transform_indices = @transform_1, window_bounds = array<i64: 1, 32>}, {pipeline_mode = #tpu.pipeline_mode<synchronous>, transform_indices = @transform_2, window_bounds = array<i64: 1, 32>}, {pipeline_mode = #tpu.pipeline_mode<synchronous>, transform_indices = @transform_3, window_bounds = array<i64: 32, 32>}, {transform_indices = @transform_4, window_bounds = array<i64: 1, 256, 32>}]} {
    %c0 = arith.constant 0 : index
    %c0_0 = arith.constant 0 : index
    %c0_1 = arith.constant 0 : index
    %0 = vector.load %arg1[%c0, %c0_0, %c0_1] : memref<1x256x32xf32, #tpu.memory_space<vmem>>, vector<1x256x32xf32>
    %1 = vector.shape_cast %0 : vector<1x256x32xf32> to vector<256x32xf32>
    %cst = arith.constant dense<0.000000e+00> : vector<32xf32>
    %2 = vector.multi_reduction <add>, %1, %cst [0] : vector<256x32xf32> to vector<32xf32>
    %3 = vector.shape_cast %2 : vector<32xf32> to vector<1x32xf32>
    %4 = vector.shape_cast %3 : vector<1x32xf32> to vector<1x32xf32>
    %5 = vector.broadcast %4 : vector<1x32xf32> to vector<8x32xf32>
    %c0_2 = arith.constant 0 : index
    %c0_3 = arith.constant 0 : index
    %6 = vector.load %arg4[%c0_2, %c0_3] : memref<32x32xf32, #tpu.memory_space<vmem>>, vector<32x32xf32>
    %cst_4 = arith.constant dense<0.000000e+00> : vector<8x32xf32>
    %7 = tpu.matmul %5, %6, %cst_4 {dimension_numbers = #tpu.dot_dimension_numbers<[1], [0], [0], [1], [0, 0, 1, 1], [], []>} : vector<8x32xf32>, vector<32x32xf32>, vector<8x32xf32> -> vector<8x32xf32>
    %8 = vector.extract_strided_slice %7 {offsets = [0, 0], sizes = [1, 32], strides = [1, 1]} : vector<8x32xf32> to vector<1x32xf32>
    %9 = vector.broadcast %8 : vector<1x32xf32> to vector<256x32xf32>
    %10 = arith.subf %1, %9 : vector<256x32xf32>
    %11 = arith.mulf %10, %10 : vector<256x32xf32>
    %cst_5 = arith.constant dense<0.000000e+00> : vector<32xf32>
    %12 = vector.multi_reduction <add>, %11, %cst_5 [0] : vector<256x32xf32> to vector<32xf32>
    %13 = vector.shape_cast %12 : vector<32xf32> to vector<1x32xf32>
    %14 = vector.shape_cast %13 : vector<1x32xf32> to vector<1x32xf32>
    %15 = vector.broadcast %14 : vector<1x32xf32> to vector<8x32xf32>
    %c0_6 = arith.constant 0 : index
    %c0_7 = arith.constant 0 : index
    %16 = vector.load %arg4[%c0_6, %c0_7] : memref<32x32xf32, #tpu.memory_space<vmem>>, vector<32x32xf32>
    %cst_8 = arith.constant dense<0.000000e+00> : vector<8x32xf32>
    %17 = tpu.matmul %15, %16, %cst_8 {dimension_numbers = #tpu.dot_dimension_numbers<[1], [0], [0], [1], [0, 0, 1, 1], [], []>} : vector<8x32xf32>, vector<32x32xf32>, vector<8x32xf32> -> vector<8x32xf32>
    %18 = vector.extract_strided_slice %17 {offsets = [0, 0], sizes = [1, 32], strides = [1, 1]} : vector<8x32xf32> to vector<1x32xf32>
    %cst_9 = arith.constant 9.99999974E-6 : f32
    %19 = vector.broadcast %cst_9 : f32 to vector<1x32xf32>
    %20 = arith.addf %18, %19 : vector<1x32xf32>
    %21 = math.rsqrt %20 : vector<1x32xf32>
    %22 = vector.broadcast %21 : vector<1x32xf32> to vector<256x32xf32>
    %23 = arith.mulf %10, %22 : vector<256x32xf32>
    %c0_10 = arith.constant 0 : index
    %c0_11 = arith.constant 0 : index
    %24 = vector.load %arg2[%c0_10, %c0_11] : memref<1x32xf32, #tpu.memory_space<vmem>>, vector<1x32xf32>
    %25 = vector.broadcast %24 : vector<1x32xf32> to vector<256x32xf32>
    %26 = arith.mulf %23, %25 : vector<256x32xf32>
    %c0_12 = arith.constant 0 : index
    %c0_13 = arith.constant 0 : index
    %27 = vector.load %arg3[%c0_12, %c0_13] : memref<1x32xf32, #tpu.memory_space<vmem>>, vector<1x32xf32>
    %28 = vector.broadcast %27 : vector<1x32xf32> to vector<256x32xf32>
    %29 = arith.addf %26, %28 : vector<256x32xf32>
    %30 = arith.negf %29 : vector<256x32xf32>
    %31 = math.exp %30 : vector<256x32xf32>
    %cst_14 = arith.constant 1.000000e+00 : f32
    %32 = vector.broadcast %cst_14 : f32 to vector<256x32xf32>
    %33 = arith.addf %32, %31 : vector<256x32xf32>
    %34 = arith.divf %32, %33 : vector<256x32xf32>
    %35 = arith.mulf %29, %34 : vector<256x32xf32>
    %36 = arith.truncf %35 : vector<256x32xf32> to vector<256x32xbf16>
    %c0_15 = arith.constant 0 : index
    %c0_16 = arith.constant 0 : index
    %c0_17 = arith.constant 0 : index
    %37 = vector.load %arg5[%c0_15, %c0_16, %c0_17] : memref<1x256x32xbf16, #tpu.memory_space<vmem>>, vector<1x256x32xbf16>
    %38 = vector.shape_cast %37 : vector<1x256x32xbf16> to vector<256x32xbf16>
    %39 = vector.shape_cast %36 : vector<256x32xbf16> to vector<1x256x32xbf16>
    tpu.vector_store %arg5[%c0_15, %c0_16, %c0_17], %39 {strides = array<i32>} : memref<1x256x32xbf16, #tpu.memory_space<vmem>>, vector<1x256x32xbf16>,
    return
  }
  func.func @transform_0(%arg0: i32) -> (i32, i32, i32) {
    %c0_i32 = arith.constant 0 : i32
    %c0_i32_0 = arith.constant 0 : i32
    %c0_i32_1 = arith.constant 0 : i32
    return %arg0, %c0_i32, %c0_i32_0 : i32, i32, i32
  }
  func.func @transform_1(%arg0: i32) -> (i32, i32) {
    %c0_i32 = arith.constant 0 : i32
    %c0_i32_0 = arith.constant 0 : i32
    %c0_i32_1 = arith.constant 0 : i32
    return %c0_i32, %c0_i32_0 : i32, i32
  }
  func.func @transform_2(%arg0: i32) -> (i32, i32) {
    %c0_i32 = arith.constant 0 : i32
    %c0_i32_0 = arith.constant 0 : i32
    %c0_i32_1 = arith.constant 0 : i32
    return %c0_i32, %c0_i32_0 : i32, i32
  }
  func.func @transform_3(%arg0: i32) -> (i32, i32) {
    %c0_i32 = arith.constant 0 : i32
    %c0_i32_0 = arith.constant 0 : i32
    %c0_i32_1 = arith.constant 0 : i32
    return %c0_i32, %c0_i32_0 : i32, i32
  }
  func.func @transform_4(%arg0: i32) -> (i32, i32, i32) {
    %c0_i32 = arith.constant 0 : i32
    %c0_i32_0 = arith.constant 0 : i32
    %c0_i32_1 = arith.constant 0 : i32
    return %arg0, %c0_i32, %c0_i32_0 : i32, i32, i32
  }
}

module attributes {stable_mosaic.version = 11 : i64} {
  func.func @kernel(%arg0: i32, %arg1: memref<1x256x64xf32, #tpu.memory_space<vmem>>, %arg2: memref<1x1x64xf32, #tpu.memory_space<vmem>>, %arg3: memref<1x64xf32, #tpu.memory_space<vmem>>, %arg4: memref<1x64xf32, #tpu.memory_space<vmem>>, %arg5: memref<64x64xf32, #tpu.memory_space<vmem>>, %arg6: memref<1x256x64xbf16, #tpu.memory_space<vmem>>) attributes {dimension_semantics = [#tpu.dimension_semantics<parallel>], iteration_bounds = array<i64: 2>, scalar_prefetch = 0 : i64, scratch_operands = 0 : i64, tpu.core_type = #tpu.core_type<tc>, window_params = [{transform_indices = @transform_0, window_bounds = array<i64: 1, 256, 64>}, {transform_indices = @transform_1, window_bounds = array<i64: 1, 1, 64>}, {pipeline_mode = #tpu.pipeline_mode<synchronous>, transform_indices = @transform_2, window_bounds = array<i64: 1, 64>}, {pipeline_mode = #tpu.pipeline_mode<synchronous>, transform_indices = @transform_3, window_bounds = array<i64: 1, 64>}, {pipeline_mode = #tpu.pipeline_mode<synchronous>, transform_indices = @transform_4, window_bounds = array<i64: 64, 64>}, {transform_indices = @transform_5, window_bounds = array<i64: 1, 256, 64>}]} {
    %c0 = arith.constant 0 : index
    %c0_0 = arith.constant 0 : index
    %c0_1 = arith.constant 0 : index
    %0 = vector.load %arg1[%c0, %c0_0, %c0_1] : memref<1x256x64xf32, #tpu.memory_space<vmem>>, vector<1x256x64xf32>
    %1 = vector.shape_cast %0 : vector<1x256x64xf32> to vector<256x64xf32>
    %c0_2 = arith.constant 0 : index
    %c0_3 = arith.constant 0 : index
    %c0_4 = arith.constant 0 : index
    %2 = vector.load %arg2[%c0_2, %c0_3, %c0_4] : memref<1x1x64xf32, #tpu.memory_space<vmem>>, vector<1x1x64xf32>
    %3 = vector.shape_cast %2 : vector<1x1x64xf32> to vector<1x64xf32>
    %4 = vector.broadcast %3 : vector<1x64xf32> to vector<256x64xf32>
    %5 = arith.addf %1, %4 : vector<256x64xf32>
    %cst = arith.constant dense<0.000000e+00> : vector<64xf32>
    %6 = vector.multi_reduction <add>, %5, %cst [0] : vector<256x64xf32> to vector<64xf32>
    %7 = vector.shape_cast %6 : vector<64xf32> to vector<1x64xf32>
    %8 = vector.shape_cast %7 : vector<1x64xf32> to vector<1x64xf32>
    %9 = vector.broadcast %8 : vector<1x64xf32> to vector<8x64xf32>
    %c0_5 = arith.constant 0 : index
    %c0_6 = arith.constant 0 : index
    %10 = vector.load %arg5[%c0_5, %c0_6] : memref<64x64xf32, #tpu.memory_space<vmem>>, vector<64x64xf32>
    %cst_7 = arith.constant dense<0.000000e+00> : vector<8x64xf32>
    %11 = tpu.matmul %9, %10, %cst_7 {dimension_numbers = #tpu.dot_dimension_numbers<[1], [0], [0], [1], [0, 0, 1, 1], [], []>} : vector<8x64xf32>, vector<64x64xf32>, vector<8x64xf32> -> vector<8x64xf32>
    %12 = vector.extract_strided_slice %11 {offsets = [0, 0], sizes = [1, 64], strides = [1, 1]} : vector<8x64xf32> to vector<1x64xf32>
    %13 = vector.broadcast %12 : vector<1x64xf32> to vector<256x64xf32>
    %14 = arith.subf %5, %13 : vector<256x64xf32>
    %15 = arith.mulf %14, %14 : vector<256x64xf32>
    %cst_8 = arith.constant dense<0.000000e+00> : vector<64xf32>
    %16 = vector.multi_reduction <add>, %15, %cst_8 [0] : vector<256x64xf32> to vector<64xf32>
    %17 = vector.shape_cast %16 : vector<64xf32> to vector<1x64xf32>
    %18 = vector.shape_cast %17 : vector<1x64xf32> to vector<1x64xf32>
    %19 = vector.broadcast %18 : vector<1x64xf32> to vector<8x64xf32>
    %c0_9 = arith.constant 0 : index
    %c0_10 = arith.constant 0 : index
    %20 = vector.load %arg5[%c0_9, %c0_10] : memref<64x64xf32, #tpu.memory_space<vmem>>, vector<64x64xf32>
    %cst_11 = arith.constant dense<0.000000e+00> : vector<8x64xf32>
    %21 = tpu.matmul %19, %20, %cst_11 {dimension_numbers = #tpu.dot_dimension_numbers<[1], [0], [0], [1], [0, 0, 1, 1], [], []>} : vector<8x64xf32>, vector<64x64xf32>, vector<8x64xf32> -> vector<8x64xf32>
    %22 = vector.extract_strided_slice %21 {offsets = [0, 0], sizes = [1, 64], strides = [1, 1]} : vector<8x64xf32> to vector<1x64xf32>
    %cst_12 = arith.constant 9.99999974E-6 : f32
    %23 = vector.broadcast %cst_12 : f32 to vector<1x64xf32>
    %24 = arith.addf %22, %23 : vector<1x64xf32>
    %25 = math.rsqrt %24 : vector<1x64xf32>
    %26 = vector.broadcast %25 : vector<1x64xf32> to vector<256x64xf32>
    %27 = arith.mulf %14, %26 : vector<256x64xf32>
    %c0_13 = arith.constant 0 : index
    %c0_14 = arith.constant 0 : index
    %28 = vector.load %arg3[%c0_13, %c0_14] : memref<1x64xf32, #tpu.memory_space<vmem>>, vector<1x64xf32>
    %29 = vector.broadcast %28 : vector<1x64xf32> to vector<256x64xf32>
    %30 = arith.mulf %27, %29 : vector<256x64xf32>
    %c0_15 = arith.constant 0 : index
    %c0_16 = arith.constant 0 : index
    %31 = vector.load %arg4[%c0_15, %c0_16] : memref<1x64xf32, #tpu.memory_space<vmem>>, vector<1x64xf32>
    %32 = vector.broadcast %31 : vector<1x64xf32> to vector<256x64xf32>
    %33 = arith.addf %30, %32 : vector<256x64xf32>
    %34 = arith.negf %33 : vector<256x64xf32>
    %35 = math.exp %34 : vector<256x64xf32>
    %cst_17 = arith.constant 1.000000e+00 : f32
    %36 = vector.broadcast %cst_17 : f32 to vector<256x64xf32>
    %37 = arith.addf %36, %35 : vector<256x64xf32>
    %38 = arith.divf %36, %37 : vector<256x64xf32>
    %39 = arith.mulf %33, %38 : vector<256x64xf32>
    %40 = arith.truncf %39 : vector<256x64xf32> to vector<256x64xbf16>
    %c0_18 = arith.constant 0 : index
    %c0_19 = arith.constant 0 : index
    %c0_20 = arith.constant 0 : index
    %41 = vector.load %arg6[%c0_18, %c0_19, %c0_20] : memref<1x256x64xbf16, #tpu.memory_space<vmem>>, vector<1x256x64xbf16>
    %42 = vector.shape_cast %41 : vector<1x256x64xbf16> to vector<256x64xbf16>
    %43 = vector.shape_cast %40 : vector<256x64xbf16> to vector<1x256x64xbf16>
    tpu.vector_store %arg6[%c0_18, %c0_19, %c0_20], %43 {strides = array<i32>} : memref<1x256x64xbf16, #tpu.memory_space<vmem>>, vector<1x256x64xbf16>,
    return
  }
  func.func @transform_0(%arg0: i32) -> (i32, i32, i32) {
    %c0_i32 = arith.constant 0 : i32
    %c0_i32_0 = arith.constant 0 : i32
    %c0_i32_1 = arith.constant 0 : i32
    return %arg0, %c0_i32, %c0_i32_0 : i32, i32, i32
  }
  func.func @transform_1(%arg0: i32) -> (i32, i32, i32) {
    %c0_i32 = arith.constant 0 : i32
    %c0_i32_0 = arith.constant 0 : i32
    %c0_i32_1 = arith.constant 0 : i32
    return %arg0, %c0_i32, %c0_i32_0 : i32, i32, i32
  }
  func.func @transform_2(%arg0: i32) -> (i32, i32) {
    %c0_i32 = arith.constant 0 : i32
    %c0_i32_0 = arith.constant 0 : i32
    %c0_i32_1 = arith.constant 0 : i32
    return %c0_i32, %c0_i32_0 : i32, i32
  }
  func.func @transform_3(%arg0: i32) -> (i32, i32) {
    %c0_i32 = arith.constant 0 : i32
    %c0_i32_0 = arith.constant 0 : i32
    %c0_i32_1 = arith.constant 0 : i32
    return %c0_i32, %c0_i32_0 : i32, i32
  }
  func.func @transform_4(%arg0: i32) -> (i32, i32) {
    %c0_i32 = arith.constant 0 : i32
    %c0_i32_0 = arith.constant 0 : i32
    %c0_i32_1 = arith.constant 0 : i32
    return %c0_i32, %c0_i32_0 : i32, i32
  }
  func.func @transform_5(%arg0: i32) -> (i32, i32, i32) {
    %c0_i32 = arith.constant 0 : i32
    %c0_i32_0 = arith.constant 0 : i32
    %c0_i32_1 = arith.constant 0 : i32
    return %arg0, %c0_i32, %c0_i32_0 : i32, i32, i32
  }
}

module attributes {stable_mosaic.version = 11 : i64} {
  func.func @kernel(%arg0: i32, %arg1: memref<1x8x8x64xbf16, #tpu.memory_space<vmem>>, %arg2: memref<1x8x8x32xf32, #tpu.memory_space<vmem>>, %arg3: memref<576x64xbf16, #tpu.memory_space<vmem>>, %arg4: memref<32x64xbf16, #tpu.memory_space<vmem>>, %arg5: memref<1x64xf32, #tpu.memory_space<vmem>>, %arg6: memref<1x8x8x64xf32, #tpu.memory_space<vmem>>, %arg7: memref<10x10x64xf32, #tpu.memory_space<vmem>>) attributes {dimension_semantics = [#tpu.dimension_semantics<parallel>], iteration_bounds = array<i64: 8>, scalar_prefetch = 0 : i64, scratch_operands = 1 : i64, tpu.core_type = #tpu.core_type<tc>, window_params = [{transform_indices = @transform_0, window_bounds = array<i64: 1, 8, 8, 64>}, {transform_indices = @transform_1, window_bounds = array<i64: 1, 8, 8, 32>}, {pipeline_mode = #tpu.pipeline_mode<synchronous>, transform_indices = @transform_2, window_bounds = array<i64: 576, 64>}, {pipeline_mode = #tpu.pipeline_mode<synchronous>, transform_indices = @transform_3, window_bounds = array<i64: 32, 64>}, {pipeline_mode = #tpu.pipeline_mode<synchronous>, transform_indices = @transform_4, window_bounds = array<i64: 1, 64>}, {transform_indices = @transform_5, window_bounds = array<i64: 1, 8, 8, 64>}]} {
    %cst = arith.constant 0.000000e+00 : f32
    %0 = vector.broadcast %cst : f32 to vector<10x10x64xf32>
    %c0 = arith.constant 0 : index
    %c0_0 = arith.constant 0 : index
    %c0_1 = arith.constant 0 : index
    %1 = vector.load %arg7[%c0, %c0_0, %c0_1] : memref<10x10x64xf32, #tpu.memory_space<vmem>>, vector<10x10x64xf32>
    tpu.vector_store %arg7[%c0, %c0_0, %c0_1], %0 {strides = array<i32>} : memref<10x10x64xf32, #tpu.memory_space<vmem>>, vector<10x10x64xf32>,
    %c0_2 = arith.constant 0 : index
    %c0_3 = arith.constant 0 : index
    %c0_4 = arith.constant 0 : index
    %c0_5 = arith.constant 0 : index
    %2 = vector.load %arg1[%c0_2, %c0_3, %c0_4, %c0_5] : memref<1x8x8x64xbf16, #tpu.memory_space<vmem>>, vector<1x8x8x64xbf16>
    %3 = vector.shape_cast %2 : vector<1x8x8x64xbf16> to vector<8x8x64xbf16>
    %4 = arith.extf %3 : vector<8x8x64xbf16> to vector<8x8x64xf32>
    %c1 = arith.constant 1 : index
    %c1_6 = arith.constant 1 : index
    %c0_7 = arith.constant 0 : index
    %5 = vector.load %arg7[%c1, %c1_6, %c0_7] : memref<10x10x64xf32, #tpu.memory_space<vmem>>, vector<8x8x64xf32>
    tpu.vector_store %arg7[%c1, %c1_6, %c0_7], %4 {strides = array<i32>} : memref<10x10x64xf32, #tpu.memory_space<vmem>>, vector<8x8x64xf32>,
    %c0_8 = arith.constant 0 : index
    %c0_9 = arith.constant 0 : index
    %c0_10 = arith.constant 0 : index
    %6 = vector.load %arg7[%c0_8, %c0_9, %c0_10] : memref<10x10x64xf32, #tpu.memory_space<vmem>>, vector<8x8x64xf32>
    %7 = vector.shape_cast %6 : vector<8x8x64xf32> to vector<64x64xf32>
    %c0_11 = arith.constant 0 : index
    %c1_12 = arith.constant 1 : index
    %c0_13 = arith.constant 0 : index
    %8 = vector.load %arg7[%c0_11, %c1_12, %c0_13] : memref<10x10x64xf32, #tpu.memory_space<vmem>>, vector<8x8x64xf32>
    %9 = vector.shape_cast %8 : vector<8x8x64xf32> to vector<64x64xf32>
    %c0_14 = arith.constant 0 : index
    %c2 = arith.constant 2 : index
    %c0_15 = arith.constant 0 : index
    %10 = vector.load %arg7[%c0_14, %c2, %c0_15] : memref<10x10x64xf32, #tpu.memory_space<vmem>>, vector<8x8x64xf32>
    %11 = vector.shape_cast %10 : vector<8x8x64xf32> to vector<64x64xf32>
    %c1_16 = arith.constant 1 : index
    %c0_17 = arith.constant 0 : index
    %c0_18 = arith.constant 0 : index
    %12 = vector.load %arg7[%c1_16, %c0_17, %c0_18] : memref<10x10x64xf32, #tpu.memory_space<vmem>>, vector<8x8x64xf32>
    %13 = vector.shape_cast %12 : vector<8x8x64xf32> to vector<64x64xf32>
    %c1_19 = arith.constant 1 : index
    %c1_20 = arith.constant 1 : index
    %c0_21 = arith.constant 0 : index
    %14 = vector.load %arg7[%c1_19, %c1_20, %c0_21] : memref<10x10x64xf32, #tpu.memory_space<vmem>>, vector<8x8x64xf32>
    %15 = vector.shape_cast %14 : vector<8x8x64xf32> to vector<64x64xf32>
    %c1_22 = arith.constant 1 : index
    %c2_23 = arith.constant 2 : index
    %c0_24 = arith.constant 0 : index
    %16 = vector.load %arg7[%c1_22, %c2_23, %c0_24] : memref<10x10x64xf32, #tpu.memory_space<vmem>>, vector<8x8x64xf32>
    %17 = vector.shape_cast %16 : vector<8x8x64xf32> to vector<64x64xf32>
    %c2_25 = arith.constant 2 : index
    %c0_26 = arith.constant 0 : index
    %c0_27 = arith.constant 0 : index
    %18 = vector.load %arg7[%c2_25, %c0_26, %c0_27] : memref<10x10x64xf32, #tpu.memory_space<vmem>>, vector<8x8x64xf32>
    %19 = vector.shape_cast %18 : vector<8x8x64xf32> to vector<64x64xf32>
    %c2_28 = arith.constant 2 : index
    %c1_29 = arith.constant 1 : index
    %c0_30 = arith.constant 0 : index
    %20 = vector.load %arg7[%c2_28, %c1_29, %c0_30] : memref<10x10x64xf32, #tpu.memory_space<vmem>>, vector<8x8x64xf32>
    %21 = vector.shape_cast %20 : vector<8x8x64xf32> to vector<64x64xf32>
    %c2_31 = arith.constant 2 : index
    %c2_32 = arith.constant 2 : index
    %c0_33 = arith.constant 0 : index
    %22 = vector.load %arg7[%c2_31, %c2_32, %c0_33] : memref<10x10x64xf32, #tpu.memory_space<vmem>>, vector<8x8x64xf32>
    %23 = vector.shape_cast %22 : vector<8x8x64xf32> to vector<64x64xf32>
    %24 = tpu.concatenate %7, %9, %11, %13, %15, %17, %19, %21, %23 in 1 : vector<64x64xf32>, vector<64x64xf32>, vector<64x64xf32>, vector<64x64xf32>, vector<64x64xf32>, vector<64x64xf32>, vector<64x64xf32>, vector<64x64xf32>, vector<64x64xf32> -> vector<64x576xf32>
    %25 = arith.truncf %24 : vector<64x576xf32> to vector<64x576xbf16>
    %c0_34 = arith.constant 0 : index
    %c0_35 = arith.constant 0 : index
    %26 = vector.load %arg3[%c0_34, %c0_35] : memref<576x64xbf16, #tpu.memory_space<vmem>>, vector<576x64xbf16>
    %cst_36 = arith.constant dense<0.000000e+00> : vector<64x64xf32>
    %27 = tpu.matmul %25, %26, %cst_36 {dimension_numbers = #tpu.dot_dimension_numbers<[1], [0], [0], [1], [0, 0, 1, 1], [], []>} : vector<64x576xbf16>, vector<576x64xbf16>, vector<64x64xf32> -> vector<64x64xf32>
    %c0_37 = arith.constant 0 : index
    %c0_38 = arith.constant 0 : index
    %c0_39 = arith.constant 0 : index
    %c0_40 = arith.constant 0 : index
    %28 = vector.load %arg2[%c0_37, %c0_38, %c0_39, %c0_40] : memref<1x8x8x32xf32, #tpu.memory_space<vmem>>, vector<1x8x8x32xf32>
    %29 = vector.shape_cast %28 : vector<1x8x8x32xf32> to vector<8x8x32xf32>
    %30 = vector.shape_cast %29 : vector<8x8x32xf32> to vector<64x32xf32>
    %31 = arith.truncf %30 : vector<64x32xf32> to vector<64x32xbf16>
    %c0_41 = arith.constant 0 : index
    %c0_42 = arith.constant 0 : index
    %32 = vector.load %arg4[%c0_41, %c0_42] : memref<32x64xbf16, #tpu.memory_space<vmem>>, vector<32x64xbf16>
    %cst_43 = arith.constant dense<0.000000e+00> : vector<64x64xf32>
    %33 = tpu.matmul %31, %32, %cst_43 {dimension_numbers = #tpu.dot_dimension_numbers<[1], [0], [0], [1], [0, 0, 1, 1], [], []>} : vector<64x32xbf16>, vector<32x64xbf16>, vector<64x64xf32> -> vector<64x64xf32>
    %34 = arith.addf %27, %33 : vector<64x64xf32>
    %c0_44 = arith.constant 0 : index
    %c0_45 = arith.constant 0 : index
    %35 = vector.load %arg5[%c0_44, %c0_45] : memref<1x64xf32, #tpu.memory_space<vmem>>, vector<1x64xf32>
    %36 = vector.broadcast %35 : vector<1x64xf32> to vector<64x64xf32>
    %37 = arith.addf %34, %36 : vector<64x64xf32>
    %38 = vector.shape_cast %37 : vector<64x64xf32> to vector<8x8x64xf32>
    %c0_46 = arith.constant 0 : index
    %c0_47 = arith.constant 0 : index
    %c0_48 = arith.constant 0 : index
    %c0_49 = arith.constant 0 : index
    %39 = vector.load %arg6[%c0_46, %c0_47, %c0_48, %c0_49] : memref<1x8x8x64xf32, #tpu.memory_space<vmem>>, vector<1x8x8x64xf32>
    %40 = vector.shape_cast %39 : vector<1x8x8x64xf32> to vector<8x8x64xf32>
    %41 = vector.shape_cast %38 : vector<8x8x64xf32> to vector<1x8x8x64xf32>
    tpu.vector_store %arg6[%c0_46, %c0_47, %c0_48, %c0_49], %41 {strides = array<i32>} : memref<1x8x8x64xf32, #tpu.memory_space<vmem>>, vector<1x8x8x64xf32>,
    return
  }
  func.func @transform_0(%arg0: i32) -> (i32, i32, i32, i32) {
    %c0_i32 = arith.constant 0 : i32
    %c0_i32_0 = arith.constant 0 : i32
    %c0_i32_1 = arith.constant 0 : i32
    %c0_i32_2 = arith.constant 0 : i32
    return %arg0, %c0_i32, %c0_i32_0, %c0_i32_1 : i32, i32, i32, i32
  }
  func.func @transform_1(%arg0: i32) -> (i32, i32, i32, i32) {
    %c0_i32 = arith.constant 0 : i32
    %c0_i32_0 = arith.constant 0 : i32
    %c0_i32_1 = arith.constant 0 : i32
    %c0_i32_2 = arith.constant 0 : i32
    return %arg0, %c0_i32, %c0_i32_0, %c0_i32_1 : i32, i32, i32, i32
  }
  func.func @transform_2(%arg0: i32) -> (i32, i32) {
    %c0_i32 = arith.constant 0 : i32
    %c0_i32_0 = arith.constant 0 : i32
    %c0_i32_1 = arith.constant 0 : i32
    return %c0_i32, %c0_i32_0 : i32, i32
  }
  func.func @transform_3(%arg0: i32) -> (i32, i32) {
    %c0_i32 = arith.constant 0 : i32
    %c0_i32_0 = arith.constant 0 : i32
    %c0_i32_1 = arith.constant 0 : i32
    return %c0_i32, %c0_i32_0 : i32, i32
  }
  func.func @transform_4(%arg0: i32) -> (i32, i32) {
    %c0_i32 = arith.constant 0 : i32
    %c0_i32_0 = arith.constant 0 : i32
    %c0_i32_1 = arith.constant 0 : i32
    return %c0_i32, %c0_i32_0 : i32, i32
  }
  func.func @transform_5(%arg0: i32) -> (i32, i32, i32, i32) {
    %c0_i32 = arith.constant 0 : i32
    %c0_i32_0 = arith.constant 0 : i32
    %c0_i32_1 = arith.constant 0 : i32
    %c0_i32_2 = arith.constant 0 : i32
    return %arg0, %c0_i32, %c0_i32_0, %c0_i32_1 : i32, i32, i32, i32
  }
}

</mosaic_0001>

<llo_original>
// kernel: resnet_block3d_forward.7
$region0: #{resnet_block3d_forward.7}
  #allocation0 [shape = 'u32[]', space=smem, size = 0x4, offset = 0x4, fixed_abs, tag = 'smem constant byte address 0x4 - core index']
  #allocation1 [shape = 'u32[72,128]{1,0:T(1,128)}', space=vmem, size = 0x9000, scoped, tag = 'internal scratch']
  %s0 = inlined_call_operand.hbm [shape: f32[2,32], index: 0, kind: input, shape index: {}]
  %s1 = inlined_call_operand.vmem [shape: bf16[32,64], index: 1, kind: input, shape index: {}]
  %s2 = inlined_call_operand.vmem [shape: f32[1,64], index: 2, kind: input, shape index: {}]
  %s3 = inlined_call_operand.vmem [shape: f32[2,64], index: 3, kind: output, shape index: {}]
  %s4 = sld [smem:[#allocation0]]
  $region26: #{resnet_block3d_forward.7} parent=0
    _
  %s6 = ssub.s32 1, %s4
  %s7 = scalar_select 0, %s6, %s4
  $region1: #{resnet_block3d_forward.7} parent=0
    #allocation2 [shape = 'u8[1024]{0}', space=vmem, size = 0x400, scoped, tag = 'input window, operand 0, single buffered']
    #allocation3 [shape = 's32[1]{0}', space=sflag, size = 0x4, scoped, tag = 'scoped memory for resnet_block3d_forward.7']
    %8 = vsyncpa [#allocation3], 0
    // Predicated region
    $region2: #{resnet_block3d_forward.7} parent=1 // pred_check
      _
    $region3: #{resnet_block3d_forward.7} parent=1 // pred_check_branch
      %10 = sbr.rel (0) target = $region5
    $region4: #{resnet_block3d_forward.7} parent=1 // pred_region
      %12 = vsyncadd [#allocation3], 0
      %s14 = sshll.u32 %s0, 4
      %s15 = int_to_ptr.hbm [resolvable:$true] %s14
      %s16 = sshll.u32 [#allocation2], 4
      %s17 = int_to_ptr.vmem [resolvable:$true] %s16
      %19 = dma.hbm_to_vmem [thread:$0]  %s15, 32, %s17, [#allocation3]
    $region5: #{resnet_block3d_forward.7} parent=1 // pred_fallthru
      _
    // Predicated region
    $region6: #{resnet_block3d_forward.7} parent=1 // pred_check
      _
    $region7: #{resnet_block3d_forward.7} parent=1 // pred_check_branch
      %21 = sbr.rel (0) target = $region9
    $region8: #{resnet_block3d_forward.7} parent=1 // pred_region
      _
    $region9: #{resnet_block3d_forward.7} parent=1 // pred_fallthru
      _
    // Predicated region
    $region10: #{resnet_block3d_forward.7} parent=1 // pred_check
      _
    $region11: #{resnet_block3d_forward.7} parent=1 // pred_check_branch
      %23 = sbr.rel (0) target = $region13
    $region12: #{resnet_block3d_forward.7} parent=1 // pred_region
      _
    $region13: #{resnet_block3d_forward.7} parent=1 // pred_fallthru
      _
    // Predicated region
    $region14: #{resnet_block3d_forward.7} parent=1 // pred_check
      _
    $region15: #{resnet_block3d_forward.7} parent=1 // pred_check_branch
      %25 = sbr.rel (0) target = $region17
    $region16: #{resnet_block3d_forward.7} parent=1 // pred_region
      %27 = dma.done [#allocation3], 32
    $region17: #{resnet_block3d_forward.7} parent=1 // pred_fallthru
      _
    %v29 = vld [vmem:[#allocation2] sm:$0x3]
    %v30 = vxor.u32 %v29, 2147483648
    %v31 = vmul.f32 %v30, 1.442695
    %v32 = vpow.pop %v31
    %v33 = vadd.f32 %v32, 1.0
    %v34 = vrcp.pop %v33
    %v35 = vmul.f32 %v33, %v34
    %v36 = vsub.f32 1.0, %v35
    %v37 = vmul.f32 %v34, %v36
    %v38 = vadd.f32 %v34, %v37
    %vm39 = vweird.f32 %v33
    %vm40 = vweird.f32 %v34
    %vm41 = vmor %vm39, %vm40
    %v42 = vsel %vm41, %v34, %v38
    %v43 = vand.u32 2147483647, %v33
    %vm44 = vcmp.eq.f32.partialorder %v43, 8.507059e+37
    %v45 = vand.u32 %v33, 2147483648
    %v46 = vor.u32 1.1754944e-38, %v45
    %v47 = vsel %vm44, %v46, %v42
    %v48 = vmul.f32 1.0, %v47
    %v49 = vmul.f32 %v29, %v48
    %v50 = vpack.c.bf16 %v49, %v49
    %v51 = vld [vmem:[%s1] sm:$0xf]
    %v52 = vld [vmem:[%s1 + $0x4] sm:$0xf]
    %v53 = vld [vmem:[%s1 + $0x8] sm:$0xf]
    %v54 = vld [vmem:[%s1 + $0xc] sm:$0xf]
    %v55 = vld [vmem:[%s2] sm:$0x1]
    %v57 = vperm.slane %v55, 0
    %v63 = vunpack.c.l.b16 %v51
    %v64 = vunpack.c.l.b16 %v52
    %v65 = vunpack.c.l.b16 %v53
    %v66 = vunpack.c.l.b16 %v54
    %v67 = vpack.c.b16 %v64, %v63
    %v68 = vpack.c.b16 %v66, %v65
    %vm71 = vcmask 261120
    %v73 = vsel %vm71, %v50, 0
    %75 = vmatpush.bf16.msra.mxu0 0
    %76 = vmatpush.bf16.msra.mxu0 0
    %77 = vmatpush.bf16.msra.mxu0 0
    %78 = vmatpush.bf16.msra.mxu0 0
    %79 = vmatpush.bf16.msra.mxu0 0
    %80 = vmatpush.bf16.msra.mxu0 0
    %81 = vmatpush.bf16.msra.mxu0 %v68
    %82 = vmatpush.bf16.msra.mxu0 %v67
    %83 = vmatmul.bf16.gmra.mxu0 %v73
    %v84 = vpop.f32.mrf.mxu0
    %v85 = vadd.f32 %v57, %v84
    %v86 = vpop.f32.mrf.mxu0
    %87 = vdwg.mxu0
    %vm88 = vcmask 517120
    %89 = vst.msk [vmem:[%s3] sm:$0x3] %vm88, %v85
    // Predicated region
    $region18: #{resnet_block3d_forward.7} parent=1 // pred_check
      _
    $region19: #{resnet_block3d_forward.7} parent=1 // pred_check_branch
      %91 = sbr.rel (0) target = $region21
    $region20: #{resnet_block3d_forward.7} parent=1 // pred_region
      _
    $region21: #{resnet_block3d_forward.7} parent=1 // pred_fallthru
      _
    // Predicated region
    $region22: #{resnet_block3d_forward.7} parent=1 // pred_check
      _
    $region23: #{resnet_block3d_forward.7} parent=1 // pred_check_branch
      %93 = sbr.rel (0) target = $region25
    $region24: #{resnet_block3d_forward.7} parent=1 // pred_region
      _
    $region25: #{resnet_block3d_forward.7} parent=1 // pred_fallthru
      _
    %94 = vsyncpa [#allocation3], 1

// kernel: resnet_block3d_forward.6
$region0: #{resnet_block3d_forward.6}
  #allocation0 [shape = 'u32[]', space=smem, size = 0x4, offset = 0x4, fixed_abs, tag = 'smem constant byte address 0x4 - core index']
  #allocation1 [shape = 'u32[72,128]{1,0:T(1,128)}', space=vmem, size = 0x9000, scoped, tag = 'internal scratch']
  #allocation2 [shape = 'f32[10,10,32]{2,1,0:T(8,128)}', space=vmem, size = 0x14000, scoped, tag = 'scratch operand']
  %s0 = inlined_call_operand.vmem [shape: bf16[8,8,8,32], index: 0, kind: input, shape index: {}]
  %s1 = inlined_call_operand.vmem [shape: bf16[288,64], index: 1, kind: input, shape index: {}]
  %s2 = inlined_call_operand.vmem [shape: f32[1,64], index: 2, kind: input, shape index: {}]
  %s3 = inlined_call_operand.vmem [shape: f32[8,8,8,64], index: 3, kind: output, shape index: {}]
  %s4 = sld [smem:[#allocation0]]
  $region45: #{resnet_block3d_forward.6} parent=0
    _
  %s6 = ssub.s32 1, %s4
  %s7 = scalar_select 0, %s6, %s4
  loop: start=0, step=1, limit=10
  $region2: #{resnet_block3d_forward.6} parent=0 // loop_pre_header
    _
  $region3: #{resnet_block3d_forward.6} parent=0 // loop_header
    %s9 = sphi 0, %s13
    %p10 = scmp.ge.s32.totalorder %s9, 10
    %s19 = sphi 0, %s21
    %s22 = sphi 0, %s19
    %s23 = sphi 0, %s22
    %s39 = sphi 0, %s23
    %s43 = sphi 0, %s43
    %s45 = sphi 0, %s43
    %s46 = sphi 0, %s45
    %s60 = sphi 0, %s46
    %s64 = sphi 0, %s64
    %s66 = sphi 0, %s64
    %s67 = sphi 0, %s66
    %s81 = sphi 0, %s67
    %s87 = sphi 0, %s89
    %s90 = sphi 0, %s87
    %s91 = sphi 0, %s90
    %s107 = sphi 0, %s91
  $region4: #{resnet_block3d_forward.6} parent=0 // loop_header_branch
    %12 = sbr.rel (%p10) target = $region8
  $region5: #{resnet_block3d_forward.6} parent=0 // loop_body
    %s14 = ssub.s32 %s9, 1
    %s15 = ssub.s32 %s9, 2
    %s16 = sadd.s32 %s9, 1
    %s17 = ssub.s32 %s9, %s16
    %p18 = scmp.eq.s32.totalorder %s17, 0
    %s20 = sadd.s32 %s19, 1
    %s21 = scalar_select %p18, %s19, %s20
    %p24 = pneg %p18
    %p25 = scmp.eq.s32.totalorder %s9, 7
    %p26 = por %p24, %p25
    %p27 = scmp.ne.s32.totalorder %s19, %s22
    %p28 = scmp.eq.s32.totalorder %s9, 0
    %p29 = por %p27, %p28
    %p30 = scmp.ne.s32.totalorder %s19, %s22
    %p31 = scmp.eq.s32.totalorder %s14, 7
    %p32 = por %p30, %p31
    %p33 = scmp.ne.s32.totalorder %s22, %s23
    %p34 = scmp.eq.s32.totalorder %s14, 0
    %p35 = por %p33, %p34
    %p36 = scmp.ne.s32.totalorder %s22, %s23
    %p37 = scmp.eq.s32.totalorder %s15, 7
    %p38 = por %p36, %p37
    %p40 = scmp.ne.s32.totalorder %s23, %s39
    %p41 = scmp.eq.s32.totalorder %s15, 0
    %p42 = por %p40, %p41
    %s44 = sadd.s32 %s43, 1
    %p47 = scmp.eq.s32.totalorder %s9, 7
    %p48 = scmp.ne.s32.totalorder %s43, %s45
    %p49 = scmp.eq.s32.totalorder %s9, 0
    %p50 = por %p48, %p49
    %p51 = scmp.ne.s32.totalorder %s43, %s45
    %p52 = scmp.eq.s32.totalorder %s14, 7
    %p53 = por %p51, %p52
    %p54 = scmp.ne.s32.totalorder %s45, %s46
    %p55 = scmp.eq.s32.totalorder %s14, 0
    %p56 = por %p54, %p55
    %p57 = scmp.ne.s32.totalorder %s45, %s46
    %p58 = scmp.eq.s32.totalorder %s15, 7
    %p59 = por %p57, %p58
    %p61 = scmp.ne.s32.totalorder %s46, %s60
    %p62 = scmp.eq.s32.totalorder %s15, 0
    %p63 = por %p61, %p62
    %s65 = sadd.s32 %s64, 1
    %p68 = scmp.eq.s32.totalorder %s9, 7
    %p69 = scmp.ne.s32.totalorder %s64, %s66
    %p70 = scmp.eq.s32.totalorder %s9, 0
    %p71 = por %p69, %p70
    %p72 = scmp.ne.s32.totalorder %s64, %s66
    %p73 = scmp.eq.s32.totalorder %s14, 7
    %p74 = por %p72, %p73
    %p75 = scmp.ne.s32.totalorder %s66, %s67
    %p76 = scmp.eq.s32.totalorder %s14, 0
    %p77 = por %p75, %p76
    %p78 = scmp.ne.s32.totalorder %s66, %s67
    %p79 = scmp.eq.s32.totalorder %s15, 7
    %p80 = por %p78, %p79
    %p82 = scmp.ne.s32.totalorder %s67, %s81
    %p83 = scmp.eq.s32.totalorder %s15, 0
    %p84 = por %p82, %p83
    %s85 = ssub.s32 %s9, %s16
    %p86 = scmp.eq.s32.totalorder %s85, 0
    %s88 = sadd.s32 %s87, 1
    %s89 = scalar_select %p86, %s87, %s88
    %p92 = pneg %p86
    %p93 = scmp.eq.s32.totalorder %s9, 7
    %p94 = por %p92, %p93
    %p95 = scmp.ne.s32.totalorder %s87, %s90
    %p96 = scmp.eq.s32.totalorder %s9, 0
    %p97 = por %p95, %p96
    %p98 = scmp.ne.s32.totalorder %s87, %s90
    %p99 = scmp.eq.s32.totalorder %s14, 7
    %p100 = por %p98, %p99
    %p101 = scmp.ne.s32.totalorder %s90, %s91
    %p102 = scmp.eq.s32.totalorder %s14, 0
    %p103 = por %p101, %p102
    %p104 = scmp.ne.s32.totalorder %s90, %s91
    %p105 = scmp.eq.s32.totalorder %s15, 7
    %p106 = por %p104, %p105
    %p108 = scmp.ne.s32.totalorder %s91, %s107
    %p109 = scmp.eq.s32.totalorder %s15, 0
    %p110 = por %p108, %p109
    %p111 = scmp.le.s32.totalorder 1, %s9
    %p112 = scmp.lt.s32.totalorder %s9, 9
    %p113 = pnand %p111, %p112
    %p114 = pneg %p113
    // Predicated region
    $region9: #{resnet_block3d_forward.6} parent=5 // pred_check
      _
    $region10: #{resnet_block3d_forward.6} parent=5 // pred_check_branch
      %116 = sbr.rel (%p113) target = $region12
    $region11: #{resnet_block3d_forward.6} parent=5 // pred_region
      %s117 = ssub.s32 %s9, 1
      // Predicated region
      $region13: #{resnet_block3d_forward.6} parent=11 // pred_check
        %p118 = pneg %p56
      $region14: #{resnet_block3d_forward.6} parent=11 // pred_check_branch
        %120 = sbr.rel (%p118) target = $region16
      $region15: #{resnet_block3d_forward.6} parent=11 // pred_region
        _
      $region16: #{resnet_block3d_forward.6} parent=11 // pred_fallthru
        _
      // Predicated region
      $region17: #{resnet_block3d_forward.6} parent=11 // pred_check
        %p121 = pneg %p77
      $region18: #{resnet_block3d_forward.6} parent=11 // pred_check_branch
        %123 = sbr.rel (%p121) target = $region20
      $region19: #{resnet_block3d_forward.6} parent=11 // pred_region
        _
      $region20: #{resnet_block3d_forward.6} parent=11 // pred_fallthru
        _
    $region12: #{resnet_block3d_forward.6} parent=5 // pred_fallthru
      _
    %p124 = scmp.lt.s32.totalorder %s9, 8
    // Predicated region
    $region21: #{resnet_block3d_forward.6} parent=5 // pred_check
      %p125 = pneg %p124
    $region22: #{resnet_block3d_forward.6} parent=5 // pred_check_branch
      %127 = sbr.rel (%p125) target = $region24
    $region23: #{resnet_block3d_forward.6} parent=5 // pred_region
      // Predicated region
      $region25: #{resnet_block3d_forward.6} parent=23 // pred_check
        %p128 = pneg %p29
      $region26: #{resnet_block3d_forward.6} parent=23 // pred_check_branch
        %130 = sbr.rel (%p128) target = $region28
      $region27: #{resnet_block3d_forward.6} parent=23 // pred_region
        %p131 = scmp.lt.s32.totalorder %s9, 7
        %s132 = scalar_select %p131, %s9, 7
        %s133 = smul.addr %s132, 8
        %s134 = smul.addr %s133, 4
        %s135 = scalar_lea.vmem %s0, %s134
      $region28: #{resnet_block3d_forward.6} parent=23 // pred_fallthru
        _
    $region24: #{resnet_block3d_forward.6} parent=5 // pred_fallthru
      _
    %p136 = scmp.le.s32.totalorder 1, %s9
    %p137 = scmp.lt.s32.totalorder %s9, 9
    %p138 = pnand %p136, %p137
    %p139 = pneg %p138
    // Predicated region
    $region29: #{resnet_block3d_forward.6} parent=5 // pred_check
      _
    $region30: #{resnet_block3d_forward.6} parent=5 // pred_check_branch
      %141 = sbr.rel (%p138) target = $region32
    $region31: #{resnet_block3d_forward.6} parent=5 // pred_region
      %s142 = ssub.s32 %s9, 1
      %p143 = scmp.lt.s32.totalorder %s14, 7
      %s144 = scalar_select %p143, %s14, 7
      %s145 = smul.addr %s144, 8
      %s146 = smul.addr %s145, 4
      %s147 = scalar_lea.vmem %s0, %s146
      %p148 = pneg %p35
      %p149 = pneg %p32
      %p150 = pneg %p56
      %p151 = pneg %p53
      %p152 = pneg %p77
      %p153 = pneg %p74
      %p154 = pneg %p103
      %p155 = pneg %p100
      %p156 = scmp.lt.s32.totalorder %s14, 7
      %s157 = scalar_select %p156, %s14, 7
      %s158 = smul.addr %s157, 8
      %s159 = smul.addr %s158, 8
      %s160 = scalar_lea.vmem %s3, %s159
      %p161 = scmp.lt.s32.totalorder %s14, 7
      %s162 = scalar_select %p161, %s14, 7
      %s163 = smul.addr %s162, 8
      %s164 = smul.addr %s163, 4
      %s165 = scalar_lea.vmem %s0, %s164
      %p166 = scmp.lt.s32.totalorder %s14, 7
      %s167 = scalar_select %p166, %s14, 7
      %s168 = smul.addr %s167, 8
      %s169 = smul.addr %s168, 8
      %s170 = scalar_lea.vmem %s3, %s169
      %vm172 = vcmask 261120
      %173 = vst.msk [vmem:[#allocation2] sm:$0xff] %vm172, 0.0
      %vm174 = vcmask 254976
      %175 = vst.msk [vmem:[#allocation2 + $0x8] sm:$0x3] %vm174, 0.0
      %176 = vst.msk [vmem:[#allocation2 + $0x10] sm:$0xff] %vm172, 0.0
      %177 = vst.msk [vmem:[#allocation2 + $0x18] sm:$0x3] %vm174, 0.0
      %178 = vst.msk [vmem:[#allocation2 + $0x20] sm:$0xff] %vm172, 0.0
      %179 = vst.msk [vmem:[#allocation2 + $0x28] sm:$0x3] %vm174, 0.0
      %180 = vst.msk [vmem:[#allocation2 + $0x30] sm:$0xff] %vm172, 0.0
      %181 = vst.msk [vmem:[#allocation2 + $0x38] sm:$0x3] %vm174, 0.0
      %182 = vst.msk [vmem:[#allocation2 + $0x40] sm:$0xff] %vm172, 0.0
      %183 = vst.msk [vmem:[#allocation2 + $0x48] sm:$0x3] %vm174, 0.0
      %184 = vst.msk [vmem:[#allocation2 + $0x50] sm:$0xff] %vm172, 0.0
      %185 = vst.msk [vmem:[#allocation2 + $0x58] sm:$0x3] %vm174, 0.0
      %186 = vst.msk [vmem:[#allocation2 + $0x60] sm:$0xff] %vm172, 0.0
      %187 = vst.msk [vmem:[#allocation2 + $0x68] sm:$0x3] %vm174, 0.0
      %188 = vst.msk [vmem:[#allocation2 + $0x70] sm:$0xff] %vm172, 0.0
      %189 = vst.msk [vmem:[#allocation2 + $0x78] sm:$0x3] %vm174, 0.0
      %190 = vst.msk [vmem:[#allocation2 + $0x80] sm:$0xff] %vm172, 0.0
      %191 = vst.msk [vmem:[#allocation2 + $0x88] sm:$0x3] %vm174, 0.0
      %192 = vst.msk [vmem:[#allocation2 + $0x90] sm:$0xff] %vm172, 0.0
      %193 = vst.msk [vmem:[#allocation2 + $0x98] sm:$0x3] %vm174, 0.0
      %v194 = vld [vmem:[%s165] sm:$0xf]
      %v195 = vld [vmem:[%s165 + $0x4] sm:$0xf]
      %v196 = vld [vmem:[%s165 + $0x8] sm:$0xf]
      %v197 = vld [vmem:[%s165 + $0xc] sm:$0xf]
      %v198 = vld [vmem:[%s165 + $0x10] sm:$0xf]
      %v199 = vld [vmem:[%s165 + $0x14] sm:$0xf]
      %v200 = vld [vmem:[%s165 + $0x18] sm:$0xf]
      %v201 = vld [vmem:[%s165 + $0x1c] sm:$0xf]
      %v202 = vunpack.c.l.bf16 %v194
      %v203 = vunpack.c.l.bf16 %v195
      %v204 = vunpack.c.l.bf16 %v196
      %v205 = vunpack.c.l.bf16 %v197
      %v206 = vunpack.c.l.bf16 %v198
      %v207 = vunpack.c.l.bf16 %v199
      %v208 = vunpack.c.l.bf16 %v200
      %v209 = vunpack.c.l.bf16 %v201
      %s210 = scalar_lea.vmem [#allocation2], 16
      %211 = vst.msk [vmem:[%s210 + $0x1] sm:$0xff] %vm172, %v202
      %212 = vst.msk [vmem:[%s210 + $0x11] sm:$0xff] %vm172, %v203
      %213 = vst.msk [vmem:[%s210 + $0x21] sm:$0xff] %vm172, %v204
      %214 = vst.msk [vmem:[%s210 + $0x31] sm:$0xff] %vm172, %v205
      %215 = vst.msk [vmem:[%s210 + $0x41] sm:$0xff] %vm172, %v206
      %216 = vst.msk [vmem:[%s210 + $0x51] sm:$0xff] %vm172, %v207
      %217 = vst.msk [vmem:[%s210 + $0x61] sm:$0xff] %vm172, %v208
      %218 = vst.msk [vmem:[%s210 + $0x71] sm:$0xff] %vm172, %v209
      %v219 = vld [vmem:[#allocation2] sm:$0xff]
      %v220 = vld [vmem:[#allocation2 + $0x10] sm:$0xff]
      %v221 = vld [vmem:[#allocation2 + $0x20] sm:$0xff]
      %v222 = vld [vmem:[#allocation2 + $0x30] sm:$0xff]
      %v223 = vld [vmem:[#allocation2 + $0x40] sm:$0xff]
      %v224 = vld [vmem:[#allocation2 + $0x50] sm:$0xff]
      %v225 = vld [vmem:[#allocation2 + $0x60] sm:$0xff]
      %v226 = vld [vmem:[#allocation2 + $0x70] sm:$0xff]
      %v227 = vld [vmem:[#allocation2 + $0x1] sm:$0xff]
      %v228 = vld [vmem:[#allocation2 + $0x11] sm:$0xff]
      %v229 = vld [vmem:[#allocation2 + $0x21] sm:$0xff]
      %v230 = vld [vmem:[#allocation2 + $0x31] sm:$0xff]
      %v231 = vld [vmem:[#allocation2 + $0x41] sm:$0xff]
      %v232 = vld [vmem:[#allocation2 + $0x51] sm:$0xff]
      %v233 = vld [vmem:[#allocation2 + $0x61] sm:$0xff]
      %v234 = vld [vmem:[#allocation2 + $0x71] sm:$0xff]
      %v235 = vld [vmem:[#allocation2 + $0x2] sm:$0xff]
      %v236 = vld [vmem:[#allocation2 + $0x12] sm:$0xff]
      %v237 = vld [vmem:[#allocation2 + $0x22] sm:$0xff]
      %v238 = vld [vmem:[#allocation2 + $0x32] sm:$0xff]
      %v239 = vld [vmem:[#allocation2 + $0x42] sm:$0xff]
      %v240 = vld [vmem:[#allocation2 + $0x52] sm:$0xff]
      %v241 = vld [vmem:[#allocation2 + $0x62] sm:$0xff]
      %v242 = vld [vmem:[#allocation2 + $0x72] sm:$0xff]
      %v243 = vld [vmem:[%s210] sm:$0xff]
      %v244 = vld [vmem:[%s210 + $0x10] sm:$0xff]
      %v245 = vld [vmem:[%s210 + $0x20] sm:$0xff]
      %v246 = vld [vmem:[%s210 + $0x30] sm:$0xff]
      %v247 = vld [vmem:[%s210 + $0x40] sm:$0xff]
      %v248 = vld [vmem:[%s210 + $0x50] sm:$0xff]
      %v249 = vld [vmem:[%s210 + $0x60] sm:$0xff]
      %v250 = vld [vmem:[%s210 + $0x70] sm:$0xff]
      %v251 = vld [vmem:[%s210 + $0x1] sm:$0xff]
      %v252 = vld [vmem:[%s210 + $0x11] sm:$0xff]
      %v253 = vld [vmem:[%s210 + $0x21] sm:$0xff]
      %v254 = vld [vmem:[%s210 + $0x31] sm:$0xff]
      %v255 = vld [vmem:[%s210 + $0x41] sm:$0xff]
      %v256 = vld [vmem:[%s210 + $0x51] sm:$0xff]
      %v257 = vld [vmem:[%s210 + $0x61] sm:$0xff]
      %v258 = vld [vmem:[%s210 + $0x71] sm:$0xff]
      %v259 = vld [vmem:[%s210 + $0x2] sm:$0xff]
      %v260 = vld [vmem:[%s210 + $0x12] sm:$0xff]
      %v261 = vld [vmem:[%s210 + $0x22] sm:$0xff]
      %v262 = vld [vmem:[%s210 + $0x32] sm:$0xff]
      %v263 = vld [vmem:[%s210 + $0x42] sm:$0xff]
      %v264 = vld [vmem:[%s210 + $0x52] sm:$0xff]
      %v265 = vld [vmem:[%s210 + $0x62] sm:$0xff]
      %v266 = vld [vmem:[%s210 + $0x72] sm:$0xff]
      %s267 = scalar_lea.vmem [#allocation2], 32
      %v268 = vld [vmem:[%s267] sm:$0xff]
      %v269 = vld [vmem:[%s267 + $0x10] sm:$0xff]
      %v270 = vld [vmem:[%s267 + $0x20] sm:$0xff]
      %v271 = vld [vmem:[%s267 + $0x30] sm:$0xff]
      %v272 = vld [vmem:[%s267 + $0x40] sm:$0xff]
      %v273 = vld [vmem:[%s267 + $0x50] sm:$0xff]
      %v274 = vld [vmem:[%s267 + $0x60] sm:$0xff]
      %v275 = vld [vmem:[%s267 + $0x70] sm:$0xff]
      %v276 = vld [vmem:[%s267 + $0x1] sm:$0xff]
      %v277 = vld [vmem:[%s267 + $0x11] sm:$0xff]
      %v278 = vld [vmem:[%s267 + $0x21] sm:$0xff]
      %v279 = vld [vmem:[%s267 + $0x31] sm:$0xff]
      %v280 = vld [vmem:[%s267 + $0x41] sm:$0xff]
      %v281 = vld [vmem:[%s267 + $0x51] sm:$0xff]
      %v282 = vld [vmem:[%s267 + $0x61] sm:$0xff]
      %v283 = vld [vmem:[%s267 + $0x71] sm:$0xff]
      %v284 = vld [vmem:[%s267 + $0x2] sm:$0xff]
      %v285 = vld [vmem:[%s267 + $0x12] sm:$0xff]
      %v286 = vld [vmem:[%s267 + $0x22] sm:$0xff]
      %v287 = vld [vmem:[%s267 + $0x32] sm:$0xff]
      %v288 = vld [vmem:[%s267 + $0x42] sm:$0xff]
      %v289 = vld [vmem:[%s267 + $0x52] sm:$0xff]
      %v290 = vld [vmem:[%s267 + $0x62] sm:$0xff]
      %v291 = vld [vmem:[%s267 + $0x72] sm:$0xff]
      %300 = vrot.lane.b32.xlu0 %v227, 32
      %v301 = vpop.permute.xlu0 %300
      %302 = vrot.lane.b32.xlu0 %v228, 32
      %v303 = vpop.permute.xlu0 %302
      %304 = vrot.lane.b32.xlu0 %v229, 32
      %v305 = vpop.permute.xlu0 %304
      %306 = vrot.lane.b32.xlu0 %v230, 32
      %v307 = vpop.permute.xlu0 %306
      %308 = vrot.lane.b32.xlu0 %v231, 32
      %v309 = vpop.permute.xlu0 %308
      %310 = vrot.lane.b32.xlu0 %v232, 32
      %v311 = vpop.permute.xlu0 %310
      %312 = vrot.lane.b32.xlu0 %v233, 32
      %v313 = vpop.permute.xlu0 %312
      %314 = vrot.lane.b32.xlu0 %v234, 32
      %v315 = vpop.permute.xlu0 %314
      %332 = vrot.lane.b32.xlu0 %v235, 64
      %v333 = vpop.permute.xlu0 %332
      %334 = vrot.lane.b32.xlu0 %v236, 64
      %v335 = vpop.permute.xlu0 %334
      %336 = vrot.lane.b32.xlu0 %v237, 64
      %v337 = vpop.permute.xlu0 %336
      %338 = vrot.lane.b32.xlu0 %v238, 64
      %v339 = vpop.permute.xlu0 %338
      %340 = vrot.lane.b32.xlu0 %v239, 64
      %v341 = vpop.permute.xlu0 %340
      %342 = vrot.lane.b32.xlu0 %v240, 64
      %v343 = vpop.permute.xlu0 %342
      %344 = vrot.lane.b32.xlu0 %v241, 64
      %v345 = vpop.permute.xlu0 %344
      %346 = vrot.lane.b32.xlu0 %v242, 64
      %v347 = vpop.permute.xlu0 %346
      %364 = vrot.lane.b32.xlu0 %v243, 96
      %v365 = vpop.permute.xlu0 %364
      %366 = vrot.lane.b32.xlu0 %v244, 96
      %v367 = vpop.permute.xlu0 %366
      %368 = vrot.lane.b32.xlu0 %v245, 96
      %v369 = vpop.permute.xlu0 %368
      %370 = vrot.lane.b32.xlu0 %v246, 96
      %v371 = vpop.permute.xlu0 %370
      %372 = vrot.lane.b32.xlu0 %v247, 96
      %v373 = vpop.permute.xlu0 %372
      %374 = vrot.lane.b32.xlu0 %v248, 96
      %v375 = vpop.permute.xlu0 %374
      %376 = vrot.lane.b32.xlu0 %v249, 96
      %v377 = vpop.permute.xlu0 %376
      %378 = vrot.lane.b32.xlu0 %v250, 96
      %v379 = vpop.permute.xlu0 %378
      %396 = vrot.lane.b32.xlu0 %v259, 32
      %v397 = vpop.permute.xlu0 %396
      %398 = vrot.lane.b32.xlu0 %v260, 32
      %v399 = vpop.permute.xlu0 %398
      %400 = vrot.lane.b32.xlu0 %v261, 32
      %v401 = vpop.permute.xlu0 %400
      %402 = vrot.lane.b32.xlu0 %v262, 32
      %v403 = vpop.permute.xlu0 %402
      %404 = vrot.lane.b32.xlu0 %v263, 32
      %v405 = vpop.permute.xlu0 %404
      %406 = vrot.lane.b32.xlu0 %v264, 32
      %v407 = vpop.permute.xlu0 %406
      %408 = vrot.lane.b32.xlu0 %v265, 32
      %v409 = vpop.permute.xlu0 %408
      %410 = vrot.lane.b32.xlu0 %v266, 32
      %v411 = vpop.permute.xlu0 %410
      %428 = vrot.lane.b32.xlu0 %v268, 64
      %v429 = vpop.permute.xlu0 %428
      %430 = vrot.lane.b32.xlu0 %v269, 64
      %v431 = vpop.permute.xlu0 %430
      %432 = vrot.lane.b32.xlu0 %v270, 64
      %v433 = vpop.permute.xlu0 %432
      %434 = vrot.lane.b32.xlu0 %v271, 64
      %v435 = vpop.permute.xlu0 %434
      %436 = vrot.lane.b32.xlu0 %v272, 64
      %v437 = vpop.permute.xlu0 %436
      %438 = vrot.lane.b32.xlu0 %v273, 64
      %v439 = vpop.permute.xlu0 %438
      %440 = vrot.lane.b32.xlu0 %v274, 64
      %v441 = vpop.permute.xlu0 %440
      %442 = vrot.lane.b32.xlu0 %v275, 64
      %v443 = vpop.permute.xlu0 %442
      %460 = vrot.lane.b32.xlu0 %v276, 96
      %v461 = vpop.permute.xlu0 %460
      %462 = vrot.lane.b32.xlu0 %v277, 96
      %v463 = vpop.permute.xlu0 %462
      %464 = vrot.lane.b32.xlu0 %v278, 96
      %v465 = vpop.permute.xlu0 %464
      %466 = vrot.lane.b32.xlu0 %v279, 96
      %v467 = vpop.permute.xlu0 %466
      %468 = vrot.lane.b32.xlu0 %v280, 96
      %v469 = vpop.permute.xlu0 %468
      %470 = vrot.lane.b32.xlu0 %v281, 96
      %v471 = vpop.permute.xlu0 %470
      %472 = vrot.lane.b32.xlu0 %v282, 96
      %v473 = vpop.permute.xlu0 %472
      %474 = vrot.lane.b32.xlu0 %v283, 96
      %v475 = vpop.permute.xlu0 %474
      %v484 = vsel %vm172, %v219, %v301
      %v485 = vsel %vm172, %v220, %v303
      %v486 = vsel %vm172, %v221, %v305
      %v487 = vsel %vm172, %v222, %v307
      %v488 = vsel %vm172, %v223, %v309
      %v489 = vsel %vm172, %v224, %v311
      %v490 = vsel %vm172, %v225, %v313
      %v491 = vsel %vm172, %v226, %v315
      %vm492 = vcmask 523264
      %v493 = vsel %vm492, %v484, %v333
      %v494 = vsel %vm492, %v485, %v335
      %v495 = vsel %vm492, %v486, %v337
      %v496 = vsel %vm492, %v487, %v339
      %v497 = vsel %vm492, %v488, %v341
      %v498 = vsel %vm492, %v489, %v343
      %v499 = vsel %vm492, %v490, %v345
      %v500 = vsel %vm492, %v491, %v347
      %vm501 = vcmask 785408
      %v502 = vsel %vm501, %v493, %v365
      %v503 = vsel %vm501, %v494, %v367
      %v504 = vsel %vm501, %v495, %v369
      %v505 = vsel %vm501, %v496, %v371
      %v506 = vsel %vm501, %v497, %v373
      %v507 = vsel %vm501, %v498, %v375
      %v508 = vsel %vm501, %v499, %v377
      %v509 = vsel %vm501, %v500, %v379
      %v510 = vsel %vm172, %v251, %v397
      %v511 = vsel %vm172, %v252, %v399
      %v512 = vsel %vm172, %v253, %v401
      %v513 = vsel %vm172, %v254, %v403
      %v514 = vsel %vm172, %v255, %v405
      %v515 = vsel %vm172, %v256, %v407
      %v516 = vsel %vm172, %v257, %v409
      %v517 = vsel %vm172, %v258, %v411
      %v518 = vsel %vm492, %v510, %v429
      %v519 = vsel %vm492, %v511, %v431
      %v520 = vsel %vm492, %v512, %v433
      %v521 = vsel %vm492, %v513, %v435
      %v522 = vsel %vm492, %v514, %v437
      %v523 = vsel %vm492, %v515, %v439
      %v524 = vsel %vm492, %v516, %v441
      %v525 = vsel %vm492, %v517, %v443
      %v526 = vsel %vm501, %v518, %v461
      %v527 = vsel %vm501, %v519, %v463
      %v528 = vsel %vm501, %v520, %v465
      %v529 = vsel %vm501, %v521, %v467
      %v530 = vsel %vm501, %v522, %v469
      %v531 = vsel %vm501, %v523, %v471
      %v532 = vsel %vm501, %v524, %v473
      %v533 = vsel %vm501, %v525, %v475
      %v534 = vpack.c.bf16 %v503, %v502
      %v535 = vpack.c.bf16 %v527, %v526
      %v536 = vpack.c.bf16 %v285, %v284
      %v537 = vpack.c.bf16 %v505, %v504
      %v538 = vpack.c.bf16 %v529, %v528
      %v539 = vpack.c.bf16 %v287, %v286
      %v540 = vpack.c.bf16 %v507, %v506
      %v541 = vpack.c.bf16 %v531, %v530
      %v542 = vpack.c.bf16 %v289, %v288
      %v543 = vpack.c.bf16 %v509, %v508
      %v544 = vpack.c.bf16 %v533, %v532
      %v545 = vpack.c.bf16 %v291, %v290
      %v546 = vld [vmem:[%s1] sm:$0xf]
      %v547 = vld [vmem:[%s1 + $0x4] sm:$0xf]
      %v548 = vld [vmem:[%s1 + $0x8] sm:$0xf]
      %v549 = vld [vmem:[%s1 + $0xc] sm:$0xf]
      %v550 = vld [vmem:[%s1 + $0x10] sm:$0xf]
      %v551 = vld [vmem:[%s1 + $0x14] sm:$0xf]
      %v552 = vld [vmem:[%s1 + $0x18] sm:$0xf]
      %v553 = vld [vmem:[%s1 + $0x1c] sm:$0xf]
      %v554 = vld [vmem:[%s1 + $0x20] sm:$0xf]
      %v555 = vld [vmem:[%s1 + $0x24] sm:$0xf]
      %v556 = vld [vmem:[%s1 + $0x28] sm:$0xf]
      %v557 = vld [vmem:[%s1 + $0x2c] sm:$0xf]
      %v558 = vld [vmem:[%s1 + $0x30] sm:$0xf]
      %v559 = vld [vmem:[%s1 + $0x34] sm:$0xf]
      %v560 = vld [vmem:[%s1 + $0x38] sm:$0xf]
      %v561 = vld [vmem:[%s1 + $0x3c] sm:$0xf]
      %v562 = vld [vmem:[%s1 + $0x40] sm:$0xf]
      %v563 = vld [vmem:[%s1 + $0x44] sm:$0xf]
      %v564 = vld [vmem:[%s1 + $0x48] sm:$0xf]
      %v565 = vld [vmem:[%s1 + $0x4c] sm:$0xf]
      %v566 = vld [vmem:[%s1 + $0x50] sm:$0xf]
      %v567 = vld [vmem:[%s1 + $0x54] sm:$0xf]
      %v568 = vld [vmem:[%s1 + $0x58] sm:$0xf]
      %v569 = vld [vmem:[%s1 + $0x5c] sm:$0xf]
      %v570 = vld [vmem:[%s1 + $0x60] sm:$0xf]
      %v571 = vld [vmem:[%s1 + $0x64] sm:$0xf]
      %v572 = vld [vmem:[%s1 + $0x68] sm:$0xf]
      %v573 = vld [vmem:[%s1 + $0x6c] sm:$0xf]
      %v574 = vld [vmem:[%s1 + $0x70] sm:$0xf]
      %v575 = vld [vmem:[%s1 + $0x74] sm:$0xf]
      %v576 = vld [vmem:[%s1 + $0x78] sm:$0xf]
      %v577 = vld [vmem:[%s1 + $0x7c] sm:$0xf]
      %v578 = vld [vmem:[%s1 + $0x80] sm:$0xf]
      %v579 = vld [vmem:[%s1 + $0x84] sm:$0xf]
      %v580 = vld [vmem:[%s1 + $0x88] sm:$0xf]
      %v581 = vld [vmem:[%s1 + $0x8c] sm:$0xf]
      %v582 = vld [vmem:[%s2] sm:$0x1]
      %v584 = vperm.slane %v582, 0
      %v622 = vunpack.c.l.b16 %v546
      %v623 = vunpack.c.l.b16 %v547
      %v624 = vunpack.c.l.b16 %v548
      %v625 = vunpack.c.l.b16 %v549
      %v626 = vunpack.c.l.b16 %v550
      %v627 = vunpack.c.l.b16 %v551
      %v628 = vunpack.c.l.b16 %v552
      %v629 = vunpack.c.l.b16 %v553
      %v630 = vunpack.c.l.b16 %v554
      %v631 = vunpack.c.l.b16 %v555
      %v632 = vunpack.c.l.b16 %v556
      %v633 = vunpack.c.l.b16 %v557
      %v634 = vunpack.c.l.b16 %v558
      %v635 = vunpack.c.l.b16 %v559
      %v636 = vunpack.c.l.b16 %v560
      %v637 = vunpack.c.l.b16 %v561
      %v638 = vunpack.c.l.b16 %v562
      %v639 = vunpack.c.l.b16 %v563
      %v640 = vunpack.c.l.b16 %v564
      %v641 = vunpack.c.l.b16 %v565
      %v642 = vunpack.c.l.b16 %v566
      %v643 = vunpack.c.l.b16 %v567
      %v644 = vunpack.c.l.b16 %v568
      %v645 = vunpack.c.l.b16 %v569
      %v646 = vunpack.c.l.b16 %v570
      %v647 = vunpack.c.l.b16 %v571
      %v648 = vunpack.c.l.b16 %v572
      %v649 = vunpack.c.l.b16 %v573
      %v650 = vunpack.c.l.b16 %v574
      %v651 = vunpack.c.l.b16 %v575
      %v652 = vunpack.c.l.b16 %v576
      %v653 = vunpack.c.l.b16 %v577
      %v654 = vunpack.c.l.b16 %v578
      %v655 = vunpack.c.l.b16 %v579
      %v656 = vunpack.c.l.b16 %v580
      %v657 = vunpack.c.l.b16 %v581
      %v658 = vpack.c.b16 %v623, %v622
      %v659 = vpack.c.b16 %v625, %v624
      %v660 = vpack.c.b16 %v627, %v626
      %v661 = vpack.c.b16 %v629, %v628
      %v662 = vpack.c.b16 %v631, %v630
      %v663 = vpack.c.b16 %v633, %v632
      %v664 = vpack.c.b16 %v635, %v634
      %v665 = vpack.c.b16 %v637, %v636
      %v666 = vpack.c.b16 %v639, %v638
      %v667 = vpack.c.b16 %v641, %v640
      %v668 = vpack.c.b16 %v643, %v642
      %v669 = vpack.c.b16 %v645, %v644
      %v670 = vpack.c.b16 %v647, %v646
      %v671 = vpack.c.b16 %v649, %v648
      %v672 = vpack.c.b16 %v651, %v650
      %v673 = vpack.c.b16 %v653, %v652
      %v674 = vpack.c.b16 %v655, %v654
      %v675 = vpack.c.b16 %v657, %v656
      %v695 = vsel %vm172, %v536, 0
      %v698 = vsel %vm172, %v539, 0
      %v701 = vsel %vm172, %v542, 0
      %v704 = vsel %vm172, %v545, 0
      %706 = vmatpush.bf16.msra.mxu0 %v665
      %707 = vmatpush.bf16.msra.mxu0 %v664
      %708 = vmatpush.bf16.msra.mxu0 %v663
      %709 = vmatpush.bf16.msra.mxu0 %v662
      %710 = vmatpush.bf16.msra.mxu0 %v661
      %711 = vmatpush.bf16.msra.mxu0 %v660
      %712 = vmatpush.bf16.msra.mxu0 %v659
      %713 = vmatpush.bf16.msra.mxu0 %v658
      %714 = vmatmul.bf16.gmra.mxu0 %v534
      %v715 = vpop.f32.mrf.mxu0
      %v716 = vadd.f32 %v584, %v715
      %v717 = vpop.f32.mrf.mxu0
      %v718 = vadd.f32 %v584, %v717
      %719 = vmatmul.bf16.gmra.mxu0 %v537
      %v720 = vpop.f32.mrf.mxu0
      %v721 = vadd.f32 %v584, %v720
      %v722 = vpop.f32.mrf.mxu0
      %v723 = vadd.f32 %v584, %v722
      %724 = vmatmul.bf16.gmra.mxu0 %v540
      %v725 = vpop.f32.mrf.mxu0
      %v726 = vadd.f32 %v584, %v725
      %v727 = vpop.f32.mrf.mxu0
      %v728 = vadd.f32 %v584, %v727
      %729 = vmatmul.bf16.gmra.mxu0 %v543
      %v730 = vpop.f32.mrf.mxu0
      %v731 = vadd.f32 %v584, %v730
      %v732 = vpop.f32.mrf.mxu0
      %v733 = vadd.f32 %v584, %v732
      %734 = vdwg.mxu0
      %735 = vmatpush.bf16.msra.mxu0 %v673
      %736 = vmatpush.bf16.msra.mxu0 %v672
      %737 = vmatpush.bf16.msra.mxu0 %v671
      %738 = vmatpush.bf16.msra.mxu0 %v670
      %739 = vmatpush.bf16.msra.mxu0 %v669
      %740 = vmatpush.bf16.msra.mxu0 %v668
      %741 = vmatpush.bf16.msra.mxu0 %v667
      %742 = vmatpush.bf16.msra.mxu0 %v666
      %743 = vmatmul.bf16.gmra.mxu0 %v535
      %v744 = vpop.f32.mrf.mxu0
      %v745 = vadd.f32 %v716, %v744
      %v746 = vpop.f32.mrf.mxu0
      %v747 = vadd.f32 %v718, %v746
      %748 = vmatmul.bf16.gmra.mxu0 %v538
      %v749 = vpop.f32.mrf.mxu0
      %v750 = vadd.f32 %v721, %v749
      %v751 = vpop.f32.mrf.mxu0
      %v752 = vadd.f32 %v723, %v751
      %753 = vmatmul.bf16.gmra.mxu0 %v541
      %v754 = vpop.f32.mrf.mxu0
      %v755 = vadd.f32 %v726, %v754
      %v756 = vpop.f32.mrf.mxu0
      %v757 = vadd.f32 %v728, %v756
      %758 = vmatmul.bf16.gmra.mxu0 %v544
      %v759 = vpop.f32.mrf.mxu0
      %v760 = vadd.f32 %v731, %v759
      %v761 = vpop.f32.mrf.mxu0
      %v762 = vadd.f32 %v733, %v761
      %763 = vdwg.mxu0
      %764 = vmatpush.bf16.msra.mxu0 0
      %765 = vmatpush.bf16.msra.mxu0 0
      %766 = vmatpush.bf16.msra.mxu0 0
      %767 = vmatpush.bf16.msra.mxu0 0
      %768 = vmatpush.bf16.msra.mxu0 0
      %769 = vmatpush.bf16.msra.mxu0 0
      %770 = vmatpush.bf16.msra.mxu0 %v675
      %771 = vmatpush.bf16.msra.mxu0 %v674
      %772 = vmatmul.bf16.gmra.mxu0 %v695
      %v773 = vpop.f32.mrf.mxu0
      %v774 = vadd.f32 %v745, %v773
      %v775 = vpop.f32.mrf.mxu0
      %v776 = vadd.f32 %v747, %v775
      %777 = vmatmul.bf16.gmra.mxu0 %v698
      %v778 = vpop.f32.mrf.mxu0
      %v779 = vadd.f32 %v750, %v778
      %v780 = vpop.f32.mrf.mxu0
      %v781 = vadd.f32 %v752, %v780
      %782 = vmatmul.bf16.gmra.mxu0 %v701
      %v783 = vpop.f32.mrf.mxu0
      %v784 = vadd.f32 %v755, %v783
      %v785 = vpop.f32.mrf.mxu0
      %v786 = vadd.f32 %v757, %v785
      %787 = vmatmul.bf16.gmra.mxu0 %v704
      %v788 = vpop.f32.mrf.mxu0
      %v789 = vadd.f32 %v760, %v788
      %v790 = vpop.f32.mrf.mxu0
      %v791 = vadd.f32 %v762, %v790
      %792 = vdwg.mxu0
      %793 = vst.msk [vmem:[%s170] sm:$0xff] %vm492, %v774
      %794 = vst.msk [vmem:[%s170 + $0x8] sm:$0xff] %vm492, %v776
      %795 = vst.msk [vmem:[%s170 + $0x10] sm:$0xff] %vm492, %v779
      %796 = vst.msk [vmem:[%s170 + $0x18] sm:$0xff] %vm492, %v781
      %797 = vst.msk [vmem:[%s170 + $0x20] sm:$0xff] %vm492, %v784
      %798 = vst.msk [vmem:[%s170 + $0x28] sm:$0xff] %vm492, %v786
      %799 = vst.msk [vmem:[%s170 + $0x30] sm:$0xff] %vm492, %v789
      %800 = vst.msk [vmem:[%s170 + $0x38] sm:$0xff] %vm492, %v791
      %p801 = scmp.lt.s32.totalorder %s14, 7
      %s802 = scalar_select %p801, %s14, 7
      %s803 = smul.addr %s802, 8
      %s804 = smul.addr %s803, 8
      %s805 = scalar_lea.vmem %s3, %s804
      // Predicated region
      $region33: #{resnet_block3d_forward.6} parent=31 // pred_check
        %p806 = pneg %p100
      $region34: #{resnet_block3d_forward.6} parent=31 // pred_check_branch
        %808 = sbr.rel (%p806) target = $region36
      $region35: #{resnet_block3d_forward.6} parent=31 // pred_region
        _
      $region36: #{resnet_block3d_forward.6} parent=31 // pred_fallthru
        _
    $region32: #{resnet_block3d_forward.6} parent=5 // pred_fallthru
      _
    %p809 = scmp.le.s32.totalorder 2, %s9
    // Predicated region
    $region37: #{resnet_block3d_forward.6} parent=5 // pred_check
      %p810 = pneg %p809
    $region38: #{resnet_block3d_forward.6} parent=5 // pred_check_branch
      %812 = sbr.rel (%p810) target = $region40
    $region39: #{resnet_block3d_forward.6} parent=5 // pred_region
      %s813 = ssub.s32 %s9, 2
      // Predicated region
      $region41: #{resnet_block3d_forward.6} parent=39 // pred_check
        %p814 = pneg %p106
      $region42: #{resnet_block3d_forward.6} parent=39 // pred_check_branch
        %816 = sbr.rel (%p814) target = $region44
      $region43: #{resnet_block3d_forward.6} parent=39 // pred_region
        %p817 = scmp.lt.s32.totalorder %s15, 7
        %s818 = scalar_select %p817, %s15, 7
        %s819 = smul.addr %s818, 8
        %s820 = smul.addr %s819, 8
        %s821 = scalar_lea.vmem %s3, %s820
      $region44: #{resnet_block3d_forward.6} parent=39 // pred_fallthru
        _
    $region40: #{resnet_block3d_forward.6} parent=5 // pred_fallthru
      _
  $region6: #{resnet_block3d_forward.6} parent=0 // loop_footer
    %s13 = sadd.s32 1, %s9
  $region7: #{resnet_block3d_forward.6} parent=0 // loop_footer_branch
    %8 = sbr.rel target = $region3
  $region8: #{resnet_block3d_forward.6} parent=0 // loop_exit
    _

// kernel: resnet_block3d_forward.5
$region0: #{resnet_block3d_forward.5}
  #allocation0 [shape = 'u32[]', space=smem, size = 0x4, offset = 0x4, fixed_abs, tag = 'smem constant byte address 0x4 - core index']
  #allocation1 [shape = 'u32[72,128]{1,0:T(1,128)}', space=vmem, size = 0x9000, scoped, tag = 'internal scratch']
  %s0 = inlined_call_operand.hbm [shape: f32[2,256,32], index: 0, kind: input, shape index: {}]
  %s1 = inlined_call_operand.vmem [shape: f32[1,32], index: 1, kind: input, shape index: {}]
  %s2 = inlined_call_operand.vmem [shape: f32[1,32], index: 2, kind: input, shape index: {}]
  %s3 = inlined_call_operand.vmem [shape: f32[32,32], index: 3, kind: input, shape index: {}]
  %s4 = inlined_call_operand.vmem [shape: bf16[2,256,32], index: 4, kind: output, shape index: {}]
  %s5 = sld [smem:[#allocation0]]
  $region53: #{resnet_block3d_forward.5} parent=0
    _
  %s7 = ssub.s32 1, %s5
  %s8 = scalar_select 0, %s7, %s5
  $region1: #{resnet_block3d_forward.5} parent=0
    #allocation2 [shape = 'u8[262144]{0}', space=vmem, size = 0x40000, scoped, tag = 'input window, operand 0']
    #allocation3 [shape = 's32[2]{0}', space=sflag, size = 0x8, scoped, tag = 'scoped memory for resnet_block3d_forward.5']
    %9 = vsyncpa [#allocation3], 0
    %s10 = scalar_lea.sflag [#allocation3], 1
    %11 = vsyncpa %s10, 0
    loop: start=0, step=1, limit=4
    $region2: #{resnet_block3d_forward.5} parent=1 // loop_pre_header
      _
    $region3: #{resnet_block3d_forward.5} parent=1 // loop_header
      %s13 = sphi 0, %s17
      %p14 = scmp.ge.s32.totalorder %s13, 4
      %s23 = sphi 0, %s25
      %s26 = sphi 0, %s23
      %s27 = sphi 0, %s26
      %s43 = sphi 0, %s27
      %s47 = sphi 0, %s47
      %s49 = sphi 0, %s47
      %s50 = sphi 0, %s49
      %s64 = sphi 0, %s50
      %s68 = sphi 0, %s68
      %s70 = sphi 0, %s68
      %s71 = sphi 0, %s70
      %s85 = sphi 0, %s71
      %s89 = sphi 0, %s89
      %s91 = sphi 0, %s89
      %s92 = sphi 0, %s91
      %s106 = sphi 0, %s92
      %s112 = sphi 0, %s114
      %s115 = sphi 0, %s112
      %s116 = sphi 0, %s115
      %s132 = sphi 0, %s116
    $region4: #{resnet_block3d_forward.5} parent=1 // loop_header_branch
      %16 = sbr.rel (%p14) target = $region8
    $region5: #{resnet_block3d_forward.5} parent=1 // loop_body
      %s18 = ssub.s32 %s13, 1
      %s19 = ssub.s32 %s13, 2
      %s20 = sadd.s32 %s13, 1
      %s21 = ssub.s32 %s13, %s20
      %p22 = scmp.eq.s32.totalorder %s21, 0
      %s24 = sadd.s32 %s23, 1
      %s25 = scalar_select %p22, %s23, %s24
      %p28 = pneg %p22
      %p29 = scmp.eq.s32.totalorder %s13, 1
      %p30 = por %p28, %p29
      %p31 = scmp.ne.s32.totalorder %s23, %s26
      %p32 = scmp.eq.s32.totalorder %s13, 0
      %p33 = por %p31, %p32
      %p34 = scmp.ne.s32.totalorder %s23, %s26
      %p35 = scmp.eq.s32.totalorder %s18, 1
      %p36 = por %p34, %p35
      %p37 = scmp.ne.s32.totalorder %s26, %s27
      %p38 = scmp.eq.s32.totalorder %s18, 0
      %p39 = por %p37, %p38
      %p40 = scmp.ne.s32.totalorder %s26, %s27
      %p41 = scmp.eq.s32.totalorder %s19, 1
      %p42 = por %p40, %p41
      %p44 = scmp.ne.s32.totalorder %s27, %s43
      %p45 = scmp.eq.s32.totalorder %s19, 0
      %p46 = por %p44, %p45
      %s48 = sadd.s32 %s47, 1
      %p51 = scmp.eq.s32.totalorder %s13, 1
      %p52 = scmp.ne.s32.totalorder %s47, %s49
      %p53 = scmp.eq.s32.totalorder %s13, 0
      %p54 = por %p52, %p53
      %p55 = scmp.ne.s32.totalorder %s47, %s49
      %p56 = scmp.eq.s32.totalorder %s18, 1
      %p57 = por %p55, %p56
      %p58 = scmp.ne.s32.totalorder %s49, %s50
      %p59 = scmp.eq.s32.totalorder %s18, 0
      %p60 = por %p58, %p59
      %p61 = scmp.ne.s32.totalorder %s49, %s50
      %p62 = scmp.eq.s32.totalorder %s19, 1
      %p63 = por %p61, %p62
      %p65 = scmp.ne.s32.totalorder %s50, %s64
      %p66 = scmp.eq.s32.totalorder %s19, 0
      %p67 = por %p65, %p66
      %s69 = sadd.s32 %s68, 1
      %p72 = scmp.eq.s32.totalorder %s13, 1
      %p73 = scmp.ne.s32.totalorder %s68, %s70
      %p74 = scmp.eq.s32.totalorder %s13, 0
      %p75 = por %p73, %p74
      %p76 = scmp.ne.s32.totalorder %s68, %s70
      %p77 = scmp.eq.s32.totalorder %s18, 1
      %p78 = por %p76, %p77
      %p79 = scmp.ne.s32.totalorder %s70, %s71
      %p80 = scmp.eq.s32.totalorder %s18, 0
      %p81 = por %p79, %p80
      %p82 = scmp.ne.s32.totalorder %s70, %s71
      %p83 = scmp.eq.s32.totalorder %s19, 1
      %p84 = por %p82, %p83
      %p86 = scmp.ne.s32.totalorder %s71, %s85
      %p87 = scmp.eq.s32.totalorder %s19, 0
      %p88 = por %p86, %p87
      %s90 = sadd.s32 %s89, 1
      %p93 = scmp.eq.s32.totalorder %s13, 1
      %p94 = scmp.ne.s32.totalorder %s89, %s91
      %p95 = scmp.eq.s32.totalorder %s13, 0
      %p96 = por %p94, %p95
      %p97 = scmp.ne.s32.totalorder %s89, %s91
      %p98 = scmp.eq.s32.totalorder %s18, 1
      %p99 = por %p97, %p98
      %p100 = scmp.ne.s32.totalorder %s91, %s92
      %p101 = scmp.eq.s32.totalorder %s18, 0
      %p102 = por %p100, %p101
      %p103 = scmp.ne.s32.totalorder %s91, %s92
      %p104 = scmp.eq.s32.totalorder %s19, 1
      %p105 = por %p103, %p104
      %p107 = scmp.ne.s32.totalorder %s92, %s106
      %p108 = scmp.eq.s32.totalorder %s19, 0
      %p109 = por %p107, %p108
      %s110 = ssub.s32 %s13, %s20
      %p111 = scmp.eq.s32.totalorder %s110, 0
      %s113 = sadd.s32 %s112, 1
      %s114 = scalar_select %p111, %s112, %s113
      %p117 = pneg %p111
      %p118 = scmp.eq.s32.totalorder %s13, 1
      %p119 = por %p117, %p118
      %p120 = scmp.ne.s32.totalorder %s112, %s115
      %p121 = scmp.eq.s32.totalorder %s13, 0
      %p122 = por %p120, %p121
      %p123 = scmp.ne.s32.totalorder %s112, %s115
      %p124 = scmp.eq.s32.totalorder %s18, 1
      %p125 = por %p123, %p124
      %p126 = scmp.ne.s32.totalorder %s115, %s116
      %p127 = scmp.eq.s32.totalorder %s18, 0
      %p128 = por %p126, %p127
      %p129 = scmp.ne.s32.totalorder %s115, %s116
      %p130 = scmp.eq.s32.totalorder %s19, 1
      %p131 = por %p129, %p130
      %p133 = scmp.ne.s32.totalorder %s116, %s132
      %p134 = scmp.eq.s32.totalorder %s19, 0
      %p135 = por %p133, %p134
      %p136 = scmp.le.s32.totalorder 1, %s13
      %p137 = scmp.lt.s32.totalorder %s13, 3
      %p138 = pnand %p136, %p137
      %p139 = pneg %p138
      // Predicated region
      $region9: #{resnet_block3d_forward.5} parent=5 // pred_check
        _
      $region10: #{resnet_block3d_forward.5} parent=5 // pred_check_branch
        %141 = sbr.rel (%p138) target = $region12
      $region11: #{resnet_block3d_forward.5} parent=5 // pred_region
        %s142 = ssub.s32 %s13, 1
        // Predicated region
        $region13: #{resnet_block3d_forward.5} parent=11 // pred_check
          %p143 = pneg %p60
        $region14: #{resnet_block3d_forward.5} parent=11 // pred_check_branch
          %145 = sbr.rel (%p143) target = $region16
        $region15: #{resnet_block3d_forward.5} parent=11 // pred_region
          _
        $region16: #{resnet_block3d_forward.5} parent=11 // pred_fallthru
          _
        // Predicated region
        $region17: #{resnet_block3d_forward.5} parent=11 // pred_check
          %p146 = pneg %p81
        $region18: #{resnet_block3d_forward.5} parent=11 // pred_check_branch
          %148 = sbr.rel (%p146) target = $region20
        $region19: #{resnet_block3d_forward.5} parent=11 // pred_region
          _
        $region20: #{resnet_block3d_forward.5} parent=11 // pred_fallthru
          _
        // Predicated region
        $region21: #{resnet_block3d_forward.5} parent=11 // pred_check
          %p149 = pneg %p102
        $region22: #{resnet_block3d_forward.5} parent=11 // pred_check_branch
          %151 = sbr.rel (%p149) target = $region24
        $region23: #{resnet_block3d_forward.5} parent=11 // pred_region
          _
        $region24: #{resnet_block3d_forward.5} parent=11 // pred_fallthru
          _
      $region12: #{resnet_block3d_forward.5} parent=5 // pred_fallthru
        _
      %p152 = scmp.lt.s32.totalorder %s13, 2
      // Predicated region
      $region25: #{resnet_block3d_forward.5} parent=5 // pred_check
        %p153 = pneg %p152
      $region26: #{resnet_block3d_forward.5} parent=5 // pred_check_branch
        %155 = sbr.rel (%p153) target = $region28
      $region27: #{resnet_block3d_forward.5} parent=5 // pred_region
        // Predicated region
        $region29: #{resnet_block3d_forward.5} parent=27 // pred_check
          %p156 = pneg %p33
        $region30: #{resnet_block3d_forward.5} parent=27 // pred_check_branch
          %158 = sbr.rel (%p156) target = $region32
        $region31: #{resnet_block3d_forward.5} parent=27 // pred_region
          %s159 = sand.u32 %s23, 1
          %s160 = scalar_lea.sflag [#allocation3], %s159
          %s161 = sand.u32 %s23, 1
          %s162 = smul.addr %s161, 256
          %s163 = scalar_lea.vmem [#allocation2], %s162
          %165 = vsyncadd %s160, 0
          %s166 = smul.addr %s13, 32
          %s167 = smul.addr %s166, 8
          %s168 = scalar_lea.hbm %s0, %s167
          %s169 = sshll.u32 %s168, 4
          %s170 = int_to_ptr.hbm [resolvable:$true] %s169
          %s171 = sshll.u32 %s163, 4
          %s172 = int_to_ptr.vmem [resolvable:$true] %s171
          %177 = dma.hbm_to_vmem [thread:$0]  %s170, 4096, %s172, %s160, 128, 128, 8
        $region32: #{resnet_block3d_forward.5} parent=27 // pred_fallthru
          _
      $region28: #{resnet_block3d_forward.5} parent=5 // pred_fallthru
        _
      %p178 = scmp.le.s32.totalorder 1, %s13
      %p179 = scmp.lt.s32.totalorder %s13, 3
      %p180 = pnand %p178, %p179
      %p181 = pneg %p180
      // Predicated region
      $region33: #{resnet_block3d_forward.5} parent=5 // pred_check
        _
      $region34: #{resnet_block3d_forward.5} parent=5 // pred_check_branch
        %183 = sbr.rel (%p180) target = $region36
      $region35: #{resnet_block3d_forward.5} parent=5 // pred_region
        %s184 = ssub.s32 %s13, 1
        %s185 = sand.u32 %s26, 1
        %s186 = scalar_lea.sflag [#allocation3], %s185
        %s187 = sand.u32 %s26, 1
        %s188 = smul.addr %s187, 256
        %s189 = scalar_lea.vmem [#allocation2], %s188
        // Predicated region
        $region37: #{resnet_block3d_forward.5} parent=35 // pred_check
          %p190 = pneg %p39
        $region38: #{resnet_block3d_forward.5} parent=35 // pred_check_branch
          %192 = sbr.rel (%p190) target = $region40
        $region39: #{resnet_block3d_forward.5} parent=35 // pred_region
          %194 = dma.done %s186, 4096
        $region40: #{resnet_block3d_forward.5} parent=35 // pred_fallthru
          _
        %s195 = sand.u32 %s26, 1
        %s196 = scalar_lea.sflag [#allocation3], %s195
        %s197 = sand.u32 %s26, 1
        %s198 = smul.addr %s197, 256
        %s199 = scalar_lea.vmem [#allocation2], %s198
        %p200 = pneg %p39
        %p201 = pneg %p36
        %p202 = pneg %p60
        %p203 = pneg %p57
        %p204 = pneg %p81
        %p205 = pneg %p78
        %p206 = pneg %p102
        %p207 = pneg %p99
        %p208 = pneg %p128
        %p209 = pneg %p125
        %p210 = scmp.lt.s32.totalorder %s18, 1
        %s211 = scalar_select %p210, %s18, 1
        %s212 = smul.addr %s211, 32
        %s213 = smul.addr %s212, 4
        %s214 = scalar_lea.vmem %s4, %s213
        %p215 = scmp.lt.s32.totalorder %s18, 1
        %s216 = scalar_select %p215, %s18, 1
        %s217 = smul.addr %s216, 32
        %s218 = smul.addr %s217, 4
        %s219 = scalar_lea.vmem %s4, %s218
        %v220 = vld [vmem:[%s189] sm:$0xff]
        %v221 = vld [vmem:[%s189 + $0x8] sm:$0xff]
        %v222 = vld [vmem:[%s189 + $0x10] sm:$0xff]
        %v223 = vld [vmem:[%s189 + $0x18] sm:$0xff]
        %v224 = vld [vmem:[%s189 + $0x20] sm:$0xff]
        %v225 = vld [vmem:[%s189 + $0x28] sm:$0xff]
        %v226 = vld [vmem:[%s189 + $0x30] sm:$0xff]
        %v227 = vld [vmem:[%s189 + $0x38] sm:$0xff]
        %v228 = vld [vmem:[%s189 + $0x40] sm:$0xff]
        %v229 = vld [vmem:[%s189 + $0x48] sm:$0xff]
        %v230 = vld [vmem:[%s189 + $0x50] sm:$0xff]
        %v231 = vld [vmem:[%s189 + $0x58] sm:$0xff]
        %v232 = vld [vmem:[%s189 + $0x60] sm:$0xff]
        %v233 = vld [vmem:[%s189 + $0x68] sm:$0xff]
        %v234 = vld [vmem:[%s189 + $0x70] sm:$0xff]
        %v235 = vld [vmem:[%s189 + $0x78] sm:$0xff]
        %v236 = vld [vmem:[%s189 + $0x80] sm:$0xff]
        %v237 = vld [vmem:[%s189 + $0x88] sm:$0xff]
        %v238 = vld [vmem:[%s189 + $0x90] sm:$0xff]
        %v239 = vld [vmem:[%s189 + $0x98] sm:$0xff]
        %v240 = vld [vmem:[%s189 + $0xa0] sm:$0xff]
        %v241 = vld [vmem:[%s189 + $0xa8] sm:$0xff]
        %v242 = vld [vmem:[%s189 + $0xb0] sm:$0xff]
        %v243 = vld [vmem:[%s189 + $0xb8] sm:$0xff]
        %v244 = vld [vmem:[%s189 + $0xc0] sm:$0xff]
        %v245 = vld [vmem:[%s189 + $0xc8] sm:$0xff]
        %v246 = vld [vmem:[%s189 + $0xd0] sm:$0xff]
        %v247 = vld [vmem:[%s189 + $0xd8] sm:$0xff]
        %v248 = vld [vmem:[%s189 + $0xe0] sm:$0xff]
        %v249 = vld [vmem:[%s189 + $0xe8] sm:$0xff]
        %v250 = vld [vmem:[%s189 + $0xf0] sm:$0xff]
        %v251 = vld [vmem:[%s189 + $0xf8] sm:$0xff]
        %vm252 = vcmask 261120
        %v253 = vsel %vm252, %v220, 0.0
        %v254 = vsel %vm252, %v221, 0.0
        %v255 = vadd.f32 %v253, %v254
        %v256 = vsel %vm252, %v222, 0.0
        %v257 = vadd.f32 %v255, %v256
        %v258 = vsel %vm252, %v223, 0.0
        %v259 = vadd.f32 %v257, %v258
        %v260 = vsel %vm252, %v224, 0.0
        %v261 = vadd.f32 %v259, %v260
        %v262 = vsel %vm252, %v225, 0.0
        %v263 = vadd.f32 %v261, %v262
        %v264 = vsel %vm252, %v226, 0.0
        %v265 = vadd.f32 %v263, %v264
        %v266 = vsel %vm252, %v227, 0.0
        %v267 = vadd.f32 %v265, %v266
        %v268 = vsel %vm252, %v228, 0.0
        %v269 = vadd.f32 %v267, %v268
        %v270 = vsel %vm252, %v229, 0.0
        %v271 = vadd.f32 %v269, %v270
        %v272 = vsel %vm252, %v230, 0.0
        %v273 = vadd.f32 %v271, %v272
        %v274 = vsel %vm252, %v231, 0.0
        %v275 = vadd.f32 %v273, %v274
        %v276 = vsel %vm252, %v232, 0.0
        %v277 = vadd.f32 %v275, %v276
        %v278 = vsel %vm252, %v233, 0.0
        %v279 = vadd.f32 %v277, %v278
        %v280 = vsel %vm252, %v234, 0.0
        %v281 = vadd.f32 %v279, %v280
        %v282 = vsel %vm252, %v235, 0.0
        %v283 = vadd.f32 %v281, %v282
        %v284 = vsel %vm252, %v236, 0.0
        %v285 = vadd.f32 %v283, %v284
        %v286 = vsel %vm252, %v237, 0.0
        %v287 = vadd.f32 %v285, %v286
        %v288 = vsel %vm252, %v238, 0.0
        %v289 = vadd.f32 %v287, %v288
        %v290 = vsel %vm252, %v239, 0.0
        %v291 = vadd.f32 %v289, %v290
        %v292 = vsel %vm252, %v240, 0.0
        %v293 = vadd.f32 %v291, %v292
        %v294 = vsel %vm252, %v241, 0.0
        %v295 = vadd.f32 %v293, %v294
        %v296 = vsel %vm252, %v242, 0.0
        %v297 = vadd.f32 %v295, %v296
        %v298 = vsel %vm252, %v243, 0.0
        %v299 = vadd.f32 %v297, %v298
        %v300 = vsel %vm252, %v244, 0.0
        %v301 = vadd.f32 %v299, %v300
        %v302 = vsel %vm252, %v245, 0.0
        %v303 = vadd.f32 %v301, %v302
        %v304 = vsel %vm252, %v246, 0.0
        %v305 = vadd.f32 %v303, %v304
        %v306 = vsel %vm252, %v247, 0.0
        %v307 = vadd.f32 %v305, %v306
        %v308 = vsel %vm252, %v248, 0.0
        %v309 = vadd.f32 %v307, %v308
        %v310 = vsel %vm252, %v249, 0.0
        %v311 = vadd.f32 %v309, %v310
        %v312 = vsel %vm252, %v250, 0.0
        %v313 = vadd.f32 %v311, %v312
        %v314 = vsel %vm252, %v251, 0.0
        %v315 = vadd.f32 %v313, %v314
        %v316 = vrot.slane %v315, 4
        %v317 = vadd.f32 %v315, %v316
        %v318 = vrot.slane %v317, 2
        %v319 = vadd.f32 %v317, %v318
        %v320 = vrot.slane %v319, 1
        %v321 = vadd.f32 %v319, %v320
        %v322 = vld [vmem:[%s3] sm:$0xff]
        %v323 = vld [vmem:[%s3 + $0x8] sm:$0xff]
        %v324 = vld [vmem:[%s3 + $0x10] sm:$0xff]
        %v325 = vld [vmem:[%s3 + $0x18] sm:$0xff]
        %v327 = vsel %vm252, %v321, 0
        %329 = vmatpush.msra.mxu0 0.0
        %330 = vmatpush.msra.mxu0 0.0
        %331 = vmatpush.msra.mxu0 0.0
        %332 = vmatpush.msra.mxu0 0.0
        %333 = vmatpush.msra.mxu0 0.0
        %334 = vmatpush.msra.mxu0 0.0
        %335 = vmatpush.msra.mxu0 0.0
        %336 = vmatpush.msra.mxu0 0.0
        %337 = vmatpush.msra.mxu0 0.0
        %338 = vmatpush.msra.mxu0 0.0
        %339 = vmatpush.msra.mxu0 0.0
        %340 = vmatpush.msra.mxu0 0.0
        %341 = vmatpush.msra.mxu0 %v325
        %342 = vmatpush.msra.mxu0 %v324
        %343 = vmatpush.msra.mxu0 %v323
        %344 = vmatpush.msra.mxu0 %v322
        %345 = vmatmul.f32.gmra.mxu0 %v327
        %v346 = vpop.f32.mrf.mxu0
        %v347 = vadd.f32 0.0, %v346
        %348 = vdwg.mxu0
        %v349 = vperm.slane %v347, 0
        %v350 = vsub.f32 %v220, %v349
        %v351 = vsub.f32 %v221, %v349
        %v352 = vsub.f32 %v222, %v349
        %v353 = vsub.f32 %v223, %v349
        %v354 = vsub.f32 %v224, %v349
        %v355 = vsub.f32 %v225, %v349
        %v356 = vsub.f32 %v226, %v349
        %v357 = vsub.f32 %v227, %v349
        %v358 = vsub.f32 %v228, %v349
        %v359 = vsub.f32 %v229, %v349
        %v360 = vsub.f32 %v230, %v349
        %v361 = vsub.f32 %v231, %v349
        %v362 = vsub.f32 %v232, %v349
        %v363 = vsub.f32 %v233, %v349
        %v364 = vsub.f32 %v234, %v349
        %v365 = vsub.f32 %v235, %v349
        %v366 = vsub.f32 %v236, %v349
        %v367 = vsub.f32 %v237, %v349
        %v368 = vsub.f32 %v238, %v349
        %v369 = vsub.f32 %v239, %v349
        %v370 = vsub.f32 %v240, %v349
        %v371 = vsub.f32 %v241, %v349
        %v372 = vsub.f32 %v242, %v349
        %v373 = vsub.f32 %v243, %v349
        %v374 = vsub.f32 %v244, %v349
        %v375 = vsub.f32 %v245, %v349
        %v376 = vsub.f32 %v246, %v349
        %v377 = vsub.f32 %v247, %v349
        %v378 = vsub.f32 %v248, %v349
        %v379 = vsub.f32 %v249, %v349
        %v380 = vsub.f32 %v250, %v349
        %v381 = vsub.f32 %v251, %v349
        %v382 = vmul.f32 %v350, %v350
        %v383 = vmul.f32 %v351, %v351
        %v384 = vmul.f32 %v352, %v352
        %v385 = vmul.f32 %v353, %v353
        %v386 = vmul.f32 %v354, %v354
        %v387 = vmul.f32 %v355, %v355
        %v388 = vmul.f32 %v356, %v356
        %v389 = vmul.f32 %v357, %v357
        %v390 = vmul.f32 %v358, %v358
        %v391 = vmul.f32 %v359, %v359
        %v392 = vmul.f32 %v360, %v360
        %v393 = vmul.f32 %v361, %v361
        %v394 = vmul.f32 %v362, %v362
        %v395 = vmul.f32 %v363, %v363
        %v396 = vmul.f32 %v364, %v364
        %v397 = vmul.f32 %v365, %v365
        %v398 = vmul.f32 %v366, %v366
        %v399 = vmul.f32 %v367, %v367
        %v400 = vmul.f32 %v368, %v368
        %v401 = vmul.f32 %v369, %v369
        %v402 = vmul.f32 %v370, %v370
        %v403 = vmul.f32 %v371, %v371
        %v404 = vmul.f32 %v372, %v372
        %v405 = vmul.f32 %v373, %v373
        %v406 = vmul.f32 %v374, %v374
        %v407 = vmul.f32 %v375, %v375
        %v408 = vmul.f32 %v376, %v376
        %v409 = vmul.f32 %v377, %v377
        %v410 = vmul.f32 %v378, %v378
        %v411 = vmul.f32 %v379, %v379
        %v412 = vmul.f32 %v380, %v380
        %v413 = vmul.f32 %v381, %v381
        %v414 = vsel %vm252, %v382, 0.0
        %v415 = vsel %vm252, %v383, 0.0
        %v416 = vadd.f32 %v414, %v415
        %v417 = vsel %vm252, %v384, 0.0
        %v418 = vadd.f32 %v416, %v417
        %v419 = vsel %vm252, %v385, 0.0
        %v420 = vadd.f32 %v418, %v419
        %v421 = vsel %vm252, %v386, 0.0
        %v422 = vadd.f32 %v420, %v421
        %v423 = vsel %vm252, %v387, 0.0
        %v424 = vadd.f32 %v422, %v423
        %v425 = vsel %vm252, %v388, 0.0
        %v426 = vadd.f32 %v424, %v425
        %v427 = vsel %vm252, %v389, 0.0
        %v428 = vadd.f32 %v426, %v427
        %v429 = vsel %vm252, %v390, 0.0
        %v430 = vadd.f32 %v428, %v429
        %v431 = vsel %vm252, %v391, 0.0
        %v432 = vadd.f32 %v430, %v431
        %v433 = vsel %vm252, %v392, 0.0
        %v434 = vadd.f32 %v432, %v433
        %v435 = vsel %vm252, %v393, 0.0
        %v436 = vadd.f32 %v434, %v435
        %v437 = vsel %vm252, %v394, 0.0
        %v438 = vadd.f32 %v436, %v437
        %v439 = vsel %vm252, %v395, 0.0
        %v440 = vadd.f32 %v438, %v439
        %v441 = vsel %vm252, %v396, 0.0
        %v442 = vadd.f32 %v440, %v441
        %v443 = vsel %vm252, %v397, 0.0
        %v444 = vadd.f32 %v442, %v443
        %v445 = vsel %vm252, %v398, 0.0
        %v446 = vadd.f32 %v444, %v445
        %v447 = vsel %vm252, %v399, 0.0
        %v448 = vadd.f32 %v446, %v447
        %v449 = vsel %vm252, %v400, 0.0
        %v450 = vadd.f32 %v448, %v449
        %v451 = vsel %vm252, %v401, 0.0
        %v452 = vadd.f32 %v450, %v451
        %v453 = vsel %vm252, %v402, 0.0
        %v454 = vadd.f32 %v452, %v453
        %v455 = vsel %vm252, %v403, 0.0
        %v456 = vadd.f32 %v454, %v455
        %v457 = vsel %vm252, %v404, 0.0
        %v458 = vadd.f32 %v456, %v457
        %v459 = vsel %vm252, %v405, 0.0
        %v460 = vadd.f32 %v458, %v459
        %v461 = vsel %vm252, %v406, 0.0
        %v462 = vadd.f32 %v460, %v461
        %v463 = vsel %vm252, %v407, 0.0
        %v464 = vadd.f32 %v462, %v463
        %v465 = vsel %vm252, %v408, 0.0
        %v466 = vadd.f32 %v464, %v465
        %v467 = vsel %vm252, %v409, 0.0
        %v468 = vadd.f32 %v466, %v467
        %v469 = vsel %vm252, %v410, 0.0
        %v470 = vadd.f32 %v468, %v469
        %v471 = vsel %vm252, %v411, 0.0
        %v472 = vadd.f32 %v470, %v471
        %v473 = vsel %vm252, %v412, 0.0
        %v474 = vadd.f32 %v472, %v473
        %v475 = vsel %vm252, %v413, 0.0
        %v476 = vadd.f32 %v474, %v475
        %v477 = vrot.slane %v476, 4
        %v478 = vadd.f32 %v476, %v477
        %v479 = vrot.slane %v478, 2
        %v480 = vadd.f32 %v478, %v479
        %v481 = vrot.slane %v480, 1
        %v482 = vadd.f32 %v480, %v481
        %v484 = vsel %vm252, %v482, 0
        %486 = vmatpush.msra.mxu0 0.0
        %487 = vmatpush.msra.mxu0 0.0
        %488 = vmatpush.msra.mxu0 0.0
        %489 = vmatpush.msra.mxu0 0.0
        %490 = vmatpush.msra.mxu0 0.0
        %491 = vmatpush.msra.mxu0 0.0
        %492 = vmatpush.msra.mxu0 0.0
        %493 = vmatpush.msra.mxu0 0.0
        %494 = vmatpush.msra.mxu0 0.0
        %495 = vmatpush.msra.mxu0 0.0
        %496 = vmatpush.msra.mxu0 0.0
        %497 = vmatpush.msra.mxu0 0.0
        %498 = vmatpush.msra.mxu0 %v325
        %499 = vmatpush.msra.mxu0 %v324
        %500 = vmatpush.msra.mxu0 %v323
        %501 = vmatpush.msra.mxu0 %v322
        %502 = vmatmul.f32.gmra.mxu0 %v484
        %v503 = vpop.f32.mrf.mxu0
        %v504 = vadd.f32 0.0, %v503
        %505 = vdwg.mxu0
        %v506 = vadd.f32 %v504, 1e-05
        %v507 = vrsqrt.pop %v506
        %v508 = vmul.f32 %v507, %v506
        %v509 = vmul.f32 %v508, %v507
        %v510 = vmul.f32 0.5, %v509
        %v511 = vsub.f32 1.5, %v510
        %v512 = vmul.f32 %v507, %v511
        %vm513 = vweird.f32 %v506
        %vm514 = vweird.f32 %v507
        %vm515 = vmor %vm513, %vm514
        %v516 = vsel %vm515, %v507, %v512
        %v517 = vperm.slane %v516, 0
        %v518 = vmul.f32 %v350, %v517
        %v519 = vmul.f32 %v351, %v517
        %v520 = vmul.f32 %v352, %v517
        %v521 = vmul.f32 %v353, %v517
        %v522 = vmul.f32 %v354, %v517
        %v523 = vmul.f32 %v355, %v517
        %v524 = vmul.f32 %v356, %v517
        %v525 = vmul.f32 %v357, %v517
        %v526 = vmul.f32 %v358, %v517
        %v527 = vmul.f32 %v359, %v517
        %v528 = vmul.f32 %v360, %v517
        %v529 = vmul.f32 %v361, %v517
        %v530 = vmul.f32 %v362, %v517
        %v531 = vmul.f32 %v363, %v517
        %v532 = vmul.f32 %v364, %v517
        %v533 = vmul.f32 %v365, %v517
        %v534 = vmul.f32 %v366, %v517
        %v535 = vmul.f32 %v367, %v517
        %v536 = vmul.f32 %v368, %v517
        %v537 = vmul.f32 %v369, %v517
        %v538 = vmul.f32 %v370, %v517
        %v539 = vmul.f32 %v371, %v517
        %v540 = vmul.f32 %v372, %v517
        %v541 = vmul.f32 %v373, %v517
        %v542 = vmul.f32 %v374, %v517
        %v543 = vmul.f32 %v375, %v517
        %v544 = vmul.f32 %v376, %v517
        %v545 = vmul.f32 %v377, %v517
        %v546 = vmul.f32 %v378, %v517
        %v547 = vmul.f32 %v379, %v517
        %v548 = vmul.f32 %v380, %v517
        %v549 = vmul.f32 %v381, %v517
        %v550 = vld [vmem:[%s1] sm:$0x1]
        %v552 = vperm.slane %v550, 0
        %v554 = vmul.f32 %v518, %v552
        %v555 = vmul.f32 %v519, %v552
        %v556 = vmul.f32 %v520, %v552
        %v557 = vmul.f32 %v521, %v552
        %v558 = vmul.f32 %v522, %v552
        %v559 = vmul.f32 %v523, %v552
        %v560 = vmul.f32 %v524, %v552
        %v561 = vmul.f32 %v525, %v552
        %v562 = vmul.f32 %v526, %v552
        %v563 = vmul.f32 %v527, %v552
        %v564 = vmul.f32 %v528, %v552
        %v565 = vmul.f32 %v529, %v552
        %v566 = vmul.f32 %v530, %v552
        %v567 = vmul.f32 %v531, %v552
        %v568 = vmul.f32 %v532, %v552
        %v569 = vmul.f32 %v533, %v552
        %v570 = vmul.f32 %v534, %v552
        %v571 = vmul.f32 %v535, %v552
        %v572 = vmul.f32 %v536, %v552
        %v573 = vmul.f32 %v537, %v552
        %v574 = vmul.f32 %v538, %v552
        %v575 = vmul.f32 %v539, %v552
        %v576 = vmul.f32 %v540, %v552
        %v577 = vmul.f32 %v541, %v552
        %v578 = vmul.f32 %v542, %v552
        %v579 = vmul.f32 %v543, %v552
        %v580 = vmul.f32 %v544, %v552
        %v581 = vmul.f32 %v545, %v552
        %v582 = vmul.f32 %v546, %v552
        %v583 = vmul.f32 %v547, %v552
        %v584 = vmul.f32 %v548, %v552
        %v585 = vmul.f32 %v549, %v552
        %v586 = vld [vmem:[%s2] sm:$0x1]
        %v588 = vperm.slane %v586, 0
        %v590 = vadd.f32 %v554, %v588
        %v591 = vadd.f32 %v555, %v588
        %v592 = vadd.f32 %v556, %v588
        %v593 = vadd.f32 %v557, %v588
        %v594 = vadd.f32 %v558, %v588
        %v595 = vadd.f32 %v559, %v588
        %v596 = vadd.f32 %v560, %v588
        %v597 = vadd.f32 %v561, %v588
        %v598 = vadd.f32 %v562, %v588
        %v599 = vadd.f32 %v563, %v588
        %v600 = vadd.f32 %v564, %v588
        %v601 = vadd.f32 %v565, %v588
        %v602 = vadd.f32 %v566, %v588
        %v603 = vadd.f32 %v567, %v588
        %v604 = vadd.f32 %v568, %v588
        %v605 = vadd.f32 %v569, %v588
        %v606 = vadd.f32 %v570, %v588
        %v607 = vadd.f32 %v571, %v588
        %v608 = vadd.f32 %v572, %v588
        %v609 = vadd.f32 %v573, %v588
        %v610 = vadd.f32 %v574, %v588
        %v611 = vadd.f32 %v575, %v588
        %v612 = vadd.f32 %v576, %v588
        %v613 = vadd.f32 %v577, %v588
        %v614 = vadd.f32 %v578, %v588
        %v615 = vadd.f32 %v579, %v588
        %v616 = vadd.f32 %v580, %v588
        %v617 = vadd.f32 %v581, %v588
        %v618 = vadd.f32 %v582, %v588
        %v619 = vadd.f32 %v583, %v588
        %v620 = vadd.f32 %v584, %v588
        %v621 = vadd.f32 %v585, %v588
        %v622 = vxor.u32 %v590, 2147483648
        %v623 = vxor.u32 %v591, 2147483648
        %v624 = vxor.u32 %v592, 2147483648
        %v625 = vxor.u32 %v593, 2147483648
        %v626 = vxor.u32 %v594, 2147483648
        %v627 = vxor.u32 %v595, 2147483648
        %v628 = vxor.u32 %v596, 2147483648
        %v629 = vxor.u32 %v597, 2147483648
        %v630 = vxor.u32 %v598, 2147483648
        %v631 = vxor.u32 %v599, 2147483648
        %v632 = vxor.u32 %v600, 2147483648
        %v633 = vxor.u32 %v601, 2147483648
        %v634 = vxor.u32 %v602, 2147483648
        %v635 = vxor.u32 %v603, 2147483648
        %v636 = vxor.u32 %v604, 2147483648
        %v637 = vxor.u32 %v605, 2147483648
        %v638 = vxor.u32 %v606, 2147483648
        %v639 = vxor.u32 %v607, 2147483648
        %v640 = vxor.u32 %v608, 2147483648
        %v641 = vxor.u32 %v609, 2147483648
        %v642 = vxor.u32 %v610, 2147483648
        %v643 = vxor.u32 %v611, 2147483648
        %v644 = vxor.u32 %v612, 2147483648
        %v645 = vxor.u32 %v613, 2147483648
        %v646 = vxor.u32 %v614, 2147483648
        %v647 = vxor.u32 %v615, 2147483648
        %v648 = vxor.u32 %v616, 2147483648
        %v649 = vxor.u32 %v617, 2147483648
        %v650 = vxor.u32 %v618, 2147483648
        %v651 = vxor.u32 %v619, 2147483648
        %v652 = vxor.u32 %v620, 2147483648
        %v653 = vxor.u32 %v621, 2147483648
        %v654 = vmul.f32 %v622, 1.442695
        %v655 = vpow.pop %v654
        %v656 = vmul.f32 %v623, 1.442695
        %v657 = vpow.pop %v656
        %v658 = vmul.f32 %v624, 1.442695
        %v659 = vpow.pop %v658
        %v660 = vmul.f32 %v625, 1.442695
        %v661 = vpow.pop %v660
        %v662 = vmul.f32 %v626, 1.442695
        %v663 = vpow.pop %v662
        %v664 = vmul.f32 %v627, 1.442695
        %v665 = vpow.pop %v664
        %v666 = vmul.f32 %v628, 1.442695
        %v667 = vpow.pop %v666
        %v668 = vmul.f32 %v629, 1.442695
        %v669 = vpow.pop %v668
        %v670 = vmul.f32 %v630, 1.442695
        %v671 = vpow.pop %v670
        %v672 = vmul.f32 %v631, 1.442695
        %v673 = vpow.pop %v672
        %v674 = vmul.f32 %v632, 1.442695
        %v675 = vpow.pop %v674
        %v676 = vmul.f32 %v633, 1.442695
        %v677 = vpow.pop %v676
        %v678 = vmul.f32 %v634, 1.442695
        %v679 = vpow.pop %v678
        %v680 = vmul.f32 %v635, 1.442695
        %v681 = vpow.pop %v680
        %v682 = vmul.f32 %v636, 1.442695
        %v683 = vpow.pop %v682
        %v684 = vmul.f32 %v637, 1.442695
        %v685 = vpow.pop %v684
        %v686 = vmul.f32 %v638, 1.442695
        %v687 = vpow.pop %v686
        %v688 = vmul.f32 %v639, 1.442695
        %v689 = vpow.pop %v688
        %v690 = vmul.f32 %v640, 1.442695
        %v691 = vpow.pop %v690
        %v692 = vmul.f32 %v641, 1.442695
        %v693 = vpow.pop %v692
        %v694 = vmul.f32 %v642, 1.442695
        %v695 = vpow.pop %v694
        %v696 = vmul.f32 %v643, 1.442695
        %v697 = vpow.pop %v696
        %v698 = vmul.f32 %v644, 1.442695
        %v699 = vpow.pop %v698
        %v700 = vmul.f32 %v645, 1.442695
        %v701 = vpow.pop %v700
        %v702 = vmul.f32 %v646, 1.442695
        %v703 = vpow.pop %v702
        %v704 = vmul.f32 %v647, 1.442695
        %v705 = vpow.pop %v704
        %v706 = vmul.f32 %v648, 1.442695
        %v707 = vpow.pop %v706
        %v708 = vmul.f32 %v649, 1.442695
        %v709 = vpow.pop %v708
        %v710 = vmul.f32 %v650, 1.442695
        %v711 = vpow.pop %v710
        %v712 = vmul.f32 %v651, 1.442695
        %v713 = vpow.pop %v712
        %v714 = vmul.f32 %v652, 1.442695
        %v715 = vpow.pop %v714
        %v716 = vmul.f32 %v653, 1.442695
        %v717 = vpow.pop %v716
        %v718 = vadd.f32 %v655, 1.0
        %v719 = vadd.f32 %v657, 1.0
        %v720 = vadd.f32 %v659, 1.0
        %v721 = vadd.f32 %v661, 1.0
        %v722 = vadd.f32 %v663, 1.0
        %v723 = vadd.f32 %v665, 1.0
        %v724 = vadd.f32 %v667, 1.0
        %v725 = vadd.f32 %v669, 1.0
        %v726 = vadd.f32 %v671, 1.0
        %v727 = vadd.f32 %v673, 1.0
        %v728 = vadd.f32 %v675, 1.0
        %v729 = vadd.f32 %v677, 1.0
        %v730 = vadd.f32 %v679, 1.0
        %v731 = vadd.f32 %v681, 1.0
        %v732 = vadd.f32 %v683, 1.0
        %v733 = vadd.f32 %v685, 1.0
        %v734 = vadd.f32 %v687, 1.0
        %v735 = vadd.f32 %v689, 1.0
        %v736 = vadd.f32 %v691, 1.0
        %v737 = vadd.f32 %v693, 1.0
        %v738 = vadd.f32 %v695, 1.0
        %v739 = vadd.f32 %v697, 1.0
        %v740 = vadd.f32 %v699, 1.0
        %v741 = vadd.f32 %v701, 1.0
        %v742 = vadd.f32 %v703, 1.0
        %v743 = vadd.f32 %v705, 1.0
        %v744 = vadd.f32 %v707, 1.0
        %v745 = vadd.f32 %v709, 1.0
        %v746 = vadd.f32 %v711, 1.0
        %v747 = vadd.f32 %v713, 1.0
        %v748 = vadd.f32 %v715, 1.0
        %v749 = vadd.f32 %v717, 1.0
        %v750 = vrcp.pop %v718
        %v751 = vmul.f32 %v718, %v750
        %v752 = vsub.f32 1.0, %v751
        %v753 = vmul.f32 %v750, %v752
        %v754 = vadd.f32 %v750, %v753
        %vm755 = vweird.f32 %v718
        %vm756 = vweird.f32 %v750
        %vm757 = vmor %vm755, %vm756
        %v758 = vsel %vm757, %v750, %v754
        %v759 = vand.u32 2147483647, %v718
        %vm760 = vcmp.eq.f32.partialorder %v759, 8.507059e+37
        %v761 = vand.u32 %v718, 2147483648
        %v762 = vor.u32 1.1754944e-38, %v761
        %v763 = vsel %vm760, %v762, %v758
        %v764 = vmul.f32 1.0, %v763
        %v765 = vrcp.pop %v719
        %v766 = vmul.f32 %v719, %v765
        %v767 = vsub.f32 1.0, %v766
        %v768 = vmul.f32 %v765, %v767
        %v769 = vadd.f32 %v765, %v768
        %vm770 = vweird.f32 %v719
        %vm771 = vweird.f32 %v765
        %vm772 = vmor %vm770, %vm771
        %v773 = vsel %vm772, %v765, %v769
        %v774 = vand.u32 2147483647, %v719
        %vm775 = vcmp.eq.f32.partialorder %v774, 8.507059e+37
        %v776 = vand.u32 %v719, 2147483648
        %v777 = vor.u32 1.1754944e-38, %v776
        %v778 = vsel %vm775, %v777, %v773
        %v779 = vmul.f32 1.0, %v778
        %v780 = vrcp.pop %v720
        %v781 = vmul.f32 %v720, %v780
        %v782 = vsub.f32 1.0, %v781
        %v783 = vmul.f32 %v780, %v782
        %v784 = vadd.f32 %v780, %v783
        %vm785 = vweird.f32 %v720
        %vm786 = vweird.f32 %v780
        %vm787 = vmor %vm785, %vm786
        %v788 = vsel %vm787, %v780, %v784
        %v789 = vand.u32 2147483647, %v720
        %vm790 = vcmp.eq.f32.partialorder %v789, 8.507059e+37
        %v791 = vand.u32 %v720, 2147483648
        %v792 = vor.u32 1.1754944e-38, %v791
        %v793 = vsel %vm790, %v792, %v788
        %v794 = vmul.f32 1.0, %v793
        %v795 = vrcp.pop %v721
        %v796 = vmul.f32 %v721, %v795
        %v797 = vsub.f32 1.0, %v796
        %v798 = vmul.f32 %v795, %v797
        %v799 = vadd.f32 %v795, %v798
        %vm800 = vweird.f32 %v721
        %vm801 = vweird.f32 %v795
        %vm802 = vmor %vm800, %vm801
        %v803 = vsel %vm802, %v795, %v799
        %v804 = vand.u32 2147483647, %v721
        %vm805 = vcmp.eq.f32.partialorder %v804, 8.507059e+37
        %v806 = vand.u32 %v721, 2147483648
        %v807 = vor.u32 1.1754944e-38, %v806
        %v808 = vsel %vm805, %v807, %v803
        %v809 = vmul.f32 1.0, %v808
        %v810 = vrcp.pop %v722
        %v811 = vmul.f32 %v722, %v810
        %v812 = vsub.f32 1.0, %v811
        %v813 = vmul.f32 %v810, %v812
        %v814 = vadd.f32 %v810, %v813
        %vm815 = vweird.f32 %v722
        %vm816 = vweird.f32 %v810
        %vm817 = vmor %vm815, %vm816
        %v818 = vsel %vm817, %v810, %v814
        %v819 = vand.u32 2147483647, %v722
        %vm820 = vcmp.eq.f32.partialorder %v819, 8.507059e+37
        %v821 = vand.u32 %v722, 2147483648
        %v822 = vor.u32 1.1754944e-38, %v821
        %v823 = vsel %vm820, %v822, %v818
        %v824 = vmul.f32 1.0, %v823
        %v825 = vrcp.pop %v723
        %v826 = vmul.f32 %v723, %v825
        %v827 = vsub.f32 1.0, %v826
        %v828 = vmul.f32 %v825, %v827
        %v829 = vadd.f32 %v825, %v828
        %vm830 = vweird.f32 %v723
        %vm831 = vweird.f32 %v825
        %vm832 = vmor %vm830, %vm831
        %v833 = vsel %vm832, %v825, %v829
        %v834 = vand.u32 2147483647, %v723
        %vm835 = vcmp.eq.f32.partialorder %v834, 8.507059e+37
        %v836 = vand.u32 %v723, 2147483648
        %v837 = vor.u32 1.1754944e-38, %v836
        %v838 = vsel %vm835, %v837, %v833
        %v839 = vmul.f32 1.0, %v838
        %v840 = vrcp.pop %v724
        %v841 = vmul.f32 %v724, %v840
        %v842 = vsub.f32 1.0, %v841
        %v843 = vmul.f32 %v840, %v842
        %v844 = vadd.f32 %v840, %v843
        %vm845 = vweird.f32 %v724
        %vm846 = vweird.f32 %v840
        %vm847 = vmor %vm845, %vm846
        %v848 = vsel %vm847, %v840, %v844
        %v849 = vand.u32 2147483647, %v724
        %vm850 = vcmp.eq.f32.partialorder %v849, 8.507059e+37
        %v851 = vand.u32 %v724, 2147483648
        %v852 = vor.u32 1.1754944e-38, %v851
        %v853 = vsel %vm850, %v852, %v848
        %v854 = vmul.f32 1.0, %v853
        %v855 = vrcp.pop %v725
        %v856 = vmul.f32 %v725, %v855
        %v857 = vsub.f32 1.0, %v856
        %v858 = vmul.f32 %v855, %v857
        %v859 = vadd.f32 %v855, %v858
        %vm860 = vweird.f32 %v725
        %vm861 = vweird.f32 %v855
        %vm862 = vmor %vm860, %vm861
        %v863 = vsel %vm862, %v855, %v859
        %v864 = vand.u32 2147483647, %v725
        %vm865 = vcmp.eq.f32.partialorder %v864, 8.507059e+37
        %v866 = vand.u32 %v725, 2147483648
        %v867 = vor.u32 1.1754944e-38, %v866
        %v868 = vsel %vm865, %v867, %v863
        %v869 = vmul.f32 1.0, %v868
        %v870 = vrcp.pop %v726
        %v871 = vmul.f32 %v726, %v870
        %v872 = vsub.f32 1.0, %v871
        %v873 = vmul.f32 %v870, %v872
        %v874 = vadd.f32 %v870, %v873
        %vm875 = vweird.f32 %v726
        %vm876 = vweird.f32 %v870
        %vm877 = vmor %vm875, %vm876
        %v878 = vsel %vm877, %v870, %v874
        %v879 = vand.u32 2147483647, %v726
        %vm880 = vcmp.eq.f32.partialorder %v879, 8.507059e+37
        %v881 = vand.u32 %v726, 2147483648
        %v882 = vor.u32 1.1754944e-38, %v881
        %v883 = vsel %vm880, %v882, %v878
        %v884 = vmul.f32 1.0, %v883
        %v885 = vrcp.pop %v727
        %v886 = vmul.f32 %v727, %v885
        %v887 = vsub.f32 1.0, %v886
        %v888 = vmul.f32 %v885, %v887
        %v889 = vadd.f32 %v885, %v888
        %vm890 = vweird.f32 %v727
        %vm891 = vweird.f32 %v885
        %vm892 = vmor %vm890, %vm891
        %v893 = vsel %vm892, %v885, %v889
        %v894 = vand.u32 2147483647, %v727
        %vm895 = vcmp.eq.f32.partialorder %v894, 8.507059e+37
        %v896 = vand.u32 %v727, 2147483648
        %v897 = vor.u32 1.1754944e-38, %v896
        %v898 = vsel %vm895, %v897, %v893
        %v899 = vmul.f32 1.0, %v898
        %v900 = vrcp.pop %v728
        %v901 = vmul.f32 %v728, %v900
        %v902 = vsub.f32 1.0, %v901
        %v903 = vmul.f32 %v900, %v902
        %v904 = vadd.f32 %v900, %v903
        %vm905 = vweird.f32 %v728
        %vm906 = vweird.f32 %v900
        %vm907 = vmor %vm905, %vm906
        %v908 = vsel %vm907, %v900, %v904
        %v909 = vand.u32 2147483647, %v728
        %vm910 = vcmp.eq.f32.partialorder %v909, 8.507059e+37
        %v911 = vand.u32 %v728, 2147483648
        %v912 = vor.u32 1.1754944e-38, %v911
        %v913 = vsel %vm910, %v912, %v908
        %v914 = vmul.f32 1.0, %v913
        %v915 = vrcp.pop %v729
        %v916 = vmul.f32 %v729, %v915
        %v917 = vsub.f32 1.0, %v916
        %v918 = vmul.f32 %v915, %v917
        %v919 = vadd.f32 %v915, %v918
        %vm920 = vweird.f32 %v729
        %vm921 = vweird.f32 %v915
        %vm922 = vmor %vm920, %vm921
        %v923 = vsel %vm922, %v915, %v919
        %v924 = vand.u32 2147483647, %v729
        %vm925 = vcmp.eq.f32.partialorder %v924, 8.507059e+37
        %v926 = vand.u32 %v729, 2147483648
        %v927 = vor.u32 1.1754944e-38, %v926
        %v928 = vsel %vm925, %v927, %v923
        %v929 = vmul.f32 1.0, %v928
        %v930 = vrcp.pop %v730
        %v931 = vmul.f32 %v730, %v930
        %v932 = vsub.f32 1.0, %v931
        %v933 = vmul.f32 %v930, %v932
        %v934 = vadd.f32 %v930, %v933
        %vm935 = vweird.f32 %v730
        %vm936 = vweird.f32 %v930
        %vm937 = vmor %vm935, %vm936
        %v938 = vsel %vm937, %v930, %v934
        %v939 = vand.u32 2147483647, %v730
        %vm940 = vcmp.eq.f32.partialorder %v939, 8.507059e+37
        %v941 = vand.u32 %v730, 2147483648
        %v942 = vor.u32 1.1754944e-38, %v941
        %v943 = vsel %vm940, %v942, %v938
        %v944 = vmul.f32 1.0, %v943
        %v945 = vrcp.pop %v731
        %v946 = vmul.f32 %v731, %v945
        %v947 = vsub.f32 1.0, %v946
        %v948 = vmul.f32 %v945, %v947
        %v949 = vadd.f32 %v945, %v948
        %vm950 = vweird.f32 %v731
        %vm951 = vweird.f32 %v945
        %vm952 = vmor %vm950, %vm951
        %v953 = vsel %vm952, %v945, %v949
        %v954 = vand.u32 2147483647, %v731
        %vm955 = vcmp.eq.f32.partialorder %v954, 8.507059e+37
        %v956 = vand.u32 %v731, 2147483648
        %v957 = vor.u32 1.1754944e-38, %v956
        %v958 = vsel %vm955, %v957, %v953
        %v959 = vmul.f32 1.0, %v958
        %v960 = vrcp.pop %v732
        %v961 = vmul.f32 %v732, %v960
        %v962 = vsub.f32 1.0, %v961
        %v963 = vmul.f32 %v960, %v962
        %v964 = vadd.f32 %v960, %v963
        %vm965 = vweird.f32 %v732
        %vm966 = vweird.f32 %v960
        %vm967 = vmor %vm965, %vm966
        %v968 = vsel %vm967, %v960, %v964
        %v969 = vand.u32 2147483647, %v732
        %vm970 = vcmp.eq.f32.partialorder %v969, 8.507059e+37
        %v971 = vand.u32 %v732, 2147483648
        %v972 = vor.u32 1.1754944e-38, %v971
        %v973 = vsel %vm970, %v972, %v968
        %v974 = vmul.f32 1.0, %v973
        %v975 = vrcp.pop %v733
        %v976 = vmul.f32 %v733, %v975
        %v977 = vsub.f32 1.0, %v976
        %v978 = vmul.f32 %v975, %v977
        %v979 = vadd.f32 %v975, %v978
        %vm980 = vweird.f32 %v733
        %vm981 = vweird.f32 %v975
        %vm982 = vmor %vm980, %vm981
        %v983 = vsel %vm982, %v975, %v979
        %v984 = vand.u32 2147483647, %v733
        %vm985 = vcmp.eq.f32.partialorder %v984, 8.507059e+37
        %v986 = vand.u32 %v733, 2147483648
        %v987 = vor.u32 1.1754944e-38, %v986
        %v988 = vsel %vm985, %v987, %v983
        %v989 = vmul.f32 1.0, %v988
        %v990 = vrcp.pop %v734
        %v991 = vmul.f32 %v734, %v990
        %v992 = vsub.f32 1.0, %v991
        %v993 = vmul.f32 %v990, %v992
        %v994 = vadd.f32 %v990, %v993
        %vm995 = vweird.f32 %v734
        %vm996 = vweird.f32 %v990
        %vm997 = vmor %vm995, %vm996
        %v998 = vsel %vm997, %v990, %v994
        %v999 = vand.u32 2147483647, %v734
        %vm1000 = vcmp.eq.f32.partialorder %v999, 8.507059e+37
        %v1001 = vand.u32 %v734, 2147483648
        %v1002 = vor.u32 1.1754944e-38, %v1001
        %v1003 = vsel %vm1000, %v1002, %v998
        %v1004 = vmul.f32 1.0, %v1003
        %v1005 = vrcp.pop %v735
        %v1006 = vmul.f32 %v735, %v1005
        %v1007 = vsub.f32 1.0, %v1006
        %v1008 = vmul.f32 %v1005, %v1007
        %v1009 = vadd.f32 %v1005, %v1008
        %vm1010 = vweird.f32 %v735
        %vm1011 = vweird.f32 %v1005
        %vm1012 = vmor %vm1010, %vm1011
        %v1013 = vsel %vm1012, %v1005, %v1009
        %v1014 = vand.u32 2147483647, %v735
        %vm1015 = vcmp.eq.f32.partialorder %v1014, 8.507059e+37
        %v1016 = vand.u32 %v735, 2147483648
        %v1017 = vor.u32 1.1754944e-38, %v1016
        %v1018 = vsel %vm1015, %v1017, %v1013
        %v1019 = vmul.f32 1.0, %v1018
        %v1020 = vrcp.pop %v736
        %v1021 = vmul.f32 %v736, %v1020
        %v1022 = vsub.f32 1.0, %v1021
        %v1023 = vmul.f32 %v1020, %v1022
        %v1024 = vadd.f32 %v1020, %v1023
        %vm1025 = vweird.f32 %v736
        %vm1026 = vweird.f32 %v1020
        %vm1027 = vmor %vm1025, %vm1026
        %v1028 = vsel %vm1027, %v1020, %v1024
        %v1029 = vand.u32 2147483647, %v736
        %vm1030 = vcmp.eq.f32.partialorder %v1029, 8.507059e+37
        %v1031 = vand.u32 %v736, 2147483648
        %v1032 = vor.u32 1.1754944e-38, %v1031
        %v1033 = vsel %vm1030, %v1032, %v1028
        %v1034 = vmul.f32 1.0, %v1033
        %v1035 = vrcp.pop %v737
        %v1036 = vmul.f32 %v737, %v1035
        %v1037 = vsub.f32 1.0, %v1036
        %v1038 = vmul.f32 %v1035, %v1037
        %v1039 = vadd.f32 %v1035, %v1038
        %vm1040 = vweird.f32 %v737
        %vm1041 = vweird.f32 %v1035
        %vm1042 = vmor %vm1040, %vm1041
        %v1043 = vsel %vm1042, %v1035, %v1039
        %v1044 = vand.u32 2147483647, %v737
        %vm1045 = vcmp.eq.f32.partialorder %v1044, 8.507059e+37
        %v1046 = vand.u32 %v737, 2147483648
        %v1047 = vor.u32 1.1754944e-38, %v1046
        %v1048 = vsel %vm1045, %v1047, %v1043
        %v1049 = vmul.f32 1.0, %v1048
        %v1050 = vrcp.pop %v738
        %v1051 = vmul.f32 %v738, %v1050
        %v1052 = vsub.f32 1.0, %v1051
        %v1053 = vmul.f32 %v1050, %v1052
        %v1054 = vadd.f32 %v1050, %v1053
        %vm1055 = vweird.f32 %v738
        %vm1056 = vweird.f32 %v1050
        %vm1057 = vmor %vm1055, %vm1056
        %v1058 = vsel %vm1057, %v1050, %v1054
        %v1059 = vand.u32 2147483647, %v738
        %vm1060 = vcmp.eq.f32.partialorder %v1059, 8.507059e+37
        %v1061 = vand.u32 %v738, 2147483648
        %v1062 = vor.u32 1.1754944e-38, %v1061
        %v1063 = vsel %vm1060, %v1062, %v1058
        %v1064 = vmul.f32 1.0, %v1063
        %v1065 = vrcp.pop %v739
        %v1066 = vmul.f32 %v739, %v1065
        %v1067 = vsub.f32 1.0, %v1066
        %v1068 = vmul.f32 %v1065, %v1067
        %v1069 = vadd.f32 %v1065, %v1068
        %vm1070 = vweird.f32 %v739
        %vm1071 = vweird.f32 %v1065
        %vm1072 = vmor %vm1070, %vm1071
        %v1073 = vsel %vm1072, %v1065, %v1069
        %v1074 = vand.u32 2147483647, %v739
        %vm1075 = vcmp.eq.f32.partialorder %v1074, 8.507059e+37
        %v1076 = vand.u32 %v739, 2147483648
        %v1077 = vor.u32 1.1754944e-38, %v1076
        %v1078 = vsel %vm1075, %v1077, %v1073
        %v1079 = vmul.f32 1.0, %v1078
        %v1080 = vrcp.pop %v740
        %v1081 = vmul.f32 %v740, %v1080
        %v1082 = vsub.f32 1.0, %v1081
        %v1083 = vmul.f32 %v1080, %v1082
        %v1084 = vadd.f32 %v1080, %v1083
        %vm1085 = vweird.f32 %v740
        %vm1086 = vweird.f32 %v1080
        %vm1087 = vmor %vm1085, %vm1086
        %v1088 = vsel %vm1087, %v1080, %v1084
        %v1089 = vand.u32 2147483647, %v740
        %vm1090 = vcmp.eq.f32.partialorder %v1089, 8.507059e+37
        %v1091 = vand.u32 %v740, 2147483648
        %v1092 = vor.u32 1.1754944e-38, %v1091
        %v1093 = vsel %vm1090, %v1092, %v1088
        %v1094 = vmul.f32 1.0, %v1093
        %v1095 = vrcp.pop %v741
        %v1096 = vmul.f32 %v741, %v1095
        %v1097 = vsub.f32 1.0, %v1096
        %v1098 = vmul.f32 %v1095, %v1097
        %v1099 = vadd.f32 %v1095, %v1098
        %vm1100 = vweird.f32 %v741
        %vm1101 = vweird.f32 %v1095
        %vm1102 = vmor %vm1100, %vm1101
        %v1103 = vsel %vm1102, %v1095, %v1099
        %v1104 = vand.u32 2147483647, %v741
        %vm1105 = vcmp.eq.f32.partialorder %v1104, 8.507059e+37
        %v1106 = vand.u32 %v741, 2147483648
        %v1107 = vor.u32 1.1754944e-38, %v1106
        %v1108 = vsel %vm1105, %v1107, %v1103
        %v1109 = vmul.f32 1.0, %v1108
        %v1110 = vrcp.pop %v742
        %v1111 = vmul.f32 %v742, %v1110
        %v1112 = vsub.f32 1.0, %v1111
        %v1113 = vmul.f32 %v1110, %v1112
        %v1114 = vadd.f32 %v1110, %v1113
        %vm1115 = vweird.f32 %v742
        %vm1116 = vweird.f32 %v1110
        %vm1117 = vmor %vm1115, %vm1116
        %v1118 = vsel %vm1117, %v1110, %v1114
        %v1119 = vand.u32 2147483647, %v742
        %vm1120 = vcmp.eq.f32.partialorder %v1119, 8.507059e+37
        %v1121 = vand.u32 %v742, 2147483648
        %v1122 = vor.u32 1.1754944e-38, %v1121
        %v1123 = vsel %vm1120, %v1122, %v1118
        %v1124 = vmul.f32 1.0, %v1123
        %v1125 = vrcp.pop %v743
        %v1126 = vmul.f32 %v743, %v1125
        %v1127 = vsub.f32 1.0, %v1126
        %v1128 = vmul.f32 %v1125, %v1127
        %v1129 = vadd.f32 %v1125, %v1128
        %vm1130 = vweird.f32 %v743
        %vm1131 = vweird.f32 %v1125
        %vm1132 = vmor %vm1130, %vm1131
        %v1133 = vsel %vm1132, %v1125, %v1129
        %v1134 = vand.u32 2147483647, %v743
        %vm1135 = vcmp.eq.f32.partialorder %v1134, 8.507059e+37
        %v1136 = vand.u32 %v743, 2147483648
        %v1137 = vor.u32 1.1754944e-38, %v1136
        %v1138 = vsel %vm1135, %v1137, %v1133
        %v1139 = vmul.f32 1.0, %v1138
        %v1140 = vrcp.pop %v744
        %v1141 = vmul.f32 %v744, %v1140
        %v1142 = vsub.f32 1.0, %v1141
        %v1143 = vmul.f32 %v1140, %v1142
        %v1144 = vadd.f32 %v1140, %v1143
        %vm1145 = vweird.f32 %v744
        %vm1146 = vweird.f32 %v1140
        %vm1147 = vmor %vm1145, %vm1146
        %v1148 = vsel %vm1147, %v1140, %v1144
        %v1149 = vand.u32 2147483647, %v744
        %vm1150 = vcmp.eq.f32.partialorder %v1149, 8.507059e+37
        %v1151 = vand.u32 %v744, 2147483648
        %v1152 = vor.u32 1.1754944e-38, %v1151
        %v1153 = vsel %vm1150, %v1152, %v1148
        %v1154 = vmul.f32 1.0, %v1153
        %v1155 = vrcp.pop %v745
        %v1156 = vmul.f32 %v745, %v1155
        %v1157 = vsub.f32 1.0, %v1156
        %v1158 = vmul.f32 %v1155, %v1157
        %v1159 = vadd.f32 %v1155, %v1158
        %vm1160 = vweird.f32 %v745
        %vm1161 = vweird.f32 %v1155
        %vm1162 = vmor %vm1160, %vm1161
        %v1163 = vsel %vm1162, %v1155, %v1159
        %v1164 = vand.u32 2147483647, %v745
        %vm1165 = vcmp.eq.f32.partialorder %v1164, 8.507059e+37
        %v1166 = vand.u32 %v745, 2147483648
        %v1167 = vor.u32 1.1754944e-38, %v1166
        %v1168 = vsel %vm1165, %v1167, %v1163
        %v1169 = vmul.f32 1.0, %v1168
        %v1170 = vrcp.pop %v746
        %v1171 = vmul.f32 %v746, %v1170
        %v1172 = vsub.f32 1.0, %v1171
        %v1173 = vmul.f32 %v1170, %v1172
        %v1174 = vadd.f32 %v1170, %v1173
        %vm1175 = vweird.f32 %v746
        %vm1176 = vweird.f32 %v1170
        %vm1177 = vmor %vm1175, %vm1176
        %v1178 = vsel %vm1177, %v1170, %v1174
        %v1179 = vand.u32 2147483647, %v746
        %vm1180 = vcmp.eq.f32.partialorder %v1179, 8.507059e+37
        %v1181 = vand.u32 %v746, 2147483648
        %v1182 = vor.u32 1.1754944e-38, %v1181
        %v1183 = vsel %vm1180, %v1182, %v1178
        %v1184 = vmul.f32 1.0, %v1183
        %v1185 = vrcp.pop %v747
        %v1186 = vmul.f32 %v747, %v1185
        %v1187 = vsub.f32 1.0, %v1186
        %v1188 = vmul.f32 %v1185, %v1187
        %v1189 = vadd.f32 %v1185, %v1188
        %vm1190 = vweird.f32 %v747
        %vm1191 = vweird.f32 %v1185
        %vm1192 = vmor %vm1190, %vm1191
        %v1193 = vsel %vm1192, %v1185, %v1189
        %v1194 = vand.u32 2147483647, %v747
        %vm1195 = vcmp.eq.f32.partialorder %v1194, 8.507059e+37
        %v1196 = vand.u32 %v747, 2147483648
        %v1197 = vor.u32 1.1754944e-38, %v1196
        %v1198 = vsel %vm1195, %v1197, %v1193
        %v1199 = vmul.f32 1.0, %v1198
        %v1200 = vrcp.pop %v748
        %v1201 = vmul.f32 %v748, %v1200
        %v1202 = vsub.f32 1.0, %v1201
        %v1203 = vmul.f32 %v1200, %v1202
        %v1204 = vadd.f32 %v1200, %v1203
        %vm1205 = vweird.f32 %v748
        %vm1206 = vweird.f32 %v1200
        %vm1207 = vmor %vm1205, %vm1206
        %v1208 = vsel %vm1207, %v1200, %v1204
        %v1209 = vand.u32 2147483647, %v748
        %vm1210 = vcmp.eq.f32.partialorder %v1209, 8.507059e+37
        %v1211 = vand.u32 %v748, 2147483648
        %v1212 = vor.u32 1.1754944e-38, %v1211
        %v1213 = vsel %vm1210, %v1212, %v1208
        %v1214 = vmul.f32 1.0, %v1213
        %v1215 = vrcp.pop %v749
        %v1216 = vmul.f32 %v749, %v1215
        %v1217 = vsub.f32 1.0, %v1216
        %v1218 = vmul.f32 %v1215, %v1217
        %v1219 = vadd.f32 %v1215, %v1218
        %vm1220 = vweird.f32 %v749
        %vm1221 = vweird.f32 %v1215
        %vm1222 = vmor %vm1220, %vm1221
        %v1223 = vsel %vm1222, %v1215, %v1219
        %v1224 = vand.u32 2147483647, %v749
        %vm1225 = vcmp.eq.f32.partialorder %v1224, 8.507059e+37
        %v1226 = vand.u32 %v749, 2147483648
        %v1227 = vor.u32 1.1754944e-38, %v1226
        %v1228 = vsel %vm1225, %v1227, %v1223
        %v1229 = vmul.f32 1.0, %v1228
        %v1230 = vmul.f32 %v590, %v764
        %v1231 = vmul.f32 %v591, %v779
        %v1232 = vmul.f32 %v592, %v794
        %v1233 = vmul.f32 %v593, %v809
        %v1234 = vmul.f32 %v594, %v824
        %v1235 = vmul.f32 %v595, %v839
        %v1236 = vmul.f32 %v596, %v854
        %v1237 = vmul.f32 %v597, %v869
        %v1238 = vmul.f32 %v598, %v884
        %v1239 = vmul.f32 %v599, %v899
        %v1240 = vmul.f32 %v600, %v914
        %v1241 = vmul.f32 %v601, %v929
        %v1242 = vmul.f32 %v602, %v944
        %v1243 = vmul.f32 %v603, %v959
        %v1244 = vmul.f32 %v604, %v974
        %v1245 = vmul.f32 %v605, %v989
        %v1246 = vmul.f32 %v606, %v1004
        %v1247 = vmul.f32 %v607, %v1019
        %v1248 = vmul.f32 %v608, %v1034
        %v1249 = vmul.f32 %v609, %v1049
        %v1250 = vmul.f32 %v610, %v1064
        %v1251 = vmul.f32 %v611, %v1079
        %v1252 = vmul.f32 %v612, %v1094
        %v1253 = vmul.f32 %v613, %v1109
        %v1254 = vmul.f32 %v614, %v1124
        %v1255 = vmul.f32 %v615, %v1139
        %v1256 = vmul.f32 %v616, %v1154
        %v1257 = vmul.f32 %v617, %v1169
        %v1258 = vmul.f32 %v618, %v1184
        %v1259 = vmul.f32 %v619, %v1199
        %v1260 = vmul.f32 %v620, %v1214
        %v1261 = vmul.f32 %v621, %v1229
        %v1262 = vpack.c.bf16 %v1230, %v1230
        %v1263 = vpack.c.bf16 %v1231, %v1231
        %v1264 = vpack.c.bf16 %v1232, %v1232
        %v1265 = vpack.c.bf16 %v1233, %v1233
        %v1266 = vpack.c.bf16 %v1234, %v1234
        %v1267 = vpack.c.bf16 %v1235, %v1235
        %v1268 = vpack.c.bf16 %v1236, %v1236
        %v1269 = vpack.c.bf16 %v1237, %v1237
        %v1270 = vpack.c.bf16 %v1238, %v1238
        %v1271 = vpack.c.bf16 %v1239, %v1239
        %v1272 = vpack.c.bf16 %v1240, %v1240
        %v1273 = vpack.c.bf16 %v1241, %v1241
        %v1274 = vpack.c.bf16 %v1242, %v1242
        %v1275 = vpack.c.bf16 %v1243, %v1243
        %v1276 = vpack.c.bf16 %v1244, %v1244
        %v1277 = vpack.c.bf16 %v1245, %v1245
        %v1278 = vpack.c.bf16 %v1246, %v1246
        %v1279 = vpack.c.bf16 %v1247, %v1247
        %v1280 = vpack.c.bf16 %v1248, %v1248
        %v1281 = vpack.c.bf16 %v1249, %v1249
        %v1282 = vpack.c.bf16 %v1250, %v1250
        %v1283 = vpack.c.bf16 %v1251, %v1251
        %v1284 = vpack.c.bf16 %v1252, %v1252
        %v1285 = vpack.c.bf16 %v1253, %v1253
        %v1286 = vpack.c.bf16 %v1254, %v1254
        %v1287 = vpack.c.bf16 %v1255, %v1255
        %v1288 = vpack.c.bf16 %v1256, %v1256
        %v1289 = vpack.c.bf16 %v1257, %v1257
        %v1290 = vpack.c.bf16 %v1258, %v1258
        %v1291 = vpack.c.bf16 %v1259, %v1259
        %v1292 = vpack.c.bf16 %v1260, %v1260
        %v1293 = vpack.c.bf16 %v1261, %v1261
        %vm1294 = vcmask 257024
        %1295 = vst.msk [vmem:[%s219] sm:$0xf] %vm1294, %v1262
        %1296 = vst.msk [vmem:[%s219 + $0x4] sm:$0xf] %vm1294, %v1263
        %1297 = vst.msk [vmem:[%s219 + $0x8] sm:$0xf] %vm1294, %v1264
        %1298 = vst.msk [vmem:[%s219 + $0xc] sm:$0xf] %vm1294, %v1265
        %1299 = vst.msk [vmem:[%s219 + $0x10] sm:$0xf] %vm1294, %v1266
        %1300 = vst.msk [vmem:[%s219 + $0x14] sm:$0xf] %vm1294, %v1267
        %1301 = vst.msk [vmem:[%s219 + $0x18] sm:$0xf] %vm1294, %v1268
        %1302 = vst.msk [vmem:[%s219 + $0x1c] sm:$0xf] %vm1294, %v1269
        %1303 = vst.msk [vmem:[%s219 + $0x20] sm:$0xf] %vm1294, %v1270
        %1304 = vst.msk [vmem:[%s219 + $0x24] sm:$0xf] %vm1294, %v1271
        %1305 = vst.msk [vmem:[%s219 + $0x28] sm:$0xf] %vm1294, %v1272
        %1306 = vst.msk [vmem:[%s219 + $0x2c] sm:$0xf] %vm1294, %v1273
        %1307 = vst.msk [vmem:[%s219 + $0x30] sm:$0xf] %vm1294, %v1274
        %1308 = vst.msk [vmem:[%s219 + $0x34] sm:$0xf] %vm1294, %v1275
        %1309 = vst.msk [vmem:[%s219 + $0x38] sm:$0xf] %vm1294, %v1276
        %1310 = vst.msk [vmem:[%s219 + $0x3c] sm:$0xf] %vm1294, %v1277
        %1311 = vst.msk [vmem:[%s219 + $0x40] sm:$0xf] %vm1294, %v1278
        %1312 = vst.msk [vmem:[%s219 + $0x44] sm:$0xf] %vm1294, %v1279
        %1313 = vst.msk [vmem:[%s219 + $0x48] sm:$0xf] %vm1294, %v1280
        %1314 = vst.msk [vmem:[%s219 + $0x4c] sm:$0xf] %vm1294, %v1281
        %1315 = vst.msk [vmem:[%s219 + $0x50] sm:$0xf] %vm1294, %v1282
        %1316 = vst.msk [vmem:[%s219 + $0x54] sm:$0xf] %vm1294, %v1283
        %1317 = vst.msk [vmem:[%s219 + $0x58] sm:$0xf] %vm1294, %v1284
        %1318 = vst.msk [vmem:[%s219 + $0x5c] sm:$0xf] %vm1294, %v1285
        %1319 = vst.msk [vmem:[%s219 + $0x60] sm:$0xf] %vm1294, %v1286
        %1320 = vst.msk [vmem:[%s219 + $0x64] sm:$0xf] %vm1294, %v1287
        %1321 = vst.msk [vmem:[%s219 + $0x68] sm:$0xf] %vm1294, %v1288
        %1322 = vst.msk [vmem:[%s219 + $0x6c] sm:$0xf] %vm1294, %v1289
        %1323 = vst.msk [vmem:[%s219 + $0x70] sm:$0xf] %vm1294, %v1290
        %1324 = vst.msk [vmem:[%s219 + $0x74] sm:$0xf] %vm1294, %v1291
        %1325 = vst.msk [vmem:[%s219 + $0x78] sm:$0xf] %vm1294, %v1292
        %1326 = vst.msk [vmem:[%s219 + $0x7c] sm:$0xf] %vm1294, %v1293
        %p1327 = scmp.lt.s32.totalorder %s18, 1
        %s1328 = scalar_select %p1327, %s18, 1
        %s1329 = smul.addr %s1328, 32
        %s1330 = smul.addr %s1329, 4
        %s1331 = scalar_lea.vmem %s4, %s1330
        // Predicated region
        $region41: #{resnet_block3d_forward.5} parent=35 // pred_check
          %p1332 = pneg %p125
        $region42: #{resnet_block3d_forward.5} parent=35 // pred_check_branch
          %1334 = sbr.rel (%p1332) target = $region44
        $region43: #{resnet_block3d_forward.5} parent=35 // pred_region
          _
        $region44: #{resnet_block3d_forward.5} parent=35 // pred_fallthru
          _
      $region36: #{resnet_block3d_forward.5} parent=5 // pred_fallthru
        _
      %p1335 = scmp.le.s32.totalorder 2, %s13
      // Predicated region
      $region45: #{resnet_block3d_forward.5} parent=5 // pred_check
        %p1336 = pneg %p1335
      $region46: #{resnet_block3d_forward.5} parent=5 // pred_check_branch
        %1338 = sbr.rel (%p1336) target = $region48
      $region47: #{resnet_block3d_forward.5} parent=5 // pred_region
        %s1339 = ssub.s32 %s13, 2
        // Predicated region
        $region49: #{resnet_block3d_forward.5} parent=47 // pred_check
          %p1340 = pneg %p131
        $region50: #{resnet_block3d_forward.5} parent=47 // pred_check_branch
          %1342 = sbr.rel (%p1340) target = $region52
        $region51: #{resnet_block3d_forward.5} parent=47 // pred_region
          %p1343 = scmp.lt.s32.totalorder %s19, 1
          %s1344 = scalar_select %p1343, %s19, 1
          %s1345 = smul.addr %s1344, 32
          %s1346 = smul.addr %s1345, 4
          %s1347 = scalar_lea.vmem %s4, %s1346
        $region52: #{resnet_block3d_forward.5} parent=47 // pred_fallthru
          _
      $region48: #{resnet_block3d_forward.5} parent=5 // pred_fallthru
        _
    $region6: #{resnet_block3d_forward.5} parent=1 // loop_footer
      %s17 = sadd.s32 1, %s13
    $region7: #{resnet_block3d_forward.5} parent=1 // loop_footer_branch
      %12 = sbr.rel target = $region3
    $region8: #{resnet_block3d_forward.5} parent=1 // loop_exit
      _
    %1348 = vsyncpa [#allocation3], 1
    %s1349 = scalar_lea.sflag [#allocation3], 1
    %1350 = vsyncpa %s1349, 1

// kernel: resnet_block3d_forward.8
$region0: #{resnet_block3d_forward.8}
  #allocation0 [shape = 'u32[]', space=smem, size = 0x4, offset = 0x4, fixed_abs, tag = 'smem constant byte address 0x4 - core index']
  #allocation1 [shape = 'u32[72,128]{1,0:T(1,128)}', space=vmem, size = 0x9000, scoped, tag = 'internal scratch']
  %s0 = inlined_call_operand.vmem [shape: f32[2,256,64], index: 0, kind: input, shape index: {}]
  %s1 = inlined_call_operand.vmem [shape: f32[2,1,64], index: 1, kind: input, shape index: {}]
  %s2 = inlined_call_operand.vmem [shape: f32[1,64], index: 2, kind: input, shape index: {}]
  %s3 = inlined_call_operand.vmem [shape: f32[1,64], index: 3, kind: input, shape index: {}]
  %s4 = inlined_call_operand.vmem [shape: f32[64,64], index: 4, kind: input, shape index: {}]
  %s5 = inlined_call_operand.vmem [shape: bf16[2,256,64], index: 5, kind: output, shape index: {}]
  %s6 = sld [smem:[#allocation0]]
  $region53: #{resnet_block3d_forward.8} parent=0
    _
  %s8 = ssub.s32 1, %s6
  %s9 = scalar_select 0, %s8, %s6
  loop: start=0, step=1, limit=4
  $region2: #{resnet_block3d_forward.8} parent=0 // loop_pre_header
    _
  $region3: #{resnet_block3d_forward.8} parent=0 // loop_header
    %s11 = sphi 0, %s15
    %p12 = scmp.ge.s32.totalorder %s11, 4
    %s21 = sphi 0, %s23
    %s24 = sphi 0, %s21
    %s25 = sphi 0, %s24
    %s41 = sphi 0, %s25
    %s47 = sphi 0, %s49
    %s50 = sphi 0, %s47
    %s51 = sphi 0, %s50
    %s67 = sphi 0, %s51
    %s71 = sphi 0, %s71
    %s73 = sphi 0, %s71
    %s74 = sphi 0, %s73
    %s88 = sphi 0, %s74
    %s92 = sphi 0, %s92
    %s94 = sphi 0, %s92
    %s95 = sphi 0, %s94
    %s109 = sphi 0, %s95
    %s113 = sphi 0, %s113
    %s115 = sphi 0, %s113
    %s116 = sphi 0, %s115
    %s130 = sphi 0, %s116
    %s136 = sphi 0, %s138
    %s139 = sphi 0, %s136
    %s140 = sphi 0, %s139
    %s156 = sphi 0, %s140
  $region4: #{resnet_block3d_forward.8} parent=0 // loop_header_branch
    %14 = sbr.rel (%p12) target = $region8
  $region5: #{resnet_block3d_forward.8} parent=0 // loop_body
    %s16 = ssub.s32 %s11, 1
    %s17 = ssub.s32 %s11, 2
    %s18 = sadd.s32 %s11, 1
    %s19 = ssub.s32 %s11, %s18
    %p20 = scmp.eq.s32.totalorder %s19, 0
    %s22 = sadd.s32 %s21, 1
    %s23 = scalar_select %p20, %s21, %s22
    %p26 = pneg %p20
    %p27 = scmp.eq.s32.totalorder %s11, 1
    %p28 = por %p26, %p27
    %p29 = scmp.ne.s32.totalorder %s21, %s24
    %p30 = scmp.eq.s32.totalorder %s11, 0
    %p31 = por %p29, %p30
    %p32 = scmp.ne.s32.totalorder %s21, %s24
    %p33 = scmp.eq.s32.totalorder %s16, 1
    %p34 = por %p32, %p33
    %p35 = scmp.ne.s32.totalorder %s24, %s25
    %p36 = scmp.eq.s32.totalorder %s16, 0
    %p37 = por %p35, %p36
    %p38 = scmp.ne.s32.totalorder %s24, %s25
    %p39 = scmp.eq.s32.totalorder %s17, 1
    %p40 = por %p38, %p39
    %p42 = scmp.ne.s32.totalorder %s25, %s41
    %p43 = scmp.eq.s32.totalorder %s17, 0
    %p44 = por %p42, %p43
    %s45 = ssub.s32 %s11, %s18
    %p46 = scmp.eq.s32.totalorder %s45, 0
    %s48 = sadd.s32 %s47, 1
    %s49 = scalar_select %p46, %s47, %s48
    %p52 = pneg %p46
    %p53 = scmp.eq.s32.totalorder %s11, 1
    %p54 = por %p52, %p53
    %p55 = scmp.ne.s32.totalorder %s47, %s50
    %p56 = scmp.eq.s32.totalorder %s11, 0
    %p57 = por %p55, %p56
    %p58 = scmp.ne.s32.totalorder %s47, %s50
    %p59 = scmp.eq.s32.totalorder %s16, 1
    %p60 = por %p58, %p59
    %p61 = scmp.ne.s32.totalorder %s50, %s51
    %p62 = scmp.eq.s32.totalorder %s16, 0
    %p63 = por %p61, %p62
    %p64 = scmp.ne.s32.totalorder %s50, %s51
    %p65 = scmp.eq.s32.totalorder %s17, 1
    %p66 = por %p64, %p65
    %p68 = scmp.ne.s32.totalorder %s51, %s67
    %p69 = scmp.eq.s32.totalorder %s17, 0
    %p70 = por %p68, %p69
    %s72 = sadd.s32 %s71, 1
    %p75 = scmp.eq.s32.totalorder %s11, 1
    %p76 = scmp.ne.s32.totalorder %s71, %s73
    %p77 = scmp.eq.s32.totalorder %s11, 0
    %p78 = por %p76, %p77
    %p79 = scmp.ne.s32.totalorder %s71, %s73
    %p80 = scmp.eq.s32.totalorder %s16, 1
    %p81 = por %p79, %p80
    %p82 = scmp.ne.s32.totalorder %s73, %s74
    %p83 = scmp.eq.s32.totalorder %s16, 0
    %p84 = por %p82, %p83
    %p85 = scmp.ne.s32.totalorder %s73, %s74
    %p86 = scmp.eq.s32.totalorder %s17, 1
    %p87 = por %p85, %p86
    %p89 = scmp.ne.s32.totalorder %s74, %s88
    %p90 = scmp.eq.s32.totalorder %s17, 0
    %p91 = por %p89, %p90
    %s93 = sadd.s32 %s92, 1
    %p96 = scmp.eq.s32.totalorder %s11, 1
    %p97 = scmp.ne.s32.totalorder %s92, %s94
    %p98 = scmp.eq.s32.totalorder %s11, 0
    %p99 = por %p97, %p98
    %p100 = scmp.ne.s32.totalorder %s92, %s94
    %p101 = scmp.eq.s32.totalorder %s16, 1
    %p102 = por %p100, %p101
    %p103 = scmp.ne.s32.totalorder %s94, %s95
    %p104 = scmp.eq.s32.totalorder %s16, 0
    %p105 = por %p103, %p104
    %p106 = scmp.ne.s32.totalorder %s94, %s95
    %p107 = scmp.eq.s32.totalorder %s17, 1
    %p108 = por %p106, %p107
    %p110 = scmp.ne.s32.totalorder %s95, %s109
    %p111 = scmp.eq.s32.totalorder %s17, 0
    %p112 = por %p110, %p111
    %s114 = sadd.s32 %s113, 1
    %p117 = scmp.eq.s32.totalorder %s11, 1
    %p118 = scmp.ne.s32.totalorder %s113, %s115
    %p119 = scmp.eq.s32.totalorder %s11, 0
    %p120 = por %p118, %p119
    %p121 = scmp.ne.s32.totalorder %s113, %s115
    %p122 = scmp.eq.s32.totalorder %s16, 1
    %p123 = por %p121, %p122
    %p124 = scmp.ne.s32.totalorder %s115, %s116
    %p125 = scmp.eq.s32.totalorder %s16, 0
    %p126 = por %p124, %p125
    %p127 = scmp.ne.s32.totalorder %s115, %s116
    %p128 = scmp.eq.s32.totalorder %s17, 1
    %p129 = por %p127, %p128
    %p131 = scmp.ne.s32.totalorder %s116, %s130
    %p132 = scmp.eq.s32.totalorder %s17, 0
    %p133 = por %p131, %p132
    %s134 = ssub.s32 %s11, %s18
    %p135 = scmp.eq.s32.totalorder %s134, 0
    %s137 = sadd.s32 %s136, 1
    %s138 = scalar_select %p135, %s136, %s137
    %p141 = pneg %p135
    %p142 = scmp.eq.s32.totalorder %s11, 1
    %p143 = por %p141, %p142
    %p144 = scmp.ne.s32.totalorder %s136, %s139
    %p145 = scmp.eq.s32.totalorder %s11, 0
    %p146 = por %p144, %p145
    %p147 = scmp.ne.s32.totalorder %s136, %s139
    %p148 = scmp.eq.s32.totalorder %s16, 1
    %p149 = por %p147, %p148
    %p150 = scmp.ne.s32.totalorder %s139, %s140
    %p151 = scmp.eq.s32.totalorder %s16, 0
    %p152 = por %p150, %p151
    %p153 = scmp.ne.s32.totalorder %s139, %s140
    %p154 = scmp.eq.s32.totalorder %s17, 1
    %p155 = por %p153, %p154
    %p157 = scmp.ne.s32.totalorder %s140, %s156
    %p158 = scmp.eq.s32.totalorder %s17, 0
    %p159 = por %p157, %p158
    %p160 = scmp.le.s32.totalorder 1, %s11
    %p161 = scmp.lt.s32.totalorder %s11, 3
    %p162 = pnand %p160, %p161
    %p163 = pneg %p162
    // Predicated region
    $region9: #{resnet_block3d_forward.8} parent=5 // pred_check
      _
    $region10: #{resnet_block3d_forward.8} parent=5 // pred_check_branch
      %165 = sbr.rel (%p162) target = $region12
    $region11: #{resnet_block3d_forward.8} parent=5 // pred_region
      %s166 = ssub.s32 %s11, 1
      // Predicated region
      $region13: #{resnet_block3d_forward.8} parent=11 // pred_check
        %p167 = pneg %p84
      $region14: #{resnet_block3d_forward.8} parent=11 // pred_check_branch
        %169 = sbr.rel (%p167) target = $region16
      $region15: #{resnet_block3d_forward.8} parent=11 // pred_region
        _
      $region16: #{resnet_block3d_forward.8} parent=11 // pred_fallthru
        _
      // Predicated region
      $region17: #{resnet_block3d_forward.8} parent=11 // pred_check
        %p170 = pneg %p105
      $region18: #{resnet_block3d_forward.8} parent=11 // pred_check_branch
        %172 = sbr.rel (%p170) target = $region20
      $region19: #{resnet_block3d_forward.8} parent=11 // pred_region
        _
      $region20: #{resnet_block3d_forward.8} parent=11 // pred_fallthru
        _
      // Predicated region
      $region21: #{resnet_block3d_forward.8} parent=11 // pred_check
        %p173 = pneg %p126
      $region22: #{resnet_block3d_forward.8} parent=11 // pred_check_branch
        %175 = sbr.rel (%p173) target = $region24
      $region23: #{resnet_block3d_forward.8} parent=11 // pred_region
        _
      $region24: #{resnet_block3d_forward.8} parent=11 // pred_fallthru
        _
    $region12: #{resnet_block3d_forward.8} parent=5 // pred_fallthru
      _
    %p176 = scmp.lt.s32.totalorder %s11, 2
    // Predicated region
    $region25: #{resnet_block3d_forward.8} parent=5 // pred_check
      %p177 = pneg %p176
    $region26: #{resnet_block3d_forward.8} parent=5 // pred_check_branch
      %179 = sbr.rel (%p177) target = $region28
    $region27: #{resnet_block3d_forward.8} parent=5 // pred_region
      // Predicated region
      $region29: #{resnet_block3d_forward.8} parent=27 // pred_check
        %p180 = pneg %p31
      $region30: #{resnet_block3d_forward.8} parent=27 // pred_check_branch
        %182 = sbr.rel (%p180) target = $region32
      $region31: #{resnet_block3d_forward.8} parent=27 // pred_region
        %p183 = scmp.lt.s32.totalorder %s11, 1
        %s184 = scalar_select %p183, %s11, 1
        %s185 = smul.addr %s184, 32
        %s186 = smul.addr %s185, 8
        %s187 = scalar_lea.vmem %s0, %s186
      $region32: #{resnet_block3d_forward.8} parent=27 // pred_fallthru
        _
      // Predicated region
      $region33: #{resnet_block3d_forward.8} parent=27 // pred_check
        %p188 = pneg %p57
      $region34: #{resnet_block3d_forward.8} parent=27 // pred_check_branch
        %190 = sbr.rel (%p188) target = $region36
      $region35: #{resnet_block3d_forward.8} parent=27 // pred_region
        %p191 = scmp.lt.s32.totalorder %s11, 1
        %s192 = scalar_select %p191, %s11, 1
        %s193 = scalar_lea.vmem %s1, %s192
      $region36: #{resnet_block3d_forward.8} parent=27 // pred_fallthru
        _
    $region28: #{resnet_block3d_forward.8} parent=5 // pred_fallthru
      _
    %p194 = scmp.le.s32.totalorder 1, %s11
    %p195 = scmp.lt.s32.totalorder %s11, 3
    %p196 = pnand %p194, %p195
    %p197 = pneg %p196
    // Predicated region
    $region37: #{resnet_block3d_forward.8} parent=5 // pred_check
      _
    $region38: #{resnet_block3d_forward.8} parent=5 // pred_check_branch
      %199 = sbr.rel (%p196) target = $region40
    $region39: #{resnet_block3d_forward.8} parent=5 // pred_region
      %s200 = ssub.s32 %s11, 1
      %p201 = scmp.lt.s32.totalorder %s16, 1
      %s202 = scalar_select %p201, %s16, 1
      %s203 = smul.addr %s202, 32
      %s204 = smul.addr %s203, 8
      %s205 = scalar_lea.vmem %s0, %s204
      %p206 = pneg %p37
      %p207 = pneg %p34
      %p208 = scmp.lt.s32.totalorder %s16, 1
      %s209 = scalar_select %p208, %s16, 1
      %s210 = scalar_lea.vmem %s1, %s209
      %p211 = pneg %p63
      %p212 = pneg %p60
      %p213 = pneg %p84
      %p214 = pneg %p81
      %p215 = pneg %p105
      %p216 = pneg %p102
      %p217 = pneg %p126
      %p218 = pneg %p123
      %p219 = pneg %p152
      %p220 = pneg %p149
      %p221 = scmp.lt.s32.totalorder %s16, 1
      %s222 = scalar_select %p221, %s16, 1
      %s223 = smul.addr %s222, 32
      %s224 = smul.addr %s223, 4
      %s225 = scalar_lea.vmem %s5, %s224
      %p226 = scmp.lt.s32.totalorder %s16, 1
      %s227 = scalar_select %p226, %s16, 1
      %s228 = smul.addr %s227, 32
      %s229 = smul.addr %s228, 8
      %s230 = scalar_lea.vmem %s0, %s229
      %p231 = scmp.lt.s32.totalorder %s16, 1
      %s232 = scalar_select %p231, %s16, 1
      %s233 = scalar_lea.vmem %s1, %s232
      %p234 = scmp.lt.s32.totalorder %s16, 1
      %s235 = scalar_select %p234, %s16, 1
      %s236 = smul.addr %s235, 32
      %s237 = smul.addr %s236, 4
      %s238 = scalar_lea.vmem %s5, %s237
      %v239 = vld [vmem:[%s230] sm:$0xff]
      %v240 = vld [vmem:[%s230 + $0x8] sm:$0xff]
      %v241 = vld [vmem:[%s230 + $0x10] sm:$0xff]
      %v242 = vld [vmem:[%s230 + $0x18] sm:$0xff]
      %v243 = vld [vmem:[%s230 + $0x20] sm:$0xff]
      %v244 = vld [vmem:[%s230 + $0x28] sm:$0xff]
      %v245 = vld [vmem:[%s230 + $0x30] sm:$0xff]
      %v246 = vld [vmem:[%s230 + $0x38] sm:$0xff]
      %v247 = vld [vmem:[%s230 + $0x40] sm:$0xff]
      %v248 = vld [vmem:[%s230 + $0x48] sm:$0xff]
      %v249 = vld [vmem:[%s230 + $0x50] sm:$0xff]
      %v250 = vld [vmem:[%s230 + $0x58] sm:$0xff]
      %v251 = vld [vmem:[%s230 + $0x60] sm:$0xff]
      %v252 = vld [vmem:[%s230 + $0x68] sm:$0xff]
      %v253 = vld [vmem:[%s230 + $0x70] sm:$0xff]
      %v254 = vld [vmem:[%s230 + $0x78] sm:$0xff]
      %v255 = vld [vmem:[%s230 + $0x80] sm:$0xff]
      %v256 = vld [vmem:[%s230 + $0x88] sm:$0xff]
      %v257 = vld [vmem:[%s230 + $0x90] sm:$0xff]
      %v258 = vld [vmem:[%s230 + $0x98] sm:$0xff]
      %v259 = vld [vmem:[%s230 + $0xa0] sm:$0xff]
      %v260 = vld [vmem:[%s230 + $0xa8] sm:$0xff]
      %v261 = vld [vmem:[%s230 + $0xb0] sm:$0xff]
      %v262 = vld [vmem:[%s230 + $0xb8] sm:$0xff]
      %v263 = vld [vmem:[%s230 + $0xc0] sm:$0xff]
      %v264 = vld [vmem:[%s230 + $0xc8] sm:$0xff]
      %v265 = vld [vmem:[%s230 + $0xd0] sm:$0xff]
      %v266 = vld [vmem:[%s230 + $0xd8] sm:$0xff]
      %v267 = vld [vmem:[%s230 + $0xe0] sm:$0xff]
      %v268 = vld [vmem:[%s230 + $0xe8] sm:$0xff]
      %v269 = vld [vmem:[%s230 + $0xf0] sm:$0xff]
      %v270 = vld [vmem:[%s230 + $0xf8] sm:$0xff]
      %v271 = vld [vmem:[%s233] sm:$0x1]
      %v273 = vperm.slane %v271, 0
      %v275 = vadd.f32 %v239, %v273
      %v276 = vadd.f32 %v240, %v273
      %v277 = vadd.f32 %v241, %v273
      %v278 = vadd.f32 %v242, %v273
      %v279 = vadd.f32 %v243, %v273
      %v280 = vadd.f32 %v244, %v273
      %v281 = vadd.f32 %v245, %v273
      %v282 = vadd.f32 %v246, %v273
      %v283 = vadd.f32 %v247, %v273
      %v284 = vadd.f32 %v248, %v273
      %v285 = vadd.f32 %v249, %v273
      %v286 = vadd.f32 %v250, %v273
      %v287 = vadd.f32 %v251, %v273
      %v288 = vadd.f32 %v252, %v273
      %v289 = vadd.f32 %v253, %v273
      %v290 = vadd.f32 %v254, %v273
      %v291 = vadd.f32 %v255, %v273
      %v292 = vadd.f32 %v256, %v273
      %v293 = vadd.f32 %v257, %v273
      %v294 = vadd.f32 %v258, %v273
      %v295 = vadd.f32 %v259, %v273
      %v296 = vadd.f32 %v260, %v273
      %v297 = vadd.f32 %v261, %v273
      %v298 = vadd.f32 %v262, %v273
      %v299 = vadd.f32 %v263, %v273
      %v300 = vadd.f32 %v264, %v273
      %v301 = vadd.f32 %v265, %v273
      %v302 = vadd.f32 %v266, %v273
      %v303 = vadd.f32 %v267, %v273
      %v304 = vadd.f32 %v268, %v273
      %v305 = vadd.f32 %v269, %v273
      %v306 = vadd.f32 %v270, %v273
      %vm307 = vcmask 523264
      %v308 = vsel %vm307, %v275, 0.0
      %v309 = vsel %vm307, %v276, 0.0
      %v310 = vadd.f32 %v308, %v309
      %v311 = vsel %vm307, %v277, 0.0
      %v312 = vadd.f32 %v310, %v311
      %v313 = vsel %vm307, %v278, 0.0
      %v314 = vadd.f32 %v312, %v313
      %v315 = vsel %vm307, %v279, 0.0
      %v316 = vadd.f32 %v314, %v315
      %v317 = vsel %vm307, %v280, 0.0
      %v318 = vadd.f32 %v316, %v317
      %v319 = vsel %vm307, %v281, 0.0
      %v320 = vadd.f32 %v318, %v319
      %v321 = vsel %vm307, %v282, 0.0
      %v322 = vadd.f32 %v320, %v321
      %v323 = vsel %vm307, %v283, 0.0
      %v324 = vadd.f32 %v322, %v323
      %v325 = vsel %vm307, %v284, 0.0
      %v326 = vadd.f32 %v324, %v325
      %v327 = vsel %vm307, %v285, 0.0
      %v328 = vadd.f32 %v326, %v327
      %v329 = vsel %vm307, %v286, 0.0
      %v330 = vadd.f32 %v328, %v329
      %v331 = vsel %vm307, %v287, 0.0
      %v332 = vadd.f32 %v330, %v331
      %v333 = vsel %vm307, %v288, 0.0
      %v334 = vadd.f32 %v332, %v333
      %v335 = vsel %vm307, %v289, 0.0
      %v336 = vadd.f32 %v334, %v335
      %v337 = vsel %vm307, %v290, 0.0
      %v338 = vadd.f32 %v336, %v337
      %v339 = vsel %vm307, %v291, 0.0
      %v340 = vadd.f32 %v338, %v339
      %v341 = vsel %vm307, %v292, 0.0
      %v342 = vadd.f32 %v340, %v341
      %v343 = vsel %vm307, %v293, 0.0
      %v344 = vadd.f32 %v342, %v343
      %v345 = vsel %vm307, %v294, 0.0
      %v346 = vadd.f32 %v344, %v345
      %v347 = vsel %vm307, %v295, 0.0
      %v348 = vadd.f32 %v346, %v347
      %v349 = vsel %vm307, %v296, 0.0
      %v350 = vadd.f32 %v348, %v349
      %v351 = vsel %vm307, %v297, 0.0
      %v352 = vadd.f32 %v350, %v351
      %v353 = vsel %vm307, %v298, 0.0
      %v354 = vadd.f32 %v352, %v353
      %v355 = vsel %vm307, %v299, 0.0
      %v356 = vadd.f32 %v354, %v355
      %v357 = vsel %vm307, %v300, 0.0
      %v358 = vadd.f32 %v356, %v357
      %v359 = vsel %vm307, %v301, 0.0
      %v360 = vadd.f32 %v358, %v359
      %v361 = vsel %vm307, %v302, 0.0
      %v362 = vadd.f32 %v360, %v361
      %v363 = vsel %vm307, %v303, 0.0
      %v364 = vadd.f32 %v362, %v363
      %v365 = vsel %vm307, %v304, 0.0
      %v366 = vadd.f32 %v364, %v365
      %v367 = vsel %vm307, %v305, 0.0
      %v368 = vadd.f32 %v366, %v367
      %v369 = vsel %vm307, %v306, 0.0
      %v370 = vadd.f32 %v368, %v369
      %v371 = vrot.slane %v370, 4
      %v372 = vadd.f32 %v370, %v371
      %v373 = vrot.slane %v372, 2
      %v374 = vadd.f32 %v372, %v373
      %v375 = vrot.slane %v374, 1
      %v376 = vadd.f32 %v374, %v375
      %v377 = vld [vmem:[%s4] sm:$0xff]
      %v378 = vld [vmem:[%s4 + $0x8] sm:$0xff]
      %v379 = vld [vmem:[%s4 + $0x10] sm:$0xff]
      %v380 = vld [vmem:[%s4 + $0x18] sm:$0xff]
      %v381 = vld [vmem:[%s4 + $0x20] sm:$0xff]
      %v382 = vld [vmem:[%s4 + $0x28] sm:$0xff]
      %v383 = vld [vmem:[%s4 + $0x30] sm:$0xff]
      %v384 = vld [vmem:[%s4 + $0x38] sm:$0xff]
      %v386 = vsel %vm307, %v376, 0
      %388 = vmatpush.msra.mxu0 0.0
      %389 = vmatpush.msra.mxu0 0.0
      %390 = vmatpush.msra.mxu0 0.0
      %391 = vmatpush.msra.mxu0 0.0
      %392 = vmatpush.msra.mxu0 0.0
      %393 = vmatpush.msra.mxu0 0.0
      %394 = vmatpush.msra.mxu0 0.0
      %395 = vmatpush.msra.mxu0 0.0
      %396 = vmatpush.msra.mxu0 %v384
      %397 = vmatpush.msra.mxu0 %v383
      %398 = vmatpush.msra.mxu0 %v382
      %399 = vmatpush.msra.mxu0 %v381
      %400 = vmatpush.msra.mxu0 %v380
      %401 = vmatpush.msra.mxu0 %v379
      %402 = vmatpush.msra.mxu0 %v378
      %403 = vmatpush.msra.mxu0 %v377
      %404 = vmatmul.f32.gmra.mxu0 %v386
      %v405 = vpop.f32.mrf.mxu0
      %v406 = vadd.f32 0.0, %v405
      %407 = vdwg.mxu0
      %v408 = vperm.slane %v406, 0
      %v409 = vsub.f32 %v275, %v408
      %v410 = vsub.f32 %v276, %v408
      %v411 = vsub.f32 %v277, %v408
      %v412 = vsub.f32 %v278, %v408
      %v413 = vsub.f32 %v279, %v408
      %v414 = vsub.f32 %v280, %v408
      %v415 = vsub.f32 %v281, %v408
      %v416 = vsub.f32 %v282, %v408
      %v417 = vsub.f32 %v283, %v408
      %v418 = vsub.f32 %v284, %v408
      %v419 = vsub.f32 %v285, %v408
      %v420 = vsub.f32 %v286, %v408
      %v421 = vsub.f32 %v287, %v408
      %v422 = vsub.f32 %v288, %v408
      %v423 = vsub.f32 %v289, %v408
      %v424 = vsub.f32 %v290, %v408
      %v425 = vsub.f32 %v291, %v408
      %v426 = vsub.f32 %v292, %v408
      %v427 = vsub.f32 %v293, %v408
      %v428 = vsub.f32 %v294, %v408
      %v429 = vsub.f32 %v295, %v408
      %v430 = vsub.f32 %v296, %v408
      %v431 = vsub.f32 %v297, %v408
      %v432 = vsub.f32 %v298, %v408
      %v433 = vsub.f32 %v299, %v408
      %v434 = vsub.f32 %v300, %v408
      %v435 = vsub.f32 %v301, %v408
      %v436 = vsub.f32 %v302, %v408
      %v437 = vsub.f32 %v303, %v408
      %v438 = vsub.f32 %v304, %v408
      %v439 = vsub.f32 %v305, %v408
      %v440 = vsub.f32 %v306, %v408
      %v441 = vmul.f32 %v409, %v409
      %v442 = vmul.f32 %v410, %v410
      %v443 = vmul.f32 %v411, %v411
      %v444 = vmul.f32 %v412, %v412
      %v445 = vmul.f32 %v413, %v413
      %v446 = vmul.f32 %v414, %v414
      %v447 = vmul.f32 %v415, %v415
      %v448 = vmul.f32 %v416, %v416
      %v449 = vmul.f32 %v417, %v417
      %v450 = vmul.f32 %v418, %v418
      %v451 = vmul.f32 %v419, %v419
      %v452 = vmul.f32 %v420, %v420
      %v453 = vmul.f32 %v421, %v421
      %v454 = vmul.f32 %v422, %v422
      %v455 = vmul.f32 %v423, %v423
      %v456 = vmul.f32 %v424, %v424
      %v457 = vmul.f32 %v425, %v425
      %v458 = vmul.f32 %v426, %v426
      %v459 = vmul.f32 %v427, %v427
      %v460 = vmul.f32 %v428, %v428
      %v461 = vmul.f32 %v429, %v429
      %v462 = vmul.f32 %v430, %v430
      %v463 = vmul.f32 %v431, %v431
      %v464 = vmul.f32 %v432, %v432
      %v465 = vmul.f32 %v433, %v433
      %v466 = vmul.f32 %v434, %v434
      %v467 = vmul.f32 %v435, %v435
      %v468 = vmul.f32 %v436, %v436
      %v469 = vmul.f32 %v437, %v437
      %v470 = vmul.f32 %v438, %v438
      %v471 = vmul.f32 %v439, %v439
      %v472 = vmul.f32 %v440, %v440
      %v473 = vsel %vm307, %v441, 0.0
      %v474 = vsel %vm307, %v442, 0.0
      %v475 = vadd.f32 %v473, %v474
      %v476 = vsel %vm307, %v443, 0.0
      %v477 = vadd.f32 %v475, %v476
      %v478 = vsel %vm307, %v444, 0.0
      %v479 = vadd.f32 %v477, %v478
      %v480 = vsel %vm307, %v445, 0.0
      %v481 = vadd.f32 %v479, %v480
      %v482 = vsel %vm307, %v446, 0.0
      %v483 = vadd.f32 %v481, %v482
      %v484 = vsel %vm307, %v447, 0.0
      %v485 = vadd.f32 %v483, %v484
      %v486 = vsel %vm307, %v448, 0.0
      %v487 = vadd.f32 %v485, %v486
      %v488 = vsel %vm307, %v449, 0.0
      %v489 = vadd.f32 %v487, %v488
      %v490 = vsel %vm307, %v450, 0.0
      %v491 = vadd.f32 %v489, %v490
      %v492 = vsel %vm307, %v451, 0.0
      %v493 = vadd.f32 %v491, %v492
      %v494 = vsel %vm307, %v452, 0.0
      %v495 = vadd.f32 %v493, %v494
      %v496 = vsel %vm307, %v453, 0.0
      %v497 = vadd.f32 %v495, %v496
      %v498 = vsel %vm307, %v454, 0.0
      %v499 = vadd.f32 %v497, %v498
      %v500 = vsel %vm307, %v455, 0.0
      %v501 = vadd.f32 %v499, %v500
      %v502 = vsel %vm307, %v456, 0.0
      %v503 = vadd.f32 %v501, %v502
      %v504 = vsel %vm307, %v457, 0.0
      %v505 = vadd.f32 %v503, %v504
      %v506 = vsel %vm307, %v458, 0.0
      %v507 = vadd.f32 %v505, %v506
      %v508 = vsel %vm307, %v459, 0.0
      %v509 = vadd.f32 %v507, %v508
      %v510 = vsel %vm307, %v460, 0.0
      %v511 = vadd.f32 %v509, %v510
      %v512 = vsel %vm307, %v461, 0.0
      %v513 = vadd.f32 %v511, %v512
      %v514 = vsel %vm307, %v462, 0.0
      %v515 = vadd.f32 %v513, %v514
      %v516 = vsel %vm307, %v463, 0.0
      %v517 = vadd.f32 %v515, %v516
      %v518 = vsel %vm307, %v464, 0.0
      %v519 = vadd.f32 %v517, %v518
      %v520 = vsel %vm307, %v465, 0.0
      %v521 = vadd.f32 %v519, %v520
      %v522 = vsel %vm307, %v466, 0.0
      %v523 = vadd.f32 %v521, %v522
      %v524 = vsel %vm307, %v467, 0.0
      %v525 = vadd.f32 %v523, %v524
      %v526 = vsel %vm307, %v468, 0.0
      %v527 = vadd.f32 %v525, %v526
      %v528 = vsel %vm307, %v469, 0.0
      %v529 = vadd.f32 %v527, %v528
      %v530 = vsel %vm307, %v470, 0.0
      %v531 = vadd.f32 %v529, %v530
      %v532 = vsel %vm307, %v471, 0.0
      %v533 = vadd.f32 %v531, %v532
      %v534 = vsel %vm307, %v472, 0.0
      %v535 = vadd.f32 %v533, %v534
      %v536 = vrot.slane %v535, 4
      %v537 = vadd.f32 %v535, %v536
      %v538 = vrot.slane %v537, 2
      %v539 = vadd.f32 %v537, %v538
      %v540 = vrot.slane %v539, 1
      %v541 = vadd.f32 %v539, %v540
      %v543 = vsel %vm307, %v541, 0
      %545 = vmatpush.msra.mxu0 0.0
      %546 = vmatpush.msra.mxu0 0.0
      %547 = vmatpush.msra.mxu0 0.0
      %548 = vmatpush.msra.mxu0 0.0
      %549 = vmatpush.msra.mxu0 0.0
      %550 = vmatpush.msra.mxu0 0.0
      %551 = vmatpush.msra.mxu0 0.0
      %552 = vmatpush.msra.mxu0 0.0
      %553 = vmatpush.msra.mxu0 %v384
      %554 = vmatpush.msra.mxu0 %v383
      %555 = vmatpush.msra.mxu0 %v382
      %556 = vmatpush.msra.mxu0 %v381
      %557 = vmatpush.msra.mxu0 %v380
      %558 = vmatpush.msra.mxu0 %v379
      %559 = vmatpush.msra.mxu0 %v378
      %560 = vmatpush.msra.mxu0 %v377
      %561 = vmatmul.f32.gmra.mxu0 %v543
      %v562 = vpop.f32.mrf.mxu0
      %v563 = vadd.f32 0.0, %v562
      %564 = vdwg.mxu0
      %v565 = vadd.f32 %v563, 1e-05
      %v566 = vrsqrt.pop %v565
      %v567 = vmul.f32 %v566, %v565
      %v568 = vmul.f32 %v567, %v566
      %v569 = vmul.f32 0.5, %v568
      %v570 = vsub.f32 1.5, %v569
      %v571 = vmul.f32 %v566, %v570
      %vm572 = vweird.f32 %v565
      %vm573 = vweird.f32 %v566
      %vm574 = vmor %vm572, %vm573
      %v575 = vsel %vm574, %v566, %v571
      %v576 = vperm.slane %v575, 0
      %v577 = vmul.f32 %v409, %v576
      %v578 = vmul.f32 %v410, %v576
      %v579 = vmul.f32 %v411, %v576
      %v580 = vmul.f32 %v412, %v576
      %v581 = vmul.f32 %v413, %v576
      %v582 = vmul.f32 %v414, %v576
      %v583 = vmul.f32 %v415, %v576
      %v584 = vmul.f32 %v416, %v576
      %v585 = vmul.f32 %v417, %v576
      %v586 = vmul.f32 %v418, %v576
      %v587 = vmul.f32 %v419, %v576
      %v588 = vmul.f32 %v420, %v576
      %v589 = vmul.f32 %v421, %v576
      %v590 = vmul.f32 %v422, %v576
      %v591 = vmul.f32 %v423, %v576
      %v592 = vmul.f32 %v424, %v576
      %v593 = vmul.f32 %v425, %v576
      %v594 = vmul.f32 %v426, %v576
      %v595 = vmul.f32 %v427, %v576
      %v596 = vmul.f32 %v428, %v576
      %v597 = vmul.f32 %v429, %v576
      %v598 = vmul.f32 %v430, %v576
      %v599 = vmul.f32 %v431, %v576
      %v600 = vmul.f32 %v432, %v576
      %v601 = vmul.f32 %v433, %v576
      %v602 = vmul.f32 %v434, %v576
      %v603 = vmul.f32 %v435, %v576
      %v604 = vmul.f32 %v436, %v576
      %v605 = vmul.f32 %v437, %v576
      %v606 = vmul.f32 %v438, %v576
      %v607 = vmul.f32 %v439, %v576
      %v608 = vmul.f32 %v440, %v576
      %v609 = vld [vmem:[%s2] sm:$0x1]
      %v611 = vperm.slane %v609, 0
      %v613 = vmul.f32 %v577, %v611
      %v614 = vmul.f32 %v578, %v611
      %v615 = vmul.f32 %v579, %v611
      %v616 = vmul.f32 %v580, %v611
      %v617 = vmul.f32 %v581, %v611
      %v618 = vmul.f32 %v582, %v611
      %v619 = vmul.f32 %v583, %v611
      %v620 = vmul.f32 %v584, %v611
      %v621 = vmul.f32 %v585, %v611
      %v622 = vmul.f32 %v586, %v611
      %v623 = vmul.f32 %v587, %v611
      %v624 = vmul.f32 %v588, %v611
      %v625 = vmul.f32 %v589, %v611
      %v626 = vmul.f32 %v590, %v611
      %v627 = vmul.f32 %v591, %v611
      %v628 = vmul.f32 %v592, %v611
      %v629 = vmul.f32 %v593, %v611
      %v630 = vmul.f32 %v594, %v611
      %v631 = vmul.f32 %v595, %v611
      %v632 = vmul.f32 %v596, %v611
      %v633 = vmul.f32 %v597, %v611
      %v634 = vmul.f32 %v598, %v611
      %v635 = vmul.f32 %v599, %v611
      %v636 = vmul.f32 %v600, %v611
      %v637 = vmul.f32 %v601, %v611
      %v638 = vmul.f32 %v602, %v611
      %v639 = vmul.f32 %v603, %v611
      %v640 = vmul.f32 %v604, %v611
      %v641 = vmul.f32 %v605, %v611
      %v642 = vmul.f32 %v606, %v611
      %v643 = vmul.f32 %v607, %v611
      %v644 = vmul.f32 %v608, %v611
      %v645 = vld [vmem:[%s3] sm:$0x1]
      %v647 = vperm.slane %v645, 0
      %v649 = vadd.f32 %v613, %v647
      %v650 = vadd.f32 %v614, %v647
      %v651 = vadd.f32 %v615, %v647
      %v652 = vadd.f32 %v616, %v647
      %v653 = vadd.f32 %v617, %v647
      %v654 = vadd.f32 %v618, %v647
      %v655 = vadd.f32 %v619, %v647
      %v656 = vadd.f32 %v620, %v647
      %v657 = vadd.f32 %v621, %v647
      %v658 = vadd.f32 %v622, %v647
      %v659 = vadd.f32 %v623, %v647
      %v660 = vadd.f32 %v624, %v647
      %v661 = vadd.f32 %v625, %v647
      %v662 = vadd.f32 %v626, %v647
      %v663 = vadd.f32 %v627, %v647
      %v664 = vadd.f32 %v628, %v647
      %v665 = vadd.f32 %v629, %v647
      %v666 = vadd.f32 %v630, %v647
      %v667 = vadd.f32 %v631, %v647
      %v668 = vadd.f32 %v632, %v647
      %v669 = vadd.f32 %v633, %v647
      %v670 = vadd.f32 %v634, %v647
      %v671 = vadd.f32 %v635, %v647
      %v672 = vadd.f32 %v636, %v647
      %v673 = vadd.f32 %v637, %v647
      %v674 = vadd.f32 %v638, %v647
      %v675 = vadd.f32 %v639, %v647
      %v676 = vadd.f32 %v640, %v647
      %v677 = vadd.f32 %v641, %v647
      %v678 = vadd.f32 %v642, %v647
      %v679 = vadd.f32 %v643, %v647
      %v680 = vadd.f32 %v644, %v647
      %v681 = vxor.u32 %v649, 2147483648
      %v682 = vxor.u32 %v650, 2147483648
      %v683 = vxor.u32 %v651, 2147483648
      %v684 = vxor.u32 %v652, 2147483648
      %v685 = vxor.u32 %v653, 2147483648
      %v686 = vxor.u32 %v654, 2147483648
      %v687 = vxor.u32 %v655, 2147483648
      %v688 = vxor.u32 %v656, 2147483648
      %v689 = vxor.u32 %v657, 2147483648
      %v690 = vxor.u32 %v658, 2147483648
      %v691 = vxor.u32 %v659, 2147483648
      %v692 = vxor.u32 %v660, 2147483648
      %v693 = vxor.u32 %v661, 2147483648
      %v694 = vxor.u32 %v662, 2147483648
      %v695 = vxor.u32 %v663, 2147483648
      %v696 = vxor.u32 %v664, 2147483648
      %v697 = vxor.u32 %v665, 2147483648
      %v698 = vxor.u32 %v666, 2147483648
      %v699 = vxor.u32 %v667, 2147483648
      %v700 = vxor.u32 %v668, 2147483648
      %v701 = vxor.u32 %v669, 2147483648
      %v702 = vxor.u32 %v670, 2147483648
      %v703 = vxor.u32 %v671, 2147483648
      %v704 = vxor.u32 %v672, 2147483648
      %v705 = vxor.u32 %v673, 2147483648
      %v706 = vxor.u32 %v674, 2147483648
      %v707 = vxor.u32 %v675, 2147483648
      %v708 = vxor.u32 %v676, 2147483648
      %v709 = vxor.u32 %v677, 2147483648
      %v710 = vxor.u32 %v678, 2147483648
      %v711 = vxor.u32 %v679, 2147483648
      %v712 = vxor.u32 %v680, 2147483648
      %v713 = vmul.f32 %v681, 1.442695
      %v714 = vpow.pop %v713
      %v715 = vmul.f32 %v682, 1.442695
      %v716 = vpow.pop %v715
      %v717 = vmul.f32 %v683, 1.442695
      %v718 = vpow.pop %v717
      %v719 = vmul.f32 %v684, 1.442695
      %v720 = vpow.pop %v719
      %v721 = vmul.f32 %v685, 1.442695
      %v722 = vpow.pop %v721
      %v723 = vmul.f32 %v686, 1.442695
      %v724 = vpow.pop %v723
      %v725 = vmul.f32 %v687, 1.442695
      %v726 = vpow.pop %v725
      %v727 = vmul.f32 %v688, 1.442695
      %v728 = vpow.pop %v727
      %v729 = vmul.f32 %v689, 1.442695
      %v730 = vpow.pop %v729
      %v731 = vmul.f32 %v690, 1.442695
      %v732 = vpow.pop %v731
      %v733 = vmul.f32 %v691, 1.442695
      %v734 = vpow.pop %v733
      %v735 = vmul.f32 %v692, 1.442695
      %v736 = vpow.pop %v735
      %v737 = vmul.f32 %v693, 1.442695
      %v738 = vpow.pop %v737
      %v739 = vmul.f32 %v694, 1.442695
      %v740 = vpow.pop %v739
      %v741 = vmul.f32 %v695, 1.442695
      %v742 = vpow.pop %v741
      %v743 = vmul.f32 %v696, 1.442695
      %v744 = vpow.pop %v743
      %v745 = vmul.f32 %v697, 1.442695
      %v746 = vpow.pop %v745
      %v747 = vmul.f32 %v698, 1.442695
      %v748 = vpow.pop %v747
      %v749 = vmul.f32 %v699, 1.442695
      %v750 = vpow.pop %v749
      %v751 = vmul.f32 %v700, 1.442695
      %v752 = vpow.pop %v751
      %v753 = vmul.f32 %v701, 1.442695
      %v754 = vpow.pop %v753
      %v755 = vmul.f32 %v702, 1.442695
      %v756 = vpow.pop %v755
      %v757 = vmul.f32 %v703, 1.442695
      %v758 = vpow.pop %v757
      %v759 = vmul.f32 %v704, 1.442695
      %v760 = vpow.pop %v759
      %v761 = vmul.f32 %v705, 1.442695
      %v762 = vpow.pop %v761
      %v763 = vmul.f32 %v706, 1.442695
      %v764 = vpow.pop %v763
      %v765 = vmul.f32 %v707, 1.442695
      %v766 = vpow.pop %v765
      %v767 = vmul.f32 %v708, 1.442695
      %v768 = vpow.pop %v767
      %v769 = vmul.f32 %v709, 1.442695
      %v770 = vpow.pop %v769
      %v771 = vmul.f32 %v710, 1.442695
      %v772 = vpow.pop %v771
      %v773 = vmul.f32 %v711, 1.442695
      %v774 = vpow.pop %v773
      %v775 = vmul.f32 %v712, 1.442695
      %v776 = vpow.pop %v775
      %v777 = vadd.f32 %v714, 1.0
      %v778 = vadd.f32 %v716, 1.0
      %v779 = vadd.f32 %v718, 1.0
      %v780 = vadd.f32 %v720, 1.0
      %v781 = vadd.f32 %v722, 1.0
      %v782 = vadd.f32 %v724, 1.0
      %v783 = vadd.f32 %v726, 1.0
      %v784 = vadd.f32 %v728, 1.0
      %v785 = vadd.f32 %v730, 1.0
      %v786 = vadd.f32 %v732, 1.0
      %v787 = vadd.f32 %v734, 1.0
      %v788 = vadd.f32 %v736, 1.0
      %v789 = vadd.f32 %v738, 1.0
      %v790 = vadd.f32 %v740, 1.0
      %v791 = vadd.f32 %v742, 1.0
      %v792 = vadd.f32 %v744, 1.0
      %v793 = vadd.f32 %v746, 1.0
      %v794 = vadd.f32 %v748, 1.0
      %v795 = vadd.f32 %v750, 1.0
      %v796 = vadd.f32 %v752, 1.0
      %v797 = vadd.f32 %v754, 1.0
      %v798 = vadd.f32 %v756, 1.0
      %v799 = vadd.f32 %v758, 1.0
      %v800 = vadd.f32 %v760, 1.0
      %v801 = vadd.f32 %v762, 1.0
      %v802 = vadd.f32 %v764, 1.0
      %v803 = vadd.f32 %v766, 1.0
      %v804 = vadd.f32 %v768, 1.0
      %v805 = vadd.f32 %v770, 1.0
      %v806 = vadd.f32 %v772, 1.0
      %v807 = vadd.f32 %v774, 1.0
      %v808 = vadd.f32 %v776, 1.0
      %v809 = vrcp.pop %v777
      %v810 = vmul.f32 %v777, %v809
      %v811 = vsub.f32 1.0, %v810
      %v812 = vmul.f32 %v809, %v811
      %v813 = vadd.f32 %v809, %v812
      %vm814 = vweird.f32 %v777
      %vm815 = vweird.f32 %v809
      %vm816 = vmor %vm814, %vm815
      %v817 = vsel %vm816, %v809, %v813
      %v818 = vand.u32 2147483647, %v777
      %vm819 = vcmp.eq.f32.partialorder %v818, 8.507059e+37
      %v820 = vand.u32 %v777, 2147483648
      %v821 = vor.u32 1.1754944e-38, %v820
      %v822 = vsel %vm819, %v821, %v817
      %v823 = vmul.f32 1.0, %v822
      %v824 = vrcp.pop %v778
      %v825 = vmul.f32 %v778, %v824
      %v826 = vsub.f32 1.0, %v825
      %v827 = vmul.f32 %v824, %v826
      %v828 = vadd.f32 %v824, %v827
      %vm829 = vweird.f32 %v778
      %vm830 = vweird.f32 %v824
      %vm831 = vmor %vm829, %vm830
      %v832 = vsel %vm831, %v824, %v828
      %v833 = vand.u32 2147483647, %v778
      %vm834 = vcmp.eq.f32.partialorder %v833, 8.507059e+37
      %v835 = vand.u32 %v778, 2147483648
      %v836 = vor.u32 1.1754944e-38, %v835
      %v837 = vsel %vm834, %v836, %v832
      %v838 = vmul.f32 1.0, %v837
      %v839 = vrcp.pop %v779
      %v840 = vmul.f32 %v779, %v839
      %v841 = vsub.f32 1.0, %v840
      %v842 = vmul.f32 %v839, %v841
      %v843 = vadd.f32 %v839, %v842
      %vm844 = vweird.f32 %v779
      %vm845 = vweird.f32 %v839
      %vm846 = vmor %vm844, %vm845
      %v847 = vsel %vm846, %v839, %v843
      %v848 = vand.u32 2147483647, %v779
      %vm849 = vcmp.eq.f32.partialorder %v848, 8.507059e+37
      %v850 = vand.u32 %v779, 2147483648
      %v851 = vor.u32 1.1754944e-38, %v850
      %v852 = vsel %vm849, %v851, %v847
      %v853 = vmul.f32 1.0, %v852
      %v854 = vrcp.pop %v780
      %v855 = vmul.f32 %v780, %v854
      %v856 = vsub.f32 1.0, %v855
      %v857 = vmul.f32 %v854, %v856
      %v858 = vadd.f32 %v854, %v857
      %vm859 = vweird.f32 %v780
      %vm860 = vweird.f32 %v854
      %vm861 = vmor %vm859, %vm860
      %v862 = vsel %vm861, %v854, %v858
      %v863 = vand.u32 2147483647, %v780
      %vm864 = vcmp.eq.f32.partialorder %v863, 8.507059e+37
      %v865 = vand.u32 %v780, 2147483648
      %v866 = vor.u32 1.1754944e-38, %v865
      %v867 = vsel %vm864, %v866, %v862
      %v868 = vmul.f32 1.0, %v867
      %v869 = vrcp.pop %v781
      %v870 = vmul.f32 %v781, %v869
      %v871 = vsub.f32 1.0, %v870
      %v872 = vmul.f32 %v869, %v871
      %v873 = vadd.f32 %v869, %v872
      %vm874 = vweird.f32 %v781
      %vm875 = vweird.f32 %v869
      %vm876 = vmor %vm874, %vm875
      %v877 = vsel %vm876, %v869, %v873
      %v878 = vand.u32 2147483647, %v781
      %vm879 = vcmp.eq.f32.partialorder %v878, 8.507059e+37
      %v880 = vand.u32 %v781, 2147483648
      %v881 = vor.u32 1.1754944e-38, %v880
      %v882 = vsel %vm879, %v881, %v877
      %v883 = vmul.f32 1.0, %v882
      %v884 = vrcp.pop %v782
      %v885 = vmul.f32 %v782, %v884
      %v886 = vsub.f32 1.0, %v885
      %v887 = vmul.f32 %v884, %v886
      %v888 = vadd.f32 %v884, %v887
      %vm889 = vweird.f32 %v782
      %vm890 = vweird.f32 %v884
      %vm891 = vmor %vm889, %vm890
      %v892 = vsel %vm891, %v884, %v888
      %v893 = vand.u32 2147483647, %v782
      %vm894 = vcmp.eq.f32.partialorder %v893, 8.507059e+37
      %v895 = vand.u32 %v782, 2147483648
      %v896 = vor.u32 1.1754944e-38, %v895
      %v897 = vsel %vm894, %v896, %v892
      %v898 = vmul.f32 1.0, %v897
      %v899 = vrcp.pop %v783
      %v900 = vmul.f32 %v783, %v899
      %v901 = vsub.f32 1.0, %v900
      %v902 = vmul.f32 %v899, %v901
      %v903 = vadd.f32 %v899, %v902
      %vm904 = vweird.f32 %v783
      %vm905 = vweird.f32 %v899
      %vm906 = vmor %vm904, %vm905
      %v907 = vsel %vm906, %v899, %v903
      %v908 = vand.u32 2147483647, %v783
      %vm909 = vcmp.eq.f32.partialorder %v908, 8.507059e+37
      %v910 = vand.u32 %v783, 2147483648
      %v911 = vor.u32 1.1754944e-38, %v910
      %v912 = vsel %vm909, %v911, %v907
      %v913 = vmul.f32 1.0, %v912
      %v914 = vrcp.pop %v784
      %v915 = vmul.f32 %v784, %v914
      %v916 = vsub.f32 1.0, %v915
      %v917 = vmul.f32 %v914, %v916
      %v918 = vadd.f32 %v914, %v917
      %vm919 = vweird.f32 %v784
      %vm920 = vweird.f32 %v914
      %vm921 = vmor %vm919, %vm920
      %v922 = vsel %vm921, %v914, %v918
      %v923 = vand.u32 2147483647, %v784
      %vm924 = vcmp.eq.f32.partialorder %v923, 8.507059e+37
      %v925 = vand.u32 %v784, 2147483648
      %v926 = vor.u32 1.1754944e-38, %v925
      %v927 = vsel %vm924, %v926, %v922
      %v928 = vmul.f32 1.0, %v927
      %v929 = vrcp.pop %v785
      %v930 = vmul.f32 %v785, %v929
      %v931 = vsub.f32 1.0, %v930
      %v932 = vmul.f32 %v929, %v931
      %v933 = vadd.f32 %v929, %v932
      %vm934 = vweird.f32 %v785
      %vm935 = vweird.f32 %v929
      %vm936 = vmor %vm934, %vm935
      %v937 = vsel %vm936, %v929, %v933
      %v938 = vand.u32 2147483647, %v785
      %vm939 = vcmp.eq.f32.partialorder %v938, 8.507059e+37
      %v940 = vand.u32 %v785, 2147483648
      %v941 = vor.u32 1.1754944e-38, %v940
      %v942 = vsel %vm939, %v941, %v937
      %v943 = vmul.f32 1.0, %v942
      %v944 = vrcp.pop %v786
      %v945 = vmul.f32 %v786, %v944
      %v946 = vsub.f32 1.0, %v945
      %v947 = vmul.f32 %v944, %v946
      %v948 = vadd.f32 %v944, %v947
      %vm949 = vweird.f32 %v786
      %vm950 = vweird.f32 %v944
      %vm951 = vmor %vm949, %vm950
      %v952 = vsel %vm951, %v944, %v948
      %v953 = vand.u32 2147483647, %v786
      %vm954 = vcmp.eq.f32.partialorder %v953, 8.507059e+37
      %v955 = vand.u32 %v786, 2147483648
      %v956 = vor.u32 1.1754944e-38, %v955
      %v957 = vsel %vm954, %v956, %v952
      %v958 = vmul.f32 1.0, %v957
      %v959 = vrcp.pop %v787
      %v960 = vmul.f32 %v787, %v959
      %v961 = vsub.f32 1.0, %v960
      %v962 = vmul.f32 %v959, %v961
      %v963 = vadd.f32 %v959, %v962
      %vm964 = vweird.f32 %v787
      %vm965 = vweird.f32 %v959
      %vm966 = vmor %vm964, %vm965
      %v967 = vsel %vm966, %v959, %v963
      %v968 = vand.u32 2147483647, %v787
      %vm969 = vcmp.eq.f32.partialorder %v968, 8.507059e+37
      %v970 = vand.u32 %v787, 2147483648
      %v971 = vor.u32 1.1754944e-38, %v970
      %v972 = vsel %vm969, %v971, %v967
      %v973 = vmul.f32 1.0, %v972
      %v974 = vrcp.pop %v788
      %v975 = vmul.f32 %v788, %v974
      %v976 = vsub.f32 1.0, %v975
      %v977 = vmul.f32 %v974, %v976
      %v978 = vadd.f32 %v974, %v977
      %vm979 = vweird.f32 %v788
      %vm980 = vweird.f32 %v974
      %vm981 = vmor %vm979, %vm980
      %v982 = vsel %vm981, %v974, %v978
      %v983 = vand.u32 2147483647, %v788
      %vm984 = vcmp.eq.f32.partialorder %v983, 8.507059e+37
      %v985 = vand.u32 %v788, 2147483648
      %v986 = vor.u32 1.1754944e-38, %v985
      %v987 = vsel %vm984, %v986, %v982
      %v988 = vmul.f32 1.0, %v987
      %v989 = vrcp.pop %v789
      %v990 = vmul.f32 %v789, %v989
      %v991 = vsub.f32 1.0, %v990
      %v992 = vmul.f32 %v989, %v991
      %v993 = vadd.f32 %v989, %v992
      %vm994 = vweird.f32 %v789
      %vm995 = vweird.f32 %v989
      %vm996 = vmor %vm994, %vm995
      %v997 = vsel %vm996, %v989, %v993
      %v998 = vand.u32 2147483647, %v789
      %vm999 = vcmp.eq.f32.partialorder %v998, 8.507059e+37
      %v1000 = vand.u32 %v789, 2147483648
      %v1001 = vor.u32 1.1754944e-38, %v1000
      %v1002 = vsel %vm999, %v1001, %v997
      %v1003 = vmul.f32 1.0, %v1002
      %v1004 = vrcp.pop %v790
      %v1005 = vmul.f32 %v790, %v1004
      %v1006 = vsub.f32 1.0, %v1005
      %v1007 = vmul.f32 %v1004, %v1006
      %v1008 = vadd.f32 %v1004, %v1007
      %vm1009 = vweird.f32 %v790
      %vm1010 = vweird.f32 %v1004
      %vm1011 = vmor %vm1009, %vm1010
      %v1012 = vsel %vm1011, %v1004, %v1008
      %v1013 = vand.u32 2147483647, %v790
      %vm1014 = vcmp.eq.f32.partialorder %v1013, 8.507059e+37
      %v1015 = vand.u32 %v790, 2147483648
      %v1016 = vor.u32 1.1754944e-38, %v1015
      %v1017 = vsel %vm1014, %v1016, %v1012
      %v1018 = vmul.f32 1.0, %v1017
      %v1019 = vrcp.pop %v791
      %v1020 = vmul.f32 %v791, %v1019
      %v1021 = vsub.f32 1.0, %v1020
      %v1022 = vmul.f32 %v1019, %v1021
      %v1023 = vadd.f32 %v1019, %v1022
      %vm1024 = vweird.f32 %v791
      %vm1025 = vweird.f32 %v1019
      %vm1026 = vmor %vm1024, %vm1025
      %v1027 = vsel %vm1026, %v1019, %v1023
      %v1028 = vand.u32 2147483647, %v791
      %vm1029 = vcmp.eq.f32.partialorder %v1028, 8.507059e+37
      %v1030 = vand.u32 %v791, 2147483648
      %v1031 = vor.u32 1.1754944e-38, %v1030
      %v1032 = vsel %vm1029, %v1031, %v1027
      %v1033 = vmul.f32 1.0, %v1032
      %v1034 = vrcp.pop %v792
      %v1035 = vmul.f32 %v792, %v1034
      %v1036 = vsub.f32 1.0, %v1035
      %v1037 = vmul.f32 %v1034, %v1036
      %v1038 = vadd.f32 %v1034, %v1037
      %vm1039 = vweird.f32 %v792
      %vm1040 = vweird.f32 %v1034
      %vm1041 = vmor %vm1039, %vm1040
      %v1042 = vsel %vm1041, %v1034, %v1038
      %v1043 = vand.u32 2147483647, %v792
      %vm1044 = vcmp.eq.f32.partialorder %v1043, 8.507059e+37
      %v1045 = vand.u32 %v792, 2147483648
      %v1046 = vor.u32 1.1754944e-38, %v1045
      %v1047 = vsel %vm1044, %v1046, %v1042
      %v1048 = vmul.f32 1.0, %v1047
      %v1049 = vrcp.pop %v793
      %v1050 = vmul.f32 %v793, %v1049
      %v1051 = vsub.f32 1.0, %v1050
      %v1052 = vmul.f32 %v1049, %v1051
      %v1053 = vadd.f32 %v1049, %v1052
      %vm1054 = vweird.f32 %v793
      %vm1055 = vweird.f32 %v1049
      %vm1056 = vmor %vm1054, %vm1055
      %v1057 = vsel %vm1056, %v1049, %v1053
      %v1058 = vand.u32 2147483647, %v793
      %vm1059 = vcmp.eq.f32.partialorder %v1058, 8.507059e+37
      %v1060 = vand.u32 %v793, 2147483648
      %v1061 = vor.u32 1.1754944e-38, %v1060
      %v1062 = vsel %vm1059, %v1061, %v1057
      %v1063 = vmul.f32 1.0, %v1062
      %v1064 = vrcp.pop %v794
      %v1065 = vmul.f32 %v794, %v1064
      %v1066 = vsub.f32 1.0, %v1065
      %v1067 = vmul.f32 %v1064, %v1066
      %v1068 = vadd.f32 %v1064, %v1067
      %vm1069 = vweird.f32 %v794
      %vm1070 = vweird.f32 %v1064
      %vm1071 = vmor %vm1069, %vm1070
      %v1072 = vsel %vm1071, %v1064, %v1068
      %v1073 = vand.u32 2147483647, %v794
      %vm1074 = vcmp.eq.f32.partialorder %v1073, 8.507059e+37
      %v1075 = vand.u32 %v794, 2147483648
      %v1076 = vor.u32 1.1754944e-38, %v1075
      %v1077 = vsel %vm1074, %v1076, %v1072
      %v1078 = vmul.f32 1.0, %v1077
      %v1079 = vrcp.pop %v795
      %v1080 = vmul.f32 %v795, %v1079
      %v1081 = vsub.f32 1.0, %v1080
      %v1082 = vmul.f32 %v1079, %v1081
      %v1083 = vadd.f32 %v1079, %v1082
      %vm1084 = vweird.f32 %v795
      %vm1085 = vweird.f32 %v1079
      %vm1086 = vmor %vm1084, %vm1085
      %v1087 = vsel %vm1086, %v1079, %v1083
      %v1088 = vand.u32 2147483647, %v795
      %vm1089 = vcmp.eq.f32.partialorder %v1088, 8.507059e+37
      %v1090 = vand.u32 %v795, 2147483648
      %v1091 = vor.u32 1.1754944e-38, %v1090
      %v1092 = vsel %vm1089, %v1091, %v1087
      %v1093 = vmul.f32 1.0, %v1092
      %v1094 = vrcp.pop %v796
      %v1095 = vmul.f32 %v796, %v1094
      %v1096 = vsub.f32 1.0, %v1095
      %v1097 = vmul.f32 %v1094, %v1096
      %v1098 = vadd.f32 %v1094, %v1097
      %vm1099 = vweird.f32 %v796
      %vm1100 = vweird.f32 %v1094
      %vm1101 = vmor %vm1099, %vm1100
      %v1102 = vsel %vm1101, %v1094, %v1098
      %v1103 = vand.u32 2147483647, %v796
      %vm1104 = vcmp.eq.f32.partialorder %v1103, 8.507059e+37
      %v1105 = vand.u32 %v796, 2147483648
      %v1106 = vor.u32 1.1754944e-38, %v1105
      %v1107 = vsel %vm1104, %v1106, %v1102
      %v1108 = vmul.f32 1.0, %v1107
      %v1109 = vrcp.pop %v797
      %v1110 = vmul.f32 %v797, %v1109
      %v1111 = vsub.f32 1.0, %v1110
      %v1112 = vmul.f32 %v1109, %v1111
      %v1113 = vadd.f32 %v1109, %v1112
      %vm1114 = vweird.f32 %v797
      %vm1115 = vweird.f32 %v1109
      %vm1116 = vmor %vm1114, %vm1115
      %v1117 = vsel %vm1116, %v1109, %v1113
      %v1118 = vand.u32 2147483647, %v797
      %vm1119 = vcmp.eq.f32.partialorder %v1118, 8.507059e+37
      %v1120 = vand.u32 %v797, 2147483648
      %v1121 = vor.u32 1.1754944e-38, %v1120
      %v1122 = vsel %vm1119, %v1121, %v1117
      %v1123 = vmul.f32 1.0, %v1122
      %v1124 = vrcp.pop %v798
      %v1125 = vmul.f32 %v798, %v1124
      %v1126 = vsub.f32 1.0, %v1125
      %v1127 = vmul.f32 %v1124, %v1126
      %v1128 = vadd.f32 %v1124, %v1127
      %vm1129 = vweird.f32 %v798
      %vm1130 = vweird.f32 %v1124
      %vm1131 = vmor %vm1129, %vm1130
      %v1132 = vsel %vm1131, %v1124, %v1128
      %v1133 = vand.u32 2147483647, %v798
      %vm1134 = vcmp.eq.f32.partialorder %v1133, 8.507059e+37
      %v1135 = vand.u32 %v798, 2147483648
      %v1136 = vor.u32 1.1754944e-38, %v1135
      %v1137 = vsel %vm1134, %v1136, %v1132
      %v1138 = vmul.f32 1.0, %v1137
      %v1139 = vrcp.pop %v799
      %v1140 = vmul.f32 %v799, %v1139
      %v1141 = vsub.f32 1.0, %v1140
      %v1142 = vmul.f32 %v1139, %v1141
      %v1143 = vadd.f32 %v1139, %v1142
      %vm1144 = vweird.f32 %v799
      %vm1145 = vweird.f32 %v1139
      %vm1146 = vmor %vm1144, %vm1145
      %v1147 = vsel %vm1146, %v1139, %v1143
      %v1148 = vand.u32 2147483647, %v799
      %vm1149 = vcmp.eq.f32.partialorder %v1148, 8.507059e+37
      %v1150 = vand.u32 %v799, 2147483648
      %v1151 = vor.u32 1.1754944e-38, %v1150
      %v1152 = vsel %vm1149, %v1151, %v1147
      %v1153 = vmul.f32 1.0, %v1152
      %v1154 = vrcp.pop %v800
      %v1155 = vmul.f32 %v800, %v1154
      %v1156 = vsub.f32 1.0, %v1155
      %v1157 = vmul.f32 %v1154, %v1156
      %v1158 = vadd.f32 %v1154, %v1157
      %vm1159 = vweird.f32 %v800
      %vm1160 = vweird.f32 %v1154
      %vm1161 = vmor %vm1159, %vm1160
      %v1162 = vsel %vm1161, %v1154, %v1158
      %v1163 = vand.u32 2147483647, %v800
      %vm1164 = vcmp.eq.f32.partialorder %v1163, 8.507059e+37
      %v1165 = vand.u32 %v800, 2147483648
      %v1166 = vor.u32 1.1754944e-38, %v1165
      %v1167 = vsel %vm1164, %v1166, %v1162
      %v1168 = vmul.f32 1.0, %v1167
      %v1169 = vrcp.pop %v801
      %v1170 = vmul.f32 %v801, %v1169
      %v1171 = vsub.f32 1.0, %v1170
      %v1172 = vmul.f32 %v1169, %v1171
      %v1173 = vadd.f32 %v1169, %v1172
      %vm1174 = vweird.f32 %v801
      %vm1175 = vweird.f32 %v1169
      %vm1176 = vmor %vm1174, %vm1175
      %v1177 = vsel %vm1176, %v1169, %v1173
      %v1178 = vand.u32 2147483647, %v801
      %vm1179 = vcmp.eq.f32.partialorder %v1178, 8.507059e+37
      %v1180 = vand.u32 %v801, 2147483648
      %v1181 = vor.u32 1.1754944e-38, %v1180
      %v1182 = vsel %vm1179, %v1181, %v1177
      %v1183 = vmul.f32 1.0, %v1182
      %v1184 = vrcp.pop %v802
      %v1185 = vmul.f32 %v802, %v1184
      %v1186 = vsub.f32 1.0, %v1185
      %v1187 = vmul.f32 %v1184, %v1186
      %v1188 = vadd.f32 %v1184, %v1187
      %vm1189 = vweird.f32 %v802
      %vm1190 = vweird.f32 %v1184
      %vm1191 = vmor %vm1189, %vm1190
      %v1192 = vsel %vm1191, %v1184, %v1188
      %v1193 = vand.u32 2147483647, %v802
      %vm1194 = vcmp.eq.f32.partialorder %v1193, 8.507059e+37
      %v1195 = vand.u32 %v802, 2147483648
      %v1196 = vor.u32 1.1754944e-38, %v1195
      %v1197 = vsel %vm1194, %v1196, %v1192
      %v1198 = vmul.f32 1.0, %v1197
      %v1199 = vrcp.pop %v803
      %v1200 = vmul.f32 %v803, %v1199
      %v1201 = vsub.f32 1.0, %v1200
      %v1202 = vmul.f32 %v1199, %v1201
      %v1203 = vadd.f32 %v1199, %v1202
      %vm1204 = vweird.f32 %v803
      %vm1205 = vweird.f32 %v1199
      %vm1206 = vmor %vm1204, %vm1205
      %v1207 = vsel %vm1206, %v1199, %v1203
      %v1208 = vand.u32 2147483647, %v803
      %vm1209 = vcmp.eq.f32.partialorder %v1208, 8.507059e+37
      %v1210 = vand.u32 %v803, 2147483648
      %v1211 = vor.u32 1.1754944e-38, %v1210
      %v1212 = vsel %vm1209, %v1211, %v1207
      %v1213 = vmul.f32 1.0, %v1212
      %v1214 = vrcp.pop %v804
      %v1215 = vmul.f32 %v804, %v1214
      %v1216 = vsub.f32 1.0, %v1215
      %v1217 = vmul.f32 %v1214, %v1216
      %v1218 = vadd.f32 %v1214, %v1217
      %vm1219 = vweird.f32 %v804
      %vm1220 = vweird.f32 %v1214
      %vm1221 = vmor %vm1219, %vm1220
      %v1222 = vsel %vm1221, %v1214, %v1218
      %v1223 = vand.u32 2147483647, %v804
      %vm1224 = vcmp.eq.f32.partialorder %v1223, 8.507059e+37
      %v1225 = vand.u32 %v804, 2147483648
      %v1226 = vor.u32 1.1754944e-38, %v1225
      %v1227 = vsel %vm1224, %v1226, %v1222
      %v1228 = vmul.f32 1.0, %v1227
      %v1229 = vrcp.pop %v805
      %v1230 = vmul.f32 %v805, %v1229
      %v1231 = vsub.f32 1.0, %v1230
      %v1232 = vmul.f32 %v1229, %v1231
      %v1233 = vadd.f32 %v1229, %v1232
      %vm1234 = vweird.f32 %v805
      %vm1235 = vweird.f32 %v1229
      %vm1236 = vmor %vm1234, %vm1235
      %v1237 = vsel %vm1236, %v1229, %v1233
      %v1238 = vand.u32 2147483647, %v805
      %vm1239 = vcmp.eq.f32.partialorder %v1238, 8.507059e+37
      %v1240 = vand.u32 %v805, 2147483648
      %v1241 = vor.u32 1.1754944e-38, %v1240
      %v1242 = vsel %vm1239, %v1241, %v1237
      %v1243 = vmul.f32 1.0, %v1242
      %v1244 = vrcp.pop %v806
      %v1245 = vmul.f32 %v806, %v1244
      %v1246 = vsub.f32 1.0, %v1245
      %v1247 = vmul.f32 %v1244, %v1246
      %v1248 = vadd.f32 %v1244, %v1247
      %vm1249 = vweird.f32 %v806
      %vm1250 = vweird.f32 %v1244
      %vm1251 = vmor %vm1249, %vm1250
      %v1252 = vsel %vm1251, %v1244, %v1248
      %v1253 = vand.u32 2147483647, %v806
      %vm1254 = vcmp.eq.f32.partialorder %v1253, 8.507059e+37
      %v1255 = vand.u32 %v806, 2147483648
      %v1256 = vor.u32 1.1754944e-38, %v1255
      %v1257 = vsel %vm1254, %v1256, %v1252
      %v1258 = vmul.f32 1.0, %v1257
      %v1259 = vrcp.pop %v807
      %v1260 = vmul.f32 %v807, %v1259
      %v1261 = vsub.f32 1.0, %v1260
      %v1262 = vmul.f32 %v1259, %v1261
      %v1263 = vadd.f32 %v1259, %v1262
      %vm1264 = vweird.f32 %v807
      %vm1265 = vweird.f32 %v1259
      %vm1266 = vmor %vm1264, %vm1265
      %v1267 = vsel %vm1266, %v1259, %v1263
      %v1268 = vand.u32 2147483647, %v807
      %vm1269 = vcmp.eq.f32.partialorder %v1268, 8.507059e+37
      %v1270 = vand.u32 %v807, 2147483648
      %v1271 = vor.u32 1.1754944e-38, %v1270
      %v1272 = vsel %vm1269, %v1271, %v1267
      %v1273 = vmul.f32 1.0, %v1272
      %v1274 = vrcp.pop %v808
      %v1275 = vmul.f32 %v808, %v1274
      %v1276 = vsub.f32 1.0, %v1275
      %v1277 = vmul.f32 %v1274, %v1276
      %v1278 = vadd.f32 %v1274, %v1277
      %vm1279 = vweird.f32 %v808
      %vm1280 = vweird.f32 %v1274
      %vm1281 = vmor %vm1279, %vm1280
      %v1282 = vsel %vm1281, %v1274, %v1278
      %v1283 = vand.u32 2147483647, %v808
      %vm1284 = vcmp.eq.f32.partialorder %v1283, 8.507059e+37
      %v1285 = vand.u32 %v808, 2147483648
      %v1286 = vor.u32 1.1754944e-38, %v1285
      %v1287 = vsel %vm1284, %v1286, %v1282
      %v1288 = vmul.f32 1.0, %v1287
      %v1289 = vmul.f32 %v649, %v823
      %v1290 = vmul.f32 %v650, %v838
      %v1291 = vmul.f32 %v651, %v853
      %v1292 = vmul.f32 %v652, %v868
      %v1293 = vmul.f32 %v653, %v883
      %v1294 = vmul.f32 %v654, %v898
      %v1295 = vmul.f32 %v655, %v913
      %v1296 = vmul.f32 %v656, %v928
      %v1297 = vmul.f32 %v657, %v943
      %v1298 = vmul.f32 %v658, %v958
      %v1299 = vmul.f32 %v659, %v973
      %v1300 = vmul.f32 %v660, %v988
      %v1301 = vmul.f32 %v661, %v1003
      %v1302 = vmul.f32 %v662, %v1018
      %v1303 = vmul.f32 %v663, %v1033
      %v1304 = vmul.f32 %v664, %v1048
      %v1305 = vmul.f32 %v665, %v1063
      %v1306 = vmul.f32 %v666, %v1078
      %v1307 = vmul.f32 %v667, %v1093
      %v1308 = vmul.f32 %v668, %v1108
      %v1309 = vmul.f32 %v669, %v1123
      %v1310 = vmul.f32 %v670, %v1138
      %v1311 = vmul.f32 %v671, %v1153
      %v1312 = vmul.f32 %v672, %v1168
      %v1313 = vmul.f32 %v673, %v1183
      %v1314 = vmul.f32 %v674, %v1198
      %v1315 = vmul.f32 %v675, %v1213
      %v1316 = vmul.f32 %v676, %v1228
      %v1317 = vmul.f32 %v677, %v1243
      %v1318 = vmul.f32 %v678, %v1258
      %v1319 = vmul.f32 %v679, %v1273
      %v1320 = vmul.f32 %v680, %v1288
      %v1321 = vpack.c.bf16 %v1289, %v1289
      %v1322 = vpack.c.bf16 %v1290, %v1290
      %v1323 = vpack.c.bf16 %v1291, %v1291
      %v1324 = vpack.c.bf16 %v1292, %v1292
      %v1325 = vpack.c.bf16 %v1293, %v1293
      %v1326 = vpack.c.bf16 %v1294, %v1294
      %v1327 = vpack.c.bf16 %v1295, %v1295
      %v1328 = vpack.c.bf16 %v1296, %v1296
      %v1329 = vpack.c.bf16 %v1297, %v1297
      %v1330 = vpack.c.bf16 %v1298, %v1298
      %v1331 = vpack.c.bf16 %v1299, %v1299
      %v1332 = vpack.c.bf16 %v1300, %v1300
      %v1333 = vpack.c.bf16 %v1301, %v1301
      %v1334 = vpack.c.bf16 %v1302, %v1302
      %v1335 = vpack.c.bf16 %v1303, %v1303
      %v1336 = vpack.c.bf16 %v1304, %v1304
      %v1337 = vpack.c.bf16 %v1305, %v1305
      %v1338 = vpack.c.bf16 %v1306, %v1306
      %v1339 = vpack.c.bf16 %v1307, %v1307
      %v1340 = vpack.c.bf16 %v1308, %v1308
      %v1341 = vpack.c.bf16 %v1309, %v1309
      %v1342 = vpack.c.bf16 %v1310, %v1310
      %v1343 = vpack.c.bf16 %v1311, %v1311
      %v1344 = vpack.c.bf16 %v1312, %v1312
      %v1345 = vpack.c.bf16 %v1313, %v1313
      %v1346 = vpack.c.bf16 %v1314, %v1314
      %v1347 = vpack.c.bf16 %v1315, %v1315
      %v1348 = vpack.c.bf16 %v1316, %v1316
      %v1349 = vpack.c.bf16 %v1317, %v1317
      %v1350 = vpack.c.bf16 %v1318, %v1318
      %v1351 = vpack.c.bf16 %v1319, %v1319
      %v1352 = vpack.c.bf16 %v1320, %v1320
      %vm1353 = vcmask 519168
      %1354 = vst.msk [vmem:[%s238] sm:$0xf] %vm1353, %v1321
      %1355 = vst.msk [vmem:[%s238 + $0x4] sm:$0xf] %vm1353, %v1322
      %1356 = vst.msk [vmem:[%s238 + $0x8] sm:$0xf] %vm1353, %v1323
      %1357 = vst.msk [vmem:[%s238 + $0xc] sm:$0xf] %vm1353, %v1324
      %1358 = vst.msk [vmem:[%s238 + $0x10] sm:$0xf] %vm1353, %v1325
      %1359 = vst.msk [vmem:[%s238 + $0x14] sm:$0xf] %vm1353, %v1326
      %1360 = vst.msk [vmem:[%s238 + $0x18] sm:$0xf] %vm1353, %v1327
      %1361 = vst.msk [vmem:[%s238 + $0x1c] sm:$0xf] %vm1353, %v1328
      %1362 = vst.msk [vmem:[%s238 + $0x20] sm:$0xf] %vm1353, %v1329
      %1363 = vst.msk [vmem:[%s238 + $0x24] sm:$0xf] %vm1353, %v1330
      %1364 = vst.msk [vmem:[%s238 + $0x28] sm:$0xf] %vm1353, %v1331
      %1365 = vst.msk [vmem:[%s238 + $0x2c] sm:$0xf] %vm1353, %v1332
      %1366 = vst.msk [vmem:[%s238 + $0x30] sm:$0xf] %vm1353, %v1333
      %1367 = vst.msk [vmem:[%s238 + $0x34] sm:$0xf] %vm1353, %v1334
      %1368 = vst.msk [vmem:[%s238 + $0x38] sm:$0xf] %vm1353, %v1335
      %1369 = vst.msk [vmem:[%s238 + $0x3c] sm:$0xf] %vm1353, %v1336
      %1370 = vst.msk [vmem:[%s238 + $0x40] sm:$0xf] %vm1353, %v1337
      %1371 = vst.msk [vmem:[%s238 + $0x44] sm:$0xf] %vm1353, %v1338
      %1372 = vst.msk [vmem:[%s238 + $0x48] sm:$0xf] %vm1353, %v1339
      %1373 = vst.msk [vmem:[%s238 + $0x4c] sm:$0xf] %vm1353, %v1340
      %1374 = vst.msk [vmem:[%s238 + $0x50] sm:$0xf] %vm1353, %v1341
      %1375 = vst.msk [vmem:[%s238 + $0x54] sm:$0xf] %vm1353, %v1342
      %1376 = vst.msk [vmem:[%s238 + $0x58] sm:$0xf] %vm1353, %v1343
      %1377 = vst.msk [vmem:[%s238 + $0x5c] sm:$0xf] %vm1353, %v1344
      %1378 = vst.msk [vmem:[%s238 + $0x60] sm:$0xf] %vm1353, %v1345
      %1379 = vst.msk [vmem:[%s238 + $0x64] sm:$0xf] %vm1353, %v1346
      %1380 = vst.msk [vmem:[%s238 + $0x68] sm:$0xf] %vm1353, %v1347
      %1381 = vst.msk [vmem:[%s238 + $0x6c] sm:$0xf] %vm1353, %v1348
      %1382 = vst.msk [vmem:[%s238 + $0x70] sm:$0xf] %vm1353, %v1349
      %1383 = vst.msk [vmem:[%s238 + $0x74] sm:$0xf] %vm1353, %v1350
      %1384 = vst.msk [vmem:[%s238 + $0x78] sm:$0xf] %vm1353, %v1351
      %1385 = vst.msk [vmem:[%s238 + $0x7c] sm:$0xf] %vm1353, %v1352
      %p1386 = scmp.lt.s32.totalorder %s16, 1
      %s1387 = scalar_select %p1386, %s16, 1
      %s1388 = smul.addr %s1387, 32
      %s1389 = smul.addr %s1388, 4
      %s1390 = scalar_lea.vmem %s5, %s1389
      // Predicated region
      $region41: #{resnet_block3d_forward.8} parent=39 // pred_check
        %p1391 = pneg %p149
      $region42: #{resnet_block3d_forward.8} parent=39 // pred_check_branch
        %1393 = sbr.rel (%p1391) target = $region44
      $region43: #{resnet_block3d_forward.8} parent=39 // pred_region
        _
      $region44: #{resnet_block3d_forward.8} parent=39 // pred_fallthru
        _
    $region40: #{resnet_block3d_forward.8} parent=5 // pred_fallthru
      _
    %p1394 = scmp.le.s32.totalorder 2, %s11
    // Predicated region
    $region45: #{resnet_block3d_forward.8} parent=5 // pred_check
      %p1395 = pneg %p1394
    $region46: #{resnet_block3d_forward.8} parent=5 // pred_check_branch
      %1397 = sbr.rel (%p1395) target = $region48
    $region47: #{resnet_block3d_forward.8} parent=5 // pred_region
      %s1398 = ssub.s32 %s11, 2
      // Predicated region
      $region49: #{resnet_block3d_forward.8} parent=47 // pred_check
        %p1399 = pneg %p155
      $region50: #{resnet_block3d_forward.8} parent=47 // pred_check_branch
        %1401 = sbr.rel (%p1399) target = $region52
      $region51: #{resnet_block3d_forward.8} parent=47 // pred_region
        %p1402 = scmp.lt.s32.totalorder %s17, 1
        %s1403 = scalar_select %p1402, %s17, 1
        %s1404 = smul.addr %s1403, 32
        %s1405 = smul.addr %s1404, 4
        %s1406 = scalar_lea.vmem %s5, %s1405
      $region52: #{resnet_block3d_forward.8} parent=47 // pred_fallthru
        _
    $region48: #{resnet_block3d_forward.8} parent=5 // pred_fallthru
      _
  $region6: #{resnet_block3d_forward.8} parent=0 // loop_footer
    %s15 = sadd.s32 1, %s11
  $region7: #{resnet_block3d_forward.8} parent=0 // loop_footer_branch
    %10 = sbr.rel target = $region3
  $region8: #{resnet_block3d_forward.8} parent=0 // loop_exit
    _

// kernel: resnet_block3d_forward.9
$region0: #{resnet_block3d_forward.9}
  #allocation0 [shape = 'u32[]', space=smem, size = 0x4, offset = 0x4, fixed_abs, tag = 'smem constant byte address 0x4 - core index']
  #allocation1 [shape = 'u32[72,128]{1,0:T(1,128)}', space=vmem, size = 0x9000, scoped, tag = 'internal scratch']
  #allocation2 [shape = 'f32[10,10,64]{2,1,0:T(8,128)}', space=vmem, size = 0x14000, scoped, tag = 'scratch operand']
  %s0 = inlined_call_operand.vmem [shape: bf16[8,8,8,64], index: 0, kind: input, shape index: {}]
  %s1 = inlined_call_operand.vmem [shape: f32[8,8,8,32], index: 1, kind: input, shape index: {}]
  %s2 = inlined_call_operand.vmem [shape: bf16[576,64], index: 2, kind: input, shape index: {}]
  %s3 = inlined_call_operand.vmem [shape: bf16[32,64], index: 3, kind: input, shape index: {}]
  %s4 = inlined_call_operand.vmem [shape: f32[1,64], index: 4, kind: input, shape index: {}]
  %s5 = inlined_call_operand.hbm [shape: f32[8,8,8,64], index: 5, kind: output, shape index: {}]
  %s6 = sld [smem:[#allocation0]]
  $region53: #{resnet_block3d_forward.9} parent=0
    _
  %s8 = ssub.s32 1, %s6
  %s9 = scalar_select 0, %s8, %s6
  $region1: #{resnet_block3d_forward.9} parent=0
    #allocation3 [shape = 'u8[65536]{0}', space=vmem, size = 0x10000, scoped, tag = 'output window, operand 0']
    #allocation4 [shape = 's32[2]{0}', space=sflag, size = 0x8, scoped, tag = 'scoped memory for resnet_block3d_forward.9']
    %10 = vsyncpa [#allocation4], 0
    %s11 = scalar_lea.sflag [#allocation4], 1
    %12 = vsyncpa %s11, 0
    loop: start=0, step=1, limit=10
    $region2: #{resnet_block3d_forward.9} parent=1 // loop_pre_header
      _
    $region3: #{resnet_block3d_forward.9} parent=1 // loop_header
      %s14 = sphi 0, %s18
      %p15 = scmp.ge.s32.totalorder %s14, 10
      %s24 = sphi 0, %s26
      %s27 = sphi 0, %s24
      %s28 = sphi 0, %s27
      %s44 = sphi 0, %s28
      %s50 = sphi 0, %s52
      %s53 = sphi 0, %s50
      %s54 = sphi 0, %s53
      %s70 = sphi 0, %s54
      %s74 = sphi 0, %s74
      %s76 = sphi 0, %s74
      %s77 = sphi 0, %s76
      %s91 = sphi 0, %s77
      %s95 = sphi 0, %s95
      %s97 = sphi 0, %s95
      %s98 = sphi 0, %s97
      %s112 = sphi 0, %s98
      %s116 = sphi 0, %s116
      %s118 = sphi 0, %s116
      %s119 = sphi 0, %s118
      %s133 = sphi 0, %s119
      %s139 = sphi 0, %s141
      %s142 = sphi 0, %s139
      %s143 = sphi 0, %s142
      %s159 = sphi 0, %s143
    $region4: #{resnet_block3d_forward.9} parent=1 // loop_header_branch
      %17 = sbr.rel (%p15) target = $region8
    $region5: #{resnet_block3d_forward.9} parent=1 // loop_body
      %s19 = ssub.s32 %s14, 1
      %s20 = ssub.s32 %s14, 2
      %s21 = sadd.s32 %s14, 1
      %s22 = ssub.s32 %s14, %s21
      %p23 = scmp.eq.s32.totalorder %s22, 0
      %s25 = sadd.s32 %s24, 1
      %s26 = scalar_select %p23, %s24, %s25
      %p29 = pneg %p23
      %p30 = scmp.eq.s32.totalorder %s14, 7
      %p31 = por %p29, %p30
      %p32 = scmp.ne.s32.totalorder %s24, %s27
      %p33 = scmp.eq.s32.totalorder %s14, 0
      %p34 = por %p32, %p33
      %p35 = scmp.ne.s32.totalorder %s24, %s27
      %p36 = scmp.eq.s32.totalorder %s19, 7
      %p37 = por %p35, %p36
      %p38 = scmp.ne.s32.totalorder %s27, %s28
      %p39 = scmp.eq.s32.totalorder %s19, 0
      %p40 = por %p38, %p39
      %p41 = scmp.ne.s32.totalorder %s27, %s28
      %p42 = scmp.eq.s32.totalorder %s20, 7
      %p43 = por %p41, %p42
      %p45 = scmp.ne.s32.totalorder %s28, %s44
      %p46 = scmp.eq.s32.totalorder %s20, 0
      %p47 = por %p45, %p46
      %s48 = ssub.s32 %s14, %s21
      %p49 = scmp.eq.s32.totalorder %s48, 0
      %s51 = sadd.s32 %s50, 1
      %s52 = scalar_select %p49, %s50, %s51
      %p55 = pneg %p49
      %p56 = scmp.eq.s32.totalorder %s14, 7
      %p57 = por %p55, %p56
      %p58 = scmp.ne.s32.totalorder %s50, %s53
      %p59 = scmp.eq.s32.totalorder %s14, 0
      %p60 = por %p58, %p59
      %p61 = scmp.ne.s32.totalorder %s50, %s53
      %p62 = scmp.eq.s32.totalorder %s19, 7
      %p63 = por %p61, %p62
      %p64 = scmp.ne.s32.totalorder %s53, %s54
      %p65 = scmp.eq.s32.totalorder %s19, 0
      %p66 = por %p64, %p65
      %p67 = scmp.ne.s32.totalorder %s53, %s54
      %p68 = scmp.eq.s32.totalorder %s20, 7
      %p69 = por %p67, %p68
      %p71 = scmp.ne.s32.totalorder %s54, %s70
      %p72 = scmp.eq.s32.totalorder %s20, 0
      %p73 = por %p71, %p72
      %s75 = sadd.s32 %s74, 1
      %p78 = scmp.eq.s32.totalorder %s14, 7
      %p79 = scmp.ne.s32.totalorder %s74, %s76
      %p80 = scmp.eq.s32.totalorder %s14, 0
      %p81 = por %p79, %p80
      %p82 = scmp.ne.s32.totalorder %s74, %s76
      %p83 = scmp.eq.s32.totalorder %s19, 7
      %p84 = por %p82, %p83
      %p85 = scmp.ne.s32.totalorder %s76, %s77
      %p86 = scmp.eq.s32.totalorder %s19, 0
      %p87 = por %p85, %p86
      %p88 = scmp.ne.s32.totalorder %s76, %s77
      %p89 = scmp.eq.s32.totalorder %s20, 7
      %p90 = por %p88, %p89
      %p92 = scmp.ne.s32.totalorder %s77, %s91
      %p93 = scmp.eq.s32.totalorder %s20, 0
      %p94 = por %p92, %p93
      %s96 = sadd.s32 %s95, 1
      %p99 = scmp.eq.s32.totalorder %s14, 7
      %p100 = scmp.ne.s32.totalorder %s95, %s97
      %p101 = scmp.eq.s32.totalorder %s14, 0
      %p102 = por %p100, %p101
      %p103 = scmp.ne.s32.totalorder %s95, %s97
      %p104 = scmp.eq.s32.totalorder %s19, 7
      %p105 = por %p103, %p104
      %p106 = scmp.ne.s32.totalorder %s97, %s98
      %p107 = scmp.eq.s32.totalorder %s19, 0
      %p108 = por %p106, %p107
      %p109 = scmp.ne.s32.totalorder %s97, %s98
      %p110 = scmp.eq.s32.totalorder %s20, 7
      %p111 = por %p109, %p110
      %p113 = scmp.ne.s32.totalorder %s98, %s112
      %p114 = scmp.eq.s32.totalorder %s20, 0
      %p115 = por %p113, %p114
      %s117 = sadd.s32 %s116, 1
      %p120 = scmp.eq.s32.totalorder %s14, 7
      %p121 = scmp.ne.s32.totalorder %s116, %s118
      %p122 = scmp.eq.s32.totalorder %s14, 0
      %p123 = por %p121, %p122
      %p124 = scmp.ne.s32.totalorder %s116, %s118
      %p125 = scmp.eq.s32.totalorder %s19, 7
      %p126 = por %p124, %p125
      %p127 = scmp.ne.s32.totalorder %s118, %s119
      %p128 = scmp.eq.s32.totalorder %s19, 0
      %p129 = por %p127, %p128
      %p130 = scmp.ne.s32.totalorder %s118, %s119
      %p131 = scmp.eq.s32.totalorder %s20, 7
      %p132 = por %p130, %p131
      %p134 = scmp.ne.s32.totalorder %s119, %s133
      %p135 = scmp.eq.s32.totalorder %s20, 0
      %p136 = por %p134, %p135
      %s137 = ssub.s32 %s14, %s21
      %p138 = scmp.eq.s32.totalorder %s137, 0
      %s140 = sadd.s32 %s139, 1
      %s141 = scalar_select %p138, %s139, %s140
      %p144 = pneg %p138
      %p145 = scmp.eq.s32.totalorder %s14, 7
      %p146 = por %p144, %p145
      %p147 = scmp.ne.s32.totalorder %s139, %s142
      %p148 = scmp.eq.s32.totalorder %s14, 0
      %p149 = por %p147, %p148
      %p150 = scmp.ne.s32.totalorder %s139, %s142
      %p151 = scmp.eq.s32.totalorder %s19, 7
      %p152 = por %p150, %p151
      %p153 = scmp.ne.s32.totalorder %s142, %s143
      %p154 = scmp.eq.s32.totalorder %s19, 0
      %p155 = por %p153, %p154
      %p156 = scmp.ne.s32.totalorder %s142, %s143
      %p157 = scmp.eq.s32.totalorder %s20, 7
      %p158 = por %p156, %p157
      %p160 = scmp.ne.s32.totalorder %s143, %s159
      %p161 = scmp.eq.s32.totalorder %s20, 0
      %p162 = por %p160, %p161
      %p163 = scmp.le.s32.totalorder 1, %s14
      %p164 = scmp.lt.s32.totalorder %s14, 9
      %p165 = pnand %p163, %p164
      %p166 = pneg %p165
      // Predicated region
      $region9: #{resnet_block3d_forward.9} parent=5 // pred_check
        _
      $region10: #{resnet_block3d_forward.9} parent=5 // pred_check_branch
        %168 = sbr.rel (%p165) target = $region12
      $region11: #{resnet_block3d_forward.9} parent=5 // pred_region
        %s169 = ssub.s32 %s14, 1
        // Predicated region
        $region13: #{resnet_block3d_forward.9} parent=11 // pred_check
          %p170 = pneg %p87
        $region14: #{resnet_block3d_forward.9} parent=11 // pred_check_branch
          %172 = sbr.rel (%p170) target = $region16
        $region15: #{resnet_block3d_forward.9} parent=11 // pred_region
          _
        $region16: #{resnet_block3d_forward.9} parent=11 // pred_fallthru
          _
        // Predicated region
        $region17: #{resnet_block3d_forward.9} parent=11 // pred_check
          %p173 = pneg %p108
        $region18: #{resnet_block3d_forward.9} parent=11 // pred_check_branch
          %175 = sbr.rel (%p173) target = $region20
        $region19: #{resnet_block3d_forward.9} parent=11 // pred_region
          _
        $region20: #{resnet_block3d_forward.9} parent=11 // pred_fallthru
          _
        // Predicated region
        $region21: #{resnet_block3d_forward.9} parent=11 // pred_check
          %p176 = pneg %p129
        $region22: #{resnet_block3d_forward.9} parent=11 // pred_check_branch
          %178 = sbr.rel (%p176) target = $region24
        $region23: #{resnet_block3d_forward.9} parent=11 // pred_region
          _
        $region24: #{resnet_block3d_forward.9} parent=11 // pred_fallthru
          _
      $region12: #{resnet_block3d_forward.9} parent=5 // pred_fallthru
        _
      %p179 = scmp.lt.s32.totalorder %s14, 8
      // Predicated region
      $region25: #{resnet_block3d_forward.9} parent=5 // pred_check
        %p180 = pneg %p179
      $region26: #{resnet_block3d_forward.9} parent=5 // pred_check_branch
        %182 = sbr.rel (%p180) target = $region28
      $region27: #{resnet_block3d_forward.9} parent=5 // pred_region
        // Predicated region
        $region29: #{resnet_block3d_forward.9} parent=27 // pred_check
          %p183 = pneg %p34
        $region30: #{resnet_block3d_forward.9} parent=27 // pred_check_branch
          %185 = sbr.rel (%p183) target = $region32
        $region31: #{resnet_block3d_forward.9} parent=27 // pred_region
          %p186 = scmp.lt.s32.totalorder %s14, 7
          %s187 = scalar_select %p186, %s14, 7
          %s188 = smul.addr %s187, 8
          %s189 = smul.addr %s188, 4
          %s190 = scalar_lea.vmem %s0, %s189
        $region32: #{resnet_block3d_forward.9} parent=27 // pred_fallthru
          _
        // Predicated region
        $region33: #{resnet_block3d_forward.9} parent=27 // pred_check
          %p191 = pneg %p60
        $region34: #{resnet_block3d_forward.9} parent=27 // pred_check_branch
          %193 = sbr.rel (%p191) target = $region36
        $region35: #{resnet_block3d_forward.9} parent=27 // pred_region
          %p194 = scmp.lt.s32.totalorder %s14, 7
          %s195 = scalar_select %p194, %s14, 7
          %s196 = smul.addr %s195, 8
          %s197 = smul.addr %s196, 8
          %s198 = scalar_lea.vmem %s1, %s197
        $region36: #{resnet_block3d_forward.9} parent=27 // pred_fallthru
          _
      $region28: #{resnet_block3d_forward.9} parent=5 // pred_fallthru
        _
      %p199 = scmp.le.s32.totalorder 1, %s14
      %p200 = scmp.lt.s32.totalorder %s14, 9
      %p201 = pnand %p199, %p200
      %p202 = pneg %p201
      // Predicated region
      $region37: #{resnet_block3d_forward.9} parent=5 // pred_check
        _
      $region38: #{resnet_block3d_forward.9} parent=5 // pred_check_branch
        %204 = sbr.rel (%p201) target = $region40
      $region39: #{resnet_block3d_forward.9} parent=5 // pred_region
        %s205 = ssub.s32 %s14, 1
        %p206 = scmp.lt.s32.totalorder %s19, 7
        %s207 = scalar_select %p206, %s19, 7
        %s208 = smul.addr %s207, 8
        %s209 = smul.addr %s208, 4
        %s210 = scalar_lea.vmem %s0, %s209
        %p211 = pneg %p40
        %p212 = pneg %p37
        %p213 = scmp.lt.s32.totalorder %s19, 7
        %s214 = scalar_select %p213, %s19, 7
        %s215 = smul.addr %s214, 8
        %s216 = smul.addr %s215, 8
        %s217 = scalar_lea.vmem %s1, %s216
        %p218 = pneg %p66
        %p219 = pneg %p63
        %p220 = pneg %p87
        %p221 = pneg %p84
        %p222 = pneg %p108
        %p223 = pneg %p105
        %p224 = pneg %p129
        %p225 = pneg %p126
        %p226 = pneg %p155
        %p227 = pneg %p152
        %s228 = sand.u32 %s142, 1
        %s229 = scalar_lea.sflag [#allocation4], %s228
        %s230 = sand.u32 %s142, 1
        %s231 = smul.addr %s230, 64
        %s232 = scalar_lea.vmem [#allocation3], %s231
        %p233 = scmp.lt.s32.totalorder %s19, 7
        %s234 = scalar_select %p233, %s19, 7
        %s235 = smul.addr %s234, 8
        %s236 = smul.addr %s235, 4
        %s237 = scalar_lea.vmem %s0, %s236
        %p238 = scmp.lt.s32.totalorder %s19, 7
        %s239 = scalar_select %p238, %s19, 7
        %s240 = smul.addr %s239, 8
        %s241 = smul.addr %s240, 8
        %s242 = scalar_lea.vmem %s1, %s241
        %vm244 = vcmask 523264
        %245 = vst.msk [vmem:[#allocation2] sm:$0xff] %vm244, 0.0
        %vm246 = vcmask 517120
        %247 = vst.msk [vmem:[#allocation2 + $0x8] sm:$0x3] %vm246, 0.0
        %248 = vst.msk [vmem:[#allocation2 + $0x10] sm:$0xff] %vm244, 0.0
        %249 = vst.msk [vmem:[#allocation2 + $0x18] sm:$0x3] %vm246, 0.0
        %250 = vst.msk [vmem:[#allocation2 + $0x20] sm:$0xff] %vm244, 0.0
        %251 = vst.msk [vmem:[#allocation2 + $0x28] sm:$0x3] %vm246, 0.0
        %252 = vst.msk [vmem:[#allocation2 + $0x30] sm:$0xff] %vm244, 0.0
        %253 = vst.msk [vmem:[#allocation2 + $0x38] sm:$0x3] %vm246, 0.0
        %254 = vst.msk [vmem:[#allocation2 + $0x40] sm:$0xff] %vm244, 0.0
        %255 = vst.msk [vmem:[#allocation2 + $0x48] sm:$0x3] %vm246, 0.0
        %256 = vst.msk [vmem:[#allocation2 + $0x50] sm:$0xff] %vm244, 0.0
        %257 = vst.msk [vmem:[#allocation2 + $0x58] sm:$0x3] %vm246, 0.0
        %258 = vst.msk [vmem:[#allocation2 + $0x60] sm:$0xff] %vm244, 0.0
        %259 = vst.msk [vmem:[#allocation2 + $0x68] sm:$0x3] %vm246, 0.0
        %260 = vst.msk [vmem:[#allocation2 + $0x70] sm:$0xff] %vm244, 0.0
        %261 = vst.msk [vmem:[#allocation2 + $0x78] sm:$0x3] %vm246, 0.0
        %262 = vst.msk [vmem:[#allocation2 + $0x80] sm:$0xff] %vm244, 0.0
        %263 = vst.msk [vmem:[#allocation2 + $0x88] sm:$0x3] %vm246, 0.0
        %264 = vst.msk [vmem:[#allocation2 + $0x90] sm:$0xff] %vm244, 0.0
        %265 = vst.msk [vmem:[#allocation2 + $0x98] sm:$0x3] %vm246, 0.0
        %v266 = vld [vmem:[%s237] sm:$0xf]
        %v267 = vld [vmem:[%s237 + $0x4] sm:$0xf]
        %v268 = vld [vmem:[%s237 + $0x8] sm:$0xf]
        %v269 = vld [vmem:[%s237 + $0xc] sm:$0xf]
        %v270 = vld [vmem:[%s237 + $0x10] sm:$0xf]
        %v271 = vld [vmem:[%s237 + $0x14] sm:$0xf]
        %v272 = vld [vmem:[%s237 + $0x18] sm:$0xf]
        %v273 = vld [vmem:[%s237 + $0x1c] sm:$0xf]
        %v274 = vunpack.c.l.bf16 %v266
        %v275 = vunpack.c.l.bf16 %v267
        %v276 = vunpack.c.l.bf16 %v268
        %v277 = vunpack.c.l.bf16 %v269
        %v278 = vunpack.c.l.bf16 %v270
        %v279 = vunpack.c.l.bf16 %v271
        %v280 = vunpack.c.l.bf16 %v272
        %v281 = vunpack.c.l.bf16 %v273
        %s282 = scalar_lea.vmem [#allocation2], 16
        %283 = vst.msk [vmem:[%s282 + $0x1] sm:$0xff] %vm244, %v274
        %284 = vst.msk [vmem:[%s282 + $0x11] sm:$0xff] %vm244, %v275
        %285 = vst.msk [vmem:[%s282 + $0x21] sm:$0xff] %vm244, %v276
        %286 = vst.msk [vmem:[%s282 + $0x31] sm:$0xff] %vm244, %v277
        %287 = vst.msk [vmem:[%s282 + $0x41] sm:$0xff] %vm244, %v278
        %288 = vst.msk [vmem:[%s282 + $0x51] sm:$0xff] %vm244, %v279
        %289 = vst.msk [vmem:[%s282 + $0x61] sm:$0xff] %vm244, %v280
        %290 = vst.msk [vmem:[%s282 + $0x71] sm:$0xff] %vm244, %v281
        %v291 = vld [vmem:[#allocation2] sm:$0xff]
        %v292 = vld [vmem:[#allocation2 + $0x10] sm:$0xff]
        %v293 = vld [vmem:[#allocation2 + $0x20] sm:$0xff]
        %v294 = vld [vmem:[#allocation2 + $0x30] sm:$0xff]
        %v295 = vld [vmem:[#allocation2 + $0x40] sm:$0xff]
        %v296 = vld [vmem:[#allocation2 + $0x50] sm:$0xff]
        %v297 = vld [vmem:[#allocation2 + $0x60] sm:$0xff]
        %v298 = vld [vmem:[#allocation2 + $0x70] sm:$0xff]
        %v299 = vld [vmem:[#allocation2 + $0x1] sm:$0xff]
        %v300 = vld [vmem:[#allocation2 + $0x11] sm:$0xff]
        %v301 = vld [vmem:[#allocation2 + $0x21] sm:$0xff]
        %v302 = vld [vmem:[#allocation2 + $0x31] sm:$0xff]
        %v303 = vld [vmem:[#allocation2 + $0x41] sm:$0xff]
        %v304 = vld [vmem:[#allocation2 + $0x51] sm:$0xff]
        %v305 = vld [vmem:[#allocation2 + $0x61] sm:$0xff]
        %v306 = vld [vmem:[#allocation2 + $0x71] sm:$0xff]
        %v307 = vld [vmem:[#allocation2 + $0x2] sm:$0xff]
        %v308 = vld [vmem:[#allocation2 + $0x12] sm:$0xff]
        %v309 = vld [vmem:[#allocation2 + $0x22] sm:$0xff]
        %v310 = vld [vmem:[#allocation2 + $0x32] sm:$0xff]
        %v311 = vld [vmem:[#allocation2 + $0x42] sm:$0xff]
        %v312 = vld [vmem:[#allocation2 + $0x52] sm:$0xff]
        %v313 = vld [vmem:[#allocation2 + $0x62] sm:$0xff]
        %v314 = vld [vmem:[#allocation2 + $0x72] sm:$0xff]
        %v315 = vld [vmem:[%s282] sm:$0xff]
        %v316 = vld [vmem:[%s282 + $0x10] sm:$0xff]
        %v317 = vld [vmem:[%s282 + $0x20] sm:$0xff]
        %v318 = vld [vmem:[%s282 + $0x30] sm:$0xff]
        %v319 = vld [vmem:[%s282 + $0x40] sm:$0xff]
        %v320 = vld [vmem:[%s282 + $0x50] sm:$0xff]
        %v321 = vld [vmem:[%s282 + $0x60] sm:$0xff]
        %v322 = vld [vmem:[%s282 + $0x70] sm:$0xff]
        %v323 = vld [vmem:[%s282 + $0x1] sm:$0xff]
        %v324 = vld [vmem:[%s282 + $0x11] sm:$0xff]
        %v325 = vld [vmem:[%s282 + $0x21] sm:$0xff]
        %v326 = vld [vmem:[%s282 + $0x31] sm:$0xff]
        %v327 = vld [vmem:[%s282 + $0x41] sm:$0xff]
        %v328 = vld [vmem:[%s282 + $0x51] sm:$0xff]
        %v329 = vld [vmem:[%s282 + $0x61] sm:$0xff]
        %v330 = vld [vmem:[%s282 + $0x71] sm:$0xff]
        %v331 = vld [vmem:[%s282 + $0x2] sm:$0xff]
        %v332 = vld [vmem:[%s282 + $0x12] sm:$0xff]
        %v333 = vld [vmem:[%s282 + $0x22] sm:$0xff]
        %v334 = vld [vmem:[%s282 + $0x32] sm:$0xff]
        %v335 = vld [vmem:[%s282 + $0x42] sm:$0xff]
        %v336 = vld [vmem:[%s282 + $0x52] sm:$0xff]
        %v337 = vld [vmem:[%s282 + $0x62] sm:$0xff]
        %v338 = vld [vmem:[%s282 + $0x72] sm:$0xff]
        %s339 = scalar_lea.vmem [#allocation2], 32
        %v340 = vld [vmem:[%s339] sm:$0xff]
        %v341 = vld [vmem:[%s339 + $0x10] sm:$0xff]
        %v342 = vld [vmem:[%s339 + $0x20] sm:$0xff]
        %v343 = vld [vmem:[%s339 + $0x30] sm:$0xff]
        %v344 = vld [vmem:[%s339 + $0x40] sm:$0xff]
        %v345 = vld [vmem:[%s339 + $0x50] sm:$0xff]
        %v346 = vld [vmem:[%s339 + $0x60] sm:$0xff]
        %v347 = vld [vmem:[%s339 + $0x70] sm:$0xff]
        %v348 = vld [vmem:[%s339 + $0x1] sm:$0xff]
        %v349 = vld [vmem:[%s339 + $0x11] sm:$0xff]
        %v350 = vld [vmem:[%s339 + $0x21] sm:$0xff]
        %v351 = vld [vmem:[%s339 + $0x31] sm:$0xff]
        %v352 = vld [vmem:[%s339 + $0x41] sm:$0xff]
        %v353 = vld [vmem:[%s339 + $0x51] sm:$0xff]
        %v354 = vld [vmem:[%s339 + $0x61] sm:$0xff]
        %v355 = vld [vmem:[%s339 + $0x71] sm:$0xff]
        %v356 = vld [vmem:[%s339 + $0x2] sm:$0xff]
        %v357 = vld [vmem:[%s339 + $0x12] sm:$0xff]
        %v358 = vld [vmem:[%s339 + $0x22] sm:$0xff]
        %v359 = vld [vmem:[%s339 + $0x32] sm:$0xff]
        %v360 = vld [vmem:[%s339 + $0x42] sm:$0xff]
        %v361 = vld [vmem:[%s339 + $0x52] sm:$0xff]
        %v362 = vld [vmem:[%s339 + $0x62] sm:$0xff]
        %v363 = vld [vmem:[%s339 + $0x72] sm:$0xff]
        %372 = vrot.lane.b32.xlu0 %v299, 64
        %v373 = vpop.permute.xlu0 %372
        %374 = vrot.lane.b32.xlu0 %v300, 64
        %v375 = vpop.permute.xlu0 %374
        %376 = vrot.lane.b32.xlu0 %v301, 64
        %v377 = vpop.permute.xlu0 %376
        %378 = vrot.lane.b32.xlu0 %v302, 64
        %v379 = vpop.permute.xlu0 %378
        %380 = vrot.lane.b32.xlu0 %v303, 64
        %v381 = vpop.permute.xlu0 %380
        %382 = vrot.lane.b32.xlu0 %v304, 64
        %v383 = vpop.permute.xlu0 %382
        %384 = vrot.lane.b32.xlu0 %v305, 64
        %v385 = vpop.permute.xlu0 %384
        %386 = vrot.lane.b32.xlu0 %v306, 64
        %v387 = vpop.permute.xlu0 %386
        %404 = vrot.lane.b32.xlu0 %v315, 64
        %v405 = vpop.permute.xlu0 %404
        %406 = vrot.lane.b32.xlu0 %v316, 64
        %v407 = vpop.permute.xlu0 %406
        %408 = vrot.lane.b32.xlu0 %v317, 64
        %v409 = vpop.permute.xlu0 %408
        %410 = vrot.lane.b32.xlu0 %v318, 64
        %v411 = vpop.permute.xlu0 %410
        %412 = vrot.lane.b32.xlu0 %v319, 64
        %v413 = vpop.permute.xlu0 %412
        %414 = vrot.lane.b32.xlu0 %v320, 64
        %v415 = vpop.permute.xlu0 %414
        %416 = vrot.lane.b32.xlu0 %v321, 64
        %v417 = vpop.permute.xlu0 %416
        %418 = vrot.lane.b32.xlu0 %v322, 64
        %v419 = vpop.permute.xlu0 %418
        %436 = vrot.lane.b32.xlu0 %v331, 64
        %v437 = vpop.permute.xlu0 %436
        %438 = vrot.lane.b32.xlu0 %v332, 64
        %v439 = vpop.permute.xlu0 %438
        %440 = vrot.lane.b32.xlu0 %v333, 64
        %v441 = vpop.permute.xlu0 %440
        %442 = vrot.lane.b32.xlu0 %v334, 64
        %v443 = vpop.permute.xlu0 %442
        %444 = vrot.lane.b32.xlu0 %v335, 64
        %v445 = vpop.permute.xlu0 %444
        %446 = vrot.lane.b32.xlu0 %v336, 64
        %v447 = vpop.permute.xlu0 %446
        %448 = vrot.lane.b32.xlu0 %v337, 64
        %v449 = vpop.permute.xlu0 %448
        %450 = vrot.lane.b32.xlu0 %v338, 64
        %v451 = vpop.permute.xlu0 %450
        %468 = vrot.lane.b32.xlu0 %v348, 64
        %v469 = vpop.permute.xlu0 %468
        %470 = vrot.lane.b32.xlu0 %v349, 64
        %v471 = vpop.permute.xlu0 %470
        %472 = vrot.lane.b32.xlu0 %v350, 64
        %v473 = vpop.permute.xlu0 %472
        %474 = vrot.lane.b32.xlu0 %v351, 64
        %v475 = vpop.permute.xlu0 %474
        %476 = vrot.lane.b32.xlu0 %v352, 64
        %v477 = vpop.permute.xlu0 %476
        %478 = vrot.lane.b32.xlu0 %v353, 64
        %v479 = vpop.permute.xlu0 %478
        %480 = vrot.lane.b32.xlu0 %v354, 64
        %v481 = vpop.permute.xlu0 %480
        %482 = vrot.lane.b32.xlu0 %v355, 64
        %v483 = vpop.permute.xlu0 %482
        %v492 = vsel %vm244, %v291, %v373
        %v493 = vsel %vm244, %v292, %v375
        %v494 = vsel %vm244, %v293, %v377
        %v495 = vsel %vm244, %v294, %v379
        %v496 = vsel %vm244, %v295, %v381
        %v497 = vsel %vm244, %v296, %v383
        %v498 = vsel %vm244, %v297, %v385
        %v499 = vsel %vm244, %v298, %v387
        %v500 = vsel %vm244, %v307, %v405
        %v501 = vsel %vm244, %v308, %v407
        %v502 = vsel %vm244, %v309, %v409
        %v503 = vsel %vm244, %v310, %v411
        %v504 = vsel %vm244, %v311, %v413
        %v505 = vsel %vm244, %v312, %v415
        %v506 = vsel %vm244, %v313, %v417
        %v507 = vsel %vm244, %v314, %v419
        %v508 = vsel %vm244, %v323, %v437
        %v509 = vsel %vm244, %v324, %v439
        %v510 = vsel %vm244, %v325, %v441
        %v511 = vsel %vm244, %v326, %v443
        %v512 = vsel %vm244, %v327, %v445
        %v513 = vsel %vm244, %v328, %v447
        %v514 = vsel %vm244, %v329, %v449
        %v515 = vsel %vm244, %v330, %v451
        %v516 = vsel %vm244, %v340, %v469
        %v517 = vsel %vm244, %v341, %v471
        %v518 = vsel %vm244, %v342, %v473
        %v519 = vsel %vm244, %v343, %v475
        %v520 = vsel %vm244, %v344, %v477
        %v521 = vsel %vm244, %v345, %v479
        %v522 = vsel %vm244, %v346, %v481
        %v523 = vsel %vm244, %v347, %v483
        %v524 = vpack.c.bf16 %v493, %v492
        %v525 = vpack.c.bf16 %v501, %v500
        %v526 = vpack.c.bf16 %v509, %v508
        %v527 = vpack.c.bf16 %v517, %v516
        %v528 = vpack.c.bf16 %v357, %v356
        %v529 = vpack.c.bf16 %v495, %v494
        %v530 = vpack.c.bf16 %v503, %v502
        %v531 = vpack.c.bf16 %v511, %v510
        %v532 = vpack.c.bf16 %v519, %v518
        %v533 = vpack.c.bf16 %v359, %v358
        %v534 = vpack.c.bf16 %v497, %v496
        %v535 = vpack.c.bf16 %v505, %v504
        %v536 = vpack.c.bf16 %v513, %v512
        %v537 = vpack.c.bf16 %v521, %v520
        %v538 = vpack.c.bf16 %v361, %v360
        %v539 = vpack.c.bf16 %v499, %v498
        %v540 = vpack.c.bf16 %v507, %v506
        %v541 = vpack.c.bf16 %v515, %v514
        %v542 = vpack.c.bf16 %v523, %v522
        %v543 = vpack.c.bf16 %v363, %v362
        %v544 = vld [vmem:[%s2] sm:$0xf]
        %v545 = vld [vmem:[%s2 + $0x4] sm:$0xf]
        %v546 = vld [vmem:[%s2 + $0x8] sm:$0xf]
        %v547 = vld [vmem:[%s2 + $0xc] sm:$0xf]
        %v548 = vld [vmem:[%s2 + $0x10] sm:$0xf]
        %v549 = vld [vmem:[%s2 + $0x14] sm:$0xf]
        %v550 = vld [vmem:[%s2 + $0x18] sm:$0xf]
        %v551 = vld [vmem:[%s2 + $0x1c] sm:$0xf]
        %v552 = vld [vmem:[%s2 + $0x20] sm:$0xf]
        %v553 = vld [vmem:[%s2 + $0x24] sm:$0xf]
        %v554 = vld [vmem:[%s2 + $0x28] sm:$0xf]
        %v555 = vld [vmem:[%s2 + $0x2c] sm:$0xf]
        %v556 = vld [vmem:[%s2 + $0x30] sm:$0xf]
        %v557 = vld [vmem:[%s2 + $0x34] sm:$0xf]
        %v558 = vld [vmem:[%s2 + $0x38] sm:$0xf]
        %v559 = vld [vmem:[%s2 + $0x3c] sm:$0xf]
        %v560 = vld [vmem:[%s2 + $0x40] sm:$0xf]
        %v561 = vld [vmem:[%s2 + $0x44] sm:$0xf]
        %v562 = vld [vmem:[%s2 + $0x48] sm:$0xf]
        %v563 = vld [vmem:[%s2 + $0x4c] sm:$0xf]
        %v564 = vld [vmem:[%s2 + $0x50] sm:$0xf]
        %v565 = vld [vmem:[%s2 + $0x54] sm:$0xf]
        %v566 = vld [vmem:[%s2 + $0x58] sm:$0xf]
        %v567 = vld [vmem:[%s2 + $0x5c] sm:$0xf]
        %v568 = vld [vmem:[%s2 + $0x60] sm:$0xf]
        %v569 = vld [vmem:[%s2 + $0x64] sm:$0xf]
        %v570 = vld [vmem:[%s2 + $0x68] sm:$0xf]
        %v571 = vld [vmem:[%s2 + $0x6c] sm:$0xf]
        %v572 = vld [vmem:[%s2 + $0x70] sm:$0xf]
        %v573 = vld [vmem:[%s2 + $0x74] sm:$0xf]
        %v574 = vld [vmem:[%s2 + $0x78] sm:$0xf]
        %v575 = vld [vmem:[%s2 + $0x7c] sm:$0xf]
        %v576 = vld [vmem:[%s2 + $0x80] sm:$0xf]
        %v577 = vld [vmem:[%s2 + $0x84] sm:$0xf]
        %v578 = vld [vmem:[%s2 + $0x88] sm:$0xf]
        %v579 = vld [vmem:[%s2 + $0x8c] sm:$0xf]
        %v580 = vld [vmem:[%s2 + $0x90] sm:$0xf]
        %v581 = vld [vmem:[%s2 + $0x94] sm:$0xf]
        %v582 = vld [vmem:[%s2 + $0x98] sm:$0xf]
        %v583 = vld [vmem:[%s2 + $0x9c] sm:$0xf]
        %v584 = vld [vmem:[%s2 + $0xa0] sm:$0xf]
        %v585 = vld [vmem:[%s2 + $0xa4] sm:$0xf]
        %v586 = vld [vmem:[%s2 + $0xa8] sm:$0xf]
        %v587 = vld [vmem:[%s2 + $0xac] sm:$0xf]
        %v588 = vld [vmem:[%s2 + $0xb0] sm:$0xf]
        %v589 = vld [vmem:[%s2 + $0xb4] sm:$0xf]
        %v590 = vld [vmem:[%s2 + $0xb8] sm:$0xf]
        %v591 = vld [vmem:[%s2 + $0xbc] sm:$0xf]
        %v592 = vld [vmem:[%s2 + $0xc0] sm:$0xf]
        %v593 = vld [vmem:[%s2 + $0xc4] sm:$0xf]
        %v594 = vld [vmem:[%s2 + $0xc8] sm:$0xf]
        %v595 = vld [vmem:[%s2 + $0xcc] sm:$0xf]
        %v596 = vld [vmem:[%s2 + $0xd0] sm:$0xf]
        %v597 = vld [vmem:[%s2 + $0xd4] sm:$0xf]
        %v598 = vld [vmem:[%s2 + $0xd8] sm:$0xf]
        %v599 = vld [vmem:[%s2 + $0xdc] sm:$0xf]
        %v600 = vld [vmem:[%s2 + $0xe0] sm:$0xf]
        %v601 = vld [vmem:[%s2 + $0xe4] sm:$0xf]
        %v602 = vld [vmem:[%s2 + $0xe8] sm:$0xf]
        %v603 = vld [vmem:[%s2 + $0xec] sm:$0xf]
        %v604 = vld [vmem:[%s2 + $0xf0] sm:$0xf]
        %v605 = vld [vmem:[%s2 + $0xf4] sm:$0xf]
        %v606 = vld [vmem:[%s2 + $0xf8] sm:$0xf]
        %v607 = vld [vmem:[%s2 + $0xfc] sm:$0xf]
        %v608 = vld [vmem:[%s2 + $0x100] sm:$0xf]
        %v609 = vld [vmem:[%s2 + $0x104] sm:$0xf]
        %v610 = vld [vmem:[%s2 + $0x108] sm:$0xf]
        %v611 = vld [vmem:[%s2 + $0x10c] sm:$0xf]
        %v612 = vld [vmem:[%s2 + $0x110] sm:$0xf]
        %v613 = vld [vmem:[%s2 + $0x114] sm:$0xf]
        %v614 = vld [vmem:[%s2 + $0x118] sm:$0xf]
        %v615 = vld [vmem:[%s2 + $0x11c] sm:$0xf]
        %v616 = vld [vmem:[%s242] sm:$0xff]
        %v617 = vld [vmem:[%s242 + $0x8] sm:$0xff]
        %v618 = vld [vmem:[%s242 + $0x10] sm:$0xff]
        %v619 = vld [vmem:[%s242 + $0x18] sm:$0xff]
        %v620 = vld [vmem:[%s242 + $0x20] sm:$0xff]
        %v621 = vld [vmem:[%s242 + $0x28] sm:$0xff]
        %v622 = vld [vmem:[%s242 + $0x30] sm:$0xff]
        %v623 = vld [vmem:[%s242 + $0x38] sm:$0xff]
        %v624 = vpack.c.bf16 %v617, %v616
        %v625 = vpack.c.bf16 %v619, %v618
        %v626 = vpack.c.bf16 %v621, %v620
        %v627 = vpack.c.bf16 %v623, %v622
        %v628 = vld [vmem:[%s3] sm:$0xf]
        %v629 = vld [vmem:[%s3 + $0x4] sm:$0xf]
        %v630 = vld [vmem:[%s3 + $0x8] sm:$0xf]
        %v631 = vld [vmem:[%s3 + $0xc] sm:$0xf]
        %v636 = vunpack.c.l.b16 %v628
        %v637 = vunpack.c.l.b16 %v629
        %v638 = vunpack.c.l.b16 %v630
        %v639 = vunpack.c.l.b16 %v631
        %v640 = vpack.c.b16 %v637, %v636
        %v641 = vpack.c.b16 %v639, %v638
        %vm644 = vcmask 261120
        %v646 = vsel %vm644, %v624, 0
        %v649 = vsel %vm644, %v625, 0
        %v652 = vsel %vm644, %v626, 0
        %v655 = vsel %vm644, %v627, 0
        %657 = vmatpush.bf16.msra.mxu0 0
        %658 = vmatpush.bf16.msra.mxu0 0
        %659 = vmatpush.bf16.msra.mxu0 0
        %660 = vmatpush.bf16.msra.mxu0 0
        %661 = vmatpush.bf16.msra.mxu0 0
        %662 = vmatpush.bf16.msra.mxu0 0
        %663 = vmatpush.bf16.msra.mxu0 %v641
        %664 = vmatpush.bf16.msra.mxu0 %v640
        %665 = vmatmul.bf16.gmra.mxu0 %v646
        %v666 = vpop.f32.mrf.mxu0
        %v667 = vadd.f32 0.0, %v666
        %v668 = vpop.f32.mrf.mxu0
        %v669 = vadd.f32 0.0, %v668
        %670 = vmatmul.bf16.gmra.mxu0 %v649
        %v671 = vpop.f32.mrf.mxu0
        %v672 = vadd.f32 0.0, %v671
        %v673 = vpop.f32.mrf.mxu0
        %v674 = vadd.f32 0.0, %v673
        %675 = vmatmul.bf16.gmra.mxu0 %v652
        %v676 = vpop.f32.mrf.mxu0
        %v677 = vadd.f32 0.0, %v676
        %v678 = vpop.f32.mrf.mxu0
        %v679 = vadd.f32 0.0, %v678
        %680 = vmatmul.bf16.gmra.mxu0 %v655
        %v681 = vpop.f32.mrf.mxu0
        %v682 = vadd.f32 0.0, %v681
        %v683 = vpop.f32.mrf.mxu0
        %v684 = vadd.f32 0.0, %v683
        %685 = vdwg.mxu0
        %v758 = vunpack.c.l.b16 %v544
        %v759 = vunpack.c.l.b16 %v545
        %v760 = vunpack.c.l.b16 %v546
        %v761 = vunpack.c.l.b16 %v547
        %v762 = vunpack.c.l.b16 %v548
        %v763 = vunpack.c.l.b16 %v549
        %v764 = vunpack.c.l.b16 %v550
        %v765 = vunpack.c.l.b16 %v551
        %v766 = vunpack.c.l.b16 %v552
        %v767 = vunpack.c.l.b16 %v553
        %v768 = vunpack.c.l.b16 %v554
        %v769 = vunpack.c.l.b16 %v555
        %v770 = vunpack.c.l.b16 %v556
        %v771 = vunpack.c.l.b16 %v557
        %v772 = vunpack.c.l.b16 %v558
        %v773 = vunpack.c.l.b16 %v559
        %v774 = vunpack.c.l.b16 %v560
        %v775 = vunpack.c.l.b16 %v561
        %v776 = vunpack.c.l.b16 %v562
        %v777 = vunpack.c.l.b16 %v563
        %v778 = vunpack.c.l.b16 %v564
        %v779 = vunpack.c.l.b16 %v565
        %v780 = vunpack.c.l.b16 %v566
        %v781 = vunpack.c.l.b16 %v567
        %v782 = vunpack.c.l.b16 %v568
        %v783 = vunpack.c.l.b16 %v569
        %v784 = vunpack.c.l.b16 %v570
        %v785 = vunpack.c.l.b16 %v571
        %v786 = vunpack.c.l.b16 %v572
        %v787 = vunpack.c.l.b16 %v573
        %v788 = vunpack.c.l.b16 %v574
        %v789 = vunpack.c.l.b16 %v575
        %v790 = vunpack.c.l.b16 %v576
        %v791 = vunpack.c.l.b16 %v577
        %v792 = vunpack.c.l.b16 %v578
        %v793 = vunpack.c.l.b16 %v579
        %v794 = vunpack.c.l.b16 %v580
        %v795 = vunpack.c.l.b16 %v581
        %v796 = vunpack.c.l.b16 %v582
        %v797 = vunpack.c.l.b16 %v583
        %v798 = vunpack.c.l.b16 %v584
        %v799 = vunpack.c.l.b16 %v585
        %v800 = vunpack.c.l.b16 %v586
        %v801 = vunpack.c.l.b16 %v587
        %v802 = vunpack.c.l.b16 %v588
        %v803 = vunpack.c.l.b16 %v589
        %v804 = vunpack.c.l.b16 %v590
        %v805 = vunpack.c.l.b16 %v591
        %v806 = vunpack.c.l.b16 %v592
        %v807 = vunpack.c.l.b16 %v593
        %v808 = vunpack.c.l.b16 %v594
        %v809 = vunpack.c.l.b16 %v595
        %v810 = vunpack.c.l.b16 %v596
        %v811 = vunpack.c.l.b16 %v597
        %v812 = vunpack.c.l.b16 %v598
        %v813 = vunpack.c.l.b16 %v599
        %v814 = vunpack.c.l.b16 %v600
        %v815 = vunpack.c.l.b16 %v601
        %v816 = vunpack.c.l.b16 %v602
        %v817 = vunpack.c.l.b16 %v603
        %v818 = vunpack.c.l.b16 %v604
        %v819 = vunpack.c.l.b16 %v605
        %v820 = vunpack.c.l.b16 %v606
        %v821 = vunpack.c.l.b16 %v607
        %v822 = vunpack.c.l.b16 %v608
        %v823 = vunpack.c.l.b16 %v609
        %v824 = vunpack.c.l.b16 %v610
        %v825 = vunpack.c.l.b16 %v611
        %v826 = vunpack.c.l.b16 %v612
        %v827 = vunpack.c.l.b16 %v613
        %v828 = vunpack.c.l.b16 %v614
        %v829 = vunpack.c.l.b16 %v615
        %v830 = vpack.c.b16 %v759, %v758
        %v831 = vpack.c.b16 %v761, %v760
        %v832 = vpack.c.b16 %v763, %v762
        %v833 = vpack.c.b16 %v765, %v764
        %v834 = vpack.c.b16 %v767, %v766
        %v835 = vpack.c.b16 %v769, %v768
        %v836 = vpack.c.b16 %v771, %v770
        %v837 = vpack.c.b16 %v773, %v772
        %v838 = vpack.c.b16 %v775, %v774
        %v839 = vpack.c.b16 %v777, %v776
        %v840 = vpack.c.b16 %v779, %v778
        %v841 = vpack.c.b16 %v781, %v780
        %v842 = vpack.c.b16 %v783, %v782
        %v843 = vpack.c.b16 %v785, %v784
        %v844 = vpack.c.b16 %v787, %v786
        %v845 = vpack.c.b16 %v789, %v788
        %v846 = vpack.c.b16 %v791, %v790
        %v847 = vpack.c.b16 %v793, %v792
        %v848 = vpack.c.b16 %v795, %v794
        %v849 = vpack.c.b16 %v797, %v796
        %v850 = vpack.c.b16 %v799, %v798
        %v851 = vpack.c.b16 %v801, %v800
        %v852 = vpack.c.b16 %v803, %v802
        %v853 = vpack.c.b16 %v805, %v804
        %v854 = vpack.c.b16 %v807, %v806
        %v855 = vpack.c.b16 %v809, %v808
        %v856 = vpack.c.b16 %v811, %v810
        %v857 = vpack.c.b16 %v813, %v812
        %v858 = vpack.c.b16 %v815, %v814
        %v859 = vpack.c.b16 %v817, %v816
        %v860 = vpack.c.b16 %v819, %v818
        %v861 = vpack.c.b16 %v821, %v820
        %v862 = vpack.c.b16 %v823, %v822
        %v863 = vpack.c.b16 %v825, %v824
        %v864 = vpack.c.b16 %v827, %v826
        %v865 = vpack.c.b16 %v829, %v828
        %v903 = vsel %vm244, %v528, 0
        %v906 = vsel %vm244, %v533, 0
        %v909 = vsel %vm244, %v538, 0
        %v912 = vsel %vm244, %v543, 0
        %914 = vmatpush.bf16.msra.mxu0 %v837
        %915 = vmatpush.bf16.msra.mxu0 %v836
        %916 = vmatpush.bf16.msra.mxu0 %v835
        %917 = vmatpush.bf16.msra.mxu0 %v834
        %918 = vmatpush.bf16.msra.mxu0 %v833
        %919 = vmatpush.bf16.msra.mxu0 %v832
        %920 = vmatpush.bf16.msra.mxu0 %v831
        %921 = vmatpush.bf16.msra.mxu0 %v830
        %922 = vmatmul.bf16.gmra.mxu0 %v524
        %v923 = vpop.f32.mrf.mxu0
        %v924 = vadd.f32 %v667, %v923
        %v925 = vpop.f32.mrf.mxu0
        %v926 = vadd.f32 %v669, %v925
        %927 = vmatmul.bf16.gmra.mxu0 %v529
        %v928 = vpop.f32.mrf.mxu0
        %v929 = vadd.f32 %v672, %v928
        %v930 = vpop.f32.mrf.mxu0
        %v931 = vadd.f32 %v674, %v930
        %932 = vmatmul.bf16.gmra.mxu0 %v534
        %v933 = vpop.f32.mrf.mxu0
        %v934 = vadd.f32 %v677, %v933
        %v935 = vpop.f32.mrf.mxu0
        %v936 = vadd.f32 %v679, %v935
        %937 = vmatmul.bf16.gmra.mxu0 %v539
        %v938 = vpop.f32.mrf.mxu0
        %v939 = vadd.f32 %v682, %v938
        %v940 = vpop.f32.mrf.mxu0
        %v941 = vadd.f32 %v684, %v940
        %942 = vdwg.mxu0
        %943 = vmatpush.bf16.msra.mxu0 %v845
        %944 = vmatpush.bf16.msra.mxu0 %v844
        %945 = vmatpush.bf16.msra.mxu0 %v843
        %946 = vmatpush.bf16.msra.mxu0 %v842
        %947 = vmatpush.bf16.msra.mxu0 %v841
        %948 = vmatpush.bf16.msra.mxu0 %v840
        %949 = vmatpush.bf16.msra.mxu0 %v839
        %950 = vmatpush.bf16.msra.mxu0 %v838
        %951 = vmatmul.bf16.gmra.mxu0 %v525
        %v952 = vpop.f32.mrf.mxu0
        %v953 = vadd.f32 %v924, %v952
        %v954 = vpop.f32.mrf.mxu0
        %v955 = vadd.f32 %v926, %v954
        %956 = vmatmul.bf16.gmra.mxu0 %v530
        %v957 = vpop.f32.mrf.mxu0
        %v958 = vadd.f32 %v929, %v957
        %v959 = vpop.f32.mrf.mxu0
        %v960 = vadd.f32 %v931, %v959
        %961 = vmatmul.bf16.gmra.mxu0 %v535
        %v962 = vpop.f32.mrf.mxu0
        %v963 = vadd.f32 %v934, %v962
        %v964 = vpop.f32.mrf.mxu0
        %v965 = vadd.f32 %v936, %v964
        %966 = vmatmul.bf16.gmra.mxu0 %v540
        %v967 = vpop.f32.mrf.mxu0
        %v968 = vadd.f32 %v939, %v967
        %v969 = vpop.f32.mrf.mxu0
        %v970 = vadd.f32 %v941, %v969
        %971 = vdwg.mxu0
        %972 = vmatpush.bf16.msra.mxu0 %v853
        %973 = vmatpush.bf16.msra.mxu0 %v852
        %974 = vmatpush.bf16.msra.mxu0 %v851
        %975 = vmatpush.bf16.msra.mxu0 %v850
        %976 = vmatpush.bf16.msra.mxu0 %v849
        %977 = vmatpush.bf16.msra.mxu0 %v848
        %978 = vmatpush.bf16.msra.mxu0 %v847
        %979 = vmatpush.bf16.msra.mxu0 %v846
        %980 = vmatmul.bf16.gmra.mxu0 %v526
        %v981 = vpop.f32.mrf.mxu0
        %v982 = vadd.f32 %v953, %v981
        %v983 = vpop.f32.mrf.mxu0
        %v984 = vadd.f32 %v955, %v983
        %985 = vmatmul.bf16.gmra.mxu0 %v531
        %v986 = vpop.f32.mrf.mxu0
        %v987 = vadd.f32 %v958, %v986
        %v988 = vpop.f32.mrf.mxu0
        %v989 = vadd.f32 %v960, %v988
        %990 = vmatmul.bf16.gmra.mxu0 %v536
        %v991 = vpop.f32.mrf.mxu0
        %v992 = vadd.f32 %v963, %v991
        %v993 = vpop.f32.mrf.mxu0
        %v994 = vadd.f32 %v965, %v993
        %995 = vmatmul.bf16.gmra.mxu0 %v541
        %v996 = vpop.f32.mrf.mxu0
        %v997 = vadd.f32 %v968, %v996
        %v998 = vpop.f32.mrf.mxu0
        %v999 = vadd.f32 %v970, %v998
        %1000 = vdwg.mxu0
        %1001 = vmatpush.bf16.msra.mxu0 %v861
        %1002 = vmatpush.bf16.msra.mxu0 %v860
        %1003 = vmatpush.bf16.msra.mxu0 %v859
        %1004 = vmatpush.bf16.msra.mxu0 %v858
        %1005 = vmatpush.bf16.msra.mxu0 %v857
        %1006 = vmatpush.bf16.msra.mxu0 %v856
        %1007 = vmatpush.bf16.msra.mxu0 %v855
        %1008 = vmatpush.bf16.msra.mxu0 %v854
        %1009 = vmatmul.bf16.gmra.mxu0 %v527
        %v1010 = vpop.f32.mrf.mxu0
        %v1011 = vadd.f32 %v982, %v1010
        %v1012 = vpop.f32.mrf.mxu0
        %v1013 = vadd.f32 %v984, %v1012
        %1014 = vmatmul.bf16.gmra.mxu0 %v532
        %v1015 = vpop.f32.mrf.mxu0
        %v1016 = vadd.f32 %v987, %v1015
        %v1017 = vpop.f32.mrf.mxu0
        %v1018 = vadd.f32 %v989, %v1017
        %1019 = vmatmul.bf16.gmra.mxu0 %v537
        %v1020 = vpop.f32.mrf.mxu0
        %v1021 = vadd.f32 %v992, %v1020
        %v1022 = vpop.f32.mrf.mxu0
        %v1023 = vadd.f32 %v994, %v1022
        %1024 = vmatmul.bf16.gmra.mxu0 %v542
        %v1025 = vpop.f32.mrf.mxu0
        %v1026 = vadd.f32 %v997, %v1025
        %v1027 = vpop.f32.mrf.mxu0
        %v1028 = vadd.f32 %v999, %v1027
        %1029 = vdwg.mxu0
        %1030 = vmatpush.bf16.msra.mxu0 0
        %1031 = vmatpush.bf16.msra.mxu0 0
        %1032 = vmatpush.bf16.msra.mxu0 0
        %1033 = vmatpush.bf16.msra.mxu0 0
        %1034 = vmatpush.bf16.msra.mxu0 %v865
        %1035 = vmatpush.bf16.msra.mxu0 %v864
        %1036 = vmatpush.bf16.msra.mxu0 %v863
        %1037 = vmatpush.bf16.msra.mxu0 %v862
        %1038 = vmatmul.bf16.gmra.mxu0 %v903
        %v1039 = vpop.f32.mrf.mxu0
        %v1040 = vadd.f32 %v1011, %v1039
        %v1041 = vpop.f32.mrf.mxu0
        %v1042 = vadd.f32 %v1013, %v1041
        %1043 = vmatmul.bf16.gmra.mxu0 %v906
        %v1044 = vpop.f32.mrf.mxu0
        %v1045 = vadd.f32 %v1016, %v1044
        %v1046 = vpop.f32.mrf.mxu0
        %v1047 = vadd.f32 %v1018, %v1046
        %1048 = vmatmul.bf16.gmra.mxu0 %v909
        %v1049 = vpop.f32.mrf.mxu0
        %v1050 = vadd.f32 %v1021, %v1049
        %v1051 = vpop.f32.mrf.mxu0
        %v1052 = vadd.f32 %v1023, %v1051
        %1053 = vmatmul.bf16.gmra.mxu0 %v912
        %v1054 = vpop.f32.mrf.mxu0
        %v1055 = vadd.f32 %v1026, %v1054
        %v1056 = vpop.f32.mrf.mxu0
        %v1057 = vadd.f32 %v1028, %v1056
        %1058 = vdwg.mxu0
        %v1059 = vld [vmem:[%s4] sm:$0x1]
        %v1061 = vperm.slane %v1059, 0
        %v1063 = vadd.f32 %v1040, %v1061
        %v1064 = vadd.f32 %v1042, %v1061
        %v1065 = vadd.f32 %v1045, %v1061
        %v1066 = vadd.f32 %v1047, %v1061
        %v1067 = vadd.f32 %v1050, %v1061
        %v1068 = vadd.f32 %v1052, %v1061
        %v1069 = vadd.f32 %v1055, %v1061
        %v1070 = vadd.f32 %v1057, %v1061
        %1071 = vst.msk [vmem:[%s232] sm:$0xff] %vm244, %v1063
        %1072 = vst.msk [vmem:[%s232 + $0x8] sm:$0xff] %vm244, %v1064
        %1073 = vst.msk [vmem:[%s232 + $0x10] sm:$0xff] %vm244, %v1065
        %1074 = vst.msk [vmem:[%s232 + $0x18] sm:$0xff] %vm244, %v1066
        %1075 = vst.msk [vmem:[%s232 + $0x20] sm:$0xff] %vm244, %v1067
        %1076 = vst.msk [vmem:[%s232 + $0x28] sm:$0xff] %vm244, %v1068
        %1077 = vst.msk [vmem:[%s232 + $0x30] sm:$0xff] %vm244, %v1069
        %1078 = vst.msk [vmem:[%s232 + $0x38] sm:$0xff] %vm244, %v1070
        %s1079 = sand.u32 %s142, 1
        %s1080 = scalar_lea.sflag [#allocation4], %s1079
        %s1081 = sand.u32 %s142, 1
        %s1082 = smul.addr %s1081, 64
        %s1083 = scalar_lea.vmem [#allocation3], %s1082
        // Predicated region
        $region41: #{resnet_block3d_forward.9} parent=39 // pred_check
          %p1084 = pneg %p152
        $region42: #{resnet_block3d_forward.9} parent=39 // pred_check_branch
          %1086 = sbr.rel (%p1084) target = $region44
        $region43: #{resnet_block3d_forward.9} parent=39 // pred_region
          %1088 = vsyncadd %s1080, 0
          %s1089 = smul.addr %s19, 8
          %s1090 = smul.addr %s1089, 8
          %s1091 = scalar_lea.hbm %s5, %s1090
          %s1092 = sshll.u32 %s1083, 4
          %s1093 = int_to_ptr.vmem [resolvable:$true] %s1092
          %s1094 = sshll.u32 %s1091, 4
          %s1095 = int_to_ptr.hbm [resolvable:$true] %s1094
          %1100 = dma.vmem_to_hbm [thread:$0]  %s1093, 1024, %s1095, %s1080, 128, 128, 8
        $region44: #{resnet_block3d_forward.9} parent=39 // pred_fallthru
          _
      $region40: #{resnet_block3d_forward.9} parent=5 // pred_fallthru
        _
      %p1101 = scmp.le.s32.totalorder 2, %s14
      // Predicated region
      $region45: #{resnet_block3d_forward.9} parent=5 // pred_check
        %p1102 = pneg %p1101
      $region46: #{resnet_block3d_forward.9} parent=5 // pred_check_branch
        %1104 = sbr.rel (%p1102) target = $region48
      $region47: #{resnet_block3d_forward.9} parent=5 // pred_region
        %s1105 = ssub.s32 %s14, 2
        // Predicated region
        $region49: #{resnet_block3d_forward.9} parent=47 // pred_check
          %p1106 = pneg %p158
        $region50: #{resnet_block3d_forward.9} parent=47 // pred_check_branch
          %1108 = sbr.rel (%p1106) target = $region52
        $region51: #{resnet_block3d_forward.9} parent=47 // pred_region
          %s1109 = sand.u32 %s143, 1
          %s1110 = scalar_lea.sflag [#allocation4], %s1109
          %s1111 = sand.u32 %s143, 1
          %s1112 = smul.addr %s1111, 64
          %s1113 = scalar_lea.vmem [#allocation3], %s1112
          %1115 = dma.done %s1110, 1024
        $region52: #{resnet_block3d_forward.9} parent=47 // pred_fallthru
          _
      $region48: #{resnet_block3d_forward.9} parent=5 // pred_fallthru
        _
    $region6: #{resnet_block3d_forward.9} parent=1 // loop_footer
      %s18 = sadd.s32 1, %s14
    $region7: #{resnet_block3d_forward.9} parent=1 // loop_footer_branch
      %13 = sbr.rel target = $region3
    $region8: #{resnet_block3d_forward.9} parent=1 // loop_exit
      _
    %1116 = vsyncpa [#allocation4], 1
    %s1117 = scalar_lea.sflag [#allocation4], 1
    %1118 = vsyncpa %s1117, 1

</llo_original>
